<compile_context>
chip_gen: v7x
topology: tpu7x:2x2x1
jax: 0.10.0
libtpu: 0.0.40
codegen_flags: <defaults>
</compile_context>

<pallas_src>
import functools

import jax
import jax.numpy as jnp
from jax.experimental import pallas as pl
from jax.experimental.pallas import tpu as pltpu

LN_EPS = 1e-5  # nn.LayerNorm default


def _round_up(x, m):
    return ((x + m - 1) // m) * m


# --------------------------------------------------------------------------
# Chip-aware tuning + optional single-buffered resident weights
# --------------------------------------------------------------------------
@functools.lru_cache(maxsize=None)
def _chip_cfg():
    """(token-tile target, vmem_limit_bytes) per TPU generation."""
    tile, limit = 256, 32 * 1024 * 1024               # safe fallback
    try:
        vmem = int(pltpu.get_tpu_info().vmem_capacity_bytes)
        if vmem >= 100 * 1024 * 1024:                  # v5e / v6e: 128 MiB physical VMEM
            tile, limit = 512, 96 * 1024 * 1024
        else:                                          # v7x-class: 64 MiB physical VMEM
            tile, limit = 256, 48 * 1024 * 1024
    except Exception:
        pass
    return tile, limit


def _mosaic_params():
    _, limit = _chip_cfg()
    return pltpu.CompilerParams(dimension_semantics=("parallel",),
                                vmem_limit_bytes=limit)


@functools.lru_cache(maxsize=None)
def _buffered_one_supported():
    """Probe once: can grid-invariant blocks be single-buffered (saves VMEM)."""
    try:
        def k(x_ref, o_ref):
            o_ref[...] = x_ref[...] * 2.0

        x = jnp.zeros((8, 128), jnp.float32)
        out = pl.pallas_call(
            k,
            out_shape=jax.ShapeDtypeStruct((8, 128), jnp.float32),
            grid=(2,),
            in_specs=[pl.BlockSpec((8, 128), lambda i: (0, 0),
                                   pipeline_mode=pl.Buffered(1))],
            out_specs=pl.BlockSpec((8, 128), lambda i: (0, 0)),
        )(x)
        jax.block_until_ready(out)
        return True
    except Exception:
        return False


def _resident_spec(shape):
    """BlockSpec for a VMEM-resident (grid-invariant) operand."""
    idx = lambda *_: (0,) * len(shape)
    if _buffered_one_supported():
        return pl.BlockSpec(shape, idx, pipeline_mode=pl.Buffered(1))
    return pl.BlockSpec(shape, idx)


# --------------------------------------------------------------------------
# Kernels
# --------------------------------------------------------------------------
def _make_ln_linear_kernel(*, gelu, has_bias, has_post_ln):
    """LayerNorm -> Linear [-> +bias] [-> GELU] [-> LayerNorm] fused kernel."""

    def kernel(*refs):
        it = iter(refs)
        x_ref = next(it)
        g_ref = next(it)
        b_ref = next(it)
        w_ref = next(it)
        bias_ref = next(it) if has_bias else None
        if has_post_ln:
            g2_ref = next(it)
            b2_ref = next(it)
        o_ref = next(it)

        x = x_ref[...].astype(jnp.float32)
        mu = jnp.mean(x, axis=-1, keepdims=True)
        var = jnp.mean(jnp.square(x - mu), axis=-1, keepdims=True)
        xn = (x - mu) * jax.lax.rsqrt(var + LN_EPS)
        xn = xn * g_ref[...].astype(jnp.float32) + b_ref[...].astype(jnp.float32)

        y = jnp.dot(xn.astype(jnp.bfloat16), w_ref[...],
                    preferred_element_type=jnp.float32)
        if has_bias:
            y = y + bias_ref[...].astype(jnp.float32)
        if gelu:
            # exact (erf) GELU, matching nn.GELU() default
            y = 0.5 * y * (1.0 + jax.lax.erf(y * 0.7071067811865476))
        if has_post_ln:
            mu2 = jnp.mean(y, axis=-1, keepdims=True)
            var2 = jnp.mean(jnp.square(y - mu2), axis=-1, keepdims=True)
            y = (y - mu2) * jax.lax.rsqrt(var2 + LN_EPS)
            y = y * g2_ref[...].astype(jnp.float32) + b2_ref[...].astype(jnp.float32)
        o_ref[...] = y.astype(o_ref.dtype)

    return kernel


def _make_linear_kernel(*, has_residual):
    """Linear + bias [+ fused residual add]."""

    def kernel(*refs):
        it = iter(refs)
        x_ref = next(it)
        w_ref = next(it)
        bias_ref = next(it)
        r_ref = next(it) if has_residual else None
        o_ref = next(it)

        y = jnp.dot(x_ref[...].astype(jnp.bfloat16), w_ref[...],
                    preferred_element_type=jnp.float32)
        y = y + bias_ref[...].astype(jnp.float32)
        if has_residual:
            y = y + r_ref[...].astype(jnp.float32)
        o_ref[...] = y.astype(o_ref.dtype)

    return kernel


def _ln_kernel(x_ref, g_ref, b_ref, o_ref):
    x = x_ref[...].astype(jnp.float32)
    mu = jnp.mean(x, axis=-1, keepdims=True)
    var = jnp.mean(jnp.square(x - mu), axis=-1, keepdims=True)
    xn = (x - mu) * jax.lax.rsqrt(var + LN_EPS)
    o_ref[...] = (xn * g_ref[...].astype(jnp.float32)
                  + b_ref[...].astype(jnp.float32)).astype(o_ref.dtype)


def _make_attn_kernel(*, scale, heads, dim_head, inner):
    """Multi-head attention + fused out-projection + bias + residual.

    qkv slab columns are [ q(h0..hH-1) | k(h0..hH-1) | v(h0..hH-1) ]
    (same layout as torch's chunk(3) + per-chunk head split)."""

    def kernel(qkv_ref, wo_ref, bo_ref, res_ref, o_ref):
        # Start the accumulator from residual + out-projection bias.
        acc = res_ref[0].astype(jnp.float32) + bo_ref[...].astype(jnp.float32)
        for h in range(heads):                         # unrolled; few heads
            lo = h * dim_head
            # scale folded into q: O(N*dh) muls instead of O(N^2) on scores
            q = qkv_ref[0, :, lo:lo + dim_head] * scale
            k = qkv_ref[0, :, inner + lo: inner + lo + dim_head]
            v = qkv_ref[0, :, 2 * inner + lo: 2 * inner + lo + dim_head]
            # q @ k^T without an explicit transpose ('nt' form)
            s = jax.lax.dot_general(q, k, (((1,), (1,)), ((), ())),
                                    preferred_element_type=jnp.float32)
            m = jnp.max(s, axis=-1, keepdims=True)
            p = jnp.exp(s - m)
            denom = jnp.sum(p, axis=-1, keepdims=True)
            p = p * pl.reciprocal(denom, approx=True)  # EUP slot, not VALU divide
            o = jnp.dot(p.astype(jnp.bfloat16), v,
                        preferred_element_type=jnp.float32)          # (N, dh)
            acc = acc + jnp.dot(o.astype(jnp.bfloat16),
                                wo_ref[lo:lo + dim_head, :],
                                preferred_element_type=jnp.float32)  # (N, DIM)
        o_ref[0] = acc.astype(o_ref.dtype)

    return kernel


# --------------------------------------------------------------------------
# Pallas wrappers (token-axis tiling + parallel semantics)
# --------------------------------------------------------------------------
def _choose_tile(m, target):
    """Token-axis tile. Prefer the full slab or an exact divisor of m
    (no pad/slice copies); fall back to padding only when unavoidable."""
    if m <= target:
        return m, m
    t = (target // 8) * 8
    while t >= 128:
        if m % t == 0:
            return t, m
        t -= 8
    return target, _round_up(m, target)


def _pad_rows(x, mp):
    m = x.shape[0]
    return x if mp == m else jnp.pad(x, ((0, mp - m), (0, 0)))


def ln_linear(x, gamma, beta, w, bias=None, *, gelu=False, post_ln=None,
              out_dtype=jnp.bfloat16):
    m, d = x.shape
    dout = w.shape[1]
    tile_target, _ = _chip_cfg()
    tile, mp = _choose_tile(m, tile_target)
    xp = _pad_rows(x, mp)
    w = w if w.dtype == jnp.bfloat16 else w.astype(jnp.bfloat16)

    in_specs = [
        pl.BlockSpec((tile, d), lambda i: (i, 0)),
        _resident_spec((1, d)),
        _resident_spec((1, d)),
        _resident_spec((d, dout)),                       # weight resident in VMEM
    ]
    args = [xp, gamma.reshape(1, d), beta.reshape(1, d), w]
    if bias is not None:
        in_specs.append(_resident_spec((1, dout)))
        args.append(bias.reshape(1, dout))
    if post_ln is not None:
        g2, b2 = post_ln
        in_specs.append(_resident_spec((1, dout)))
        in_specs.append(_resident_spec((1, dout)))
        args.append(g2.reshape(1, dout))
        args.append(b2.reshape(1, dout))

    out = pl.pallas_call(
        _make_ln_linear_kernel(gelu=gelu, has_bias=bias is not None,
                               has_post_ln=post_ln is not None),
        out_shape=jax.ShapeDtypeStruct((mp, dout), out_dtype),
        grid=(mp // tile,),
        in_specs=in_specs,
        out_specs=pl.BlockSpec((tile, dout), lambda i: (i, 0)),
        compiler_params=_mosaic_params(),
    )(*args)
    return out[:m] if mp != m else out


def linear(x, w, bias, residual=None, *, out_dtype=jnp.float32):
    m, d = x.shape
    dout = w.shape[1]
    tile_target, _ = _chip_cfg()
    tile, mp = _choose_tile(m, tile_target)
    xp = _pad_rows(x, mp)
    w = w if w.dtype == jnp.bfloat16 else w.astype(jnp.bfloat16)

    in_specs = [
        pl.BlockSpec((tile, d), lambda i: (i, 0)),
        _resident_spec((d, dout)),
        _resident_spec((1, dout)),
    ]
    args = [xp, w, bias.reshape(1, dout)]
    if residual is not None:
        in_specs.append(pl.BlockSpec((tile, dout), lambda i: (i, 0)))
        args.append(_pad_rows(residual, mp))

    out = pl.pallas_call(
        _make_linear_kernel(has_residual=residual is not None),
        out_shape=jax.ShapeDtypeStruct((mp, dout), out_dtype),
        grid=(mp // tile,),
        in_specs=in_specs,
        out_specs=pl.BlockSpec((tile, dout), lambda i: (i, 0)),
        compiler_params=_mosaic_params(),
    )(*args)
    return out[:m] if mp != m else out


def layernorm(x, gamma, beta, *, out_dtype=jnp.float32):
    m, d = x.shape
    tile_target, _ = _chip_cfg()
    tile, mp = _choose_tile(m, tile_target)
    xp = _pad_rows(x, mp)
    out = pl.pallas_call(
        _ln_kernel,
        out_shape=jax.ShapeDtypeStruct((mp, d), out_dtype),
        grid=(mp // tile,),
        in_specs=[
            pl.BlockSpec((tile, d), lambda i: (i, 0)),
            _resident_spec((1, d)),
            _resident_spec((1, d)),
        ],
        out_specs=pl.BlockSpec((tile, d), lambda i: (i, 0)),
        compiler_params=_mosaic_params(),
    )(xp, gamma.reshape(1, d), beta.reshape(1, d))
    return out[:m] if mp != m else out


def attention_block(qkv, w_out, b_out, residual, *, heads, dim_head, scale,
                    out_dtype=jnp.bfloat16):
    """qkv: (B, N, 3*inner) bf16; residual: (B, N, DIM).
    Returns softmax-attention -> out-projection (+bias) + residual: (B, N, DIM)."""
    b, n, f = qkv.shape
    inner = heads * dim_head
    dim = w_out.shape[1]
    w_out = w_out if w_out.dtype == jnp.bfloat16 else w_out.astype(jnp.bfloat16)
    kern = _make_attn_kernel(scale=scale, heads=heads, dim_head=dim_head, inner=inner)
    return pl.pallas_call(
        kern,
        out_shape=jax.ShapeDtypeStruct((b, n, dim), out_dtype),
        grid=(b,),
        in_specs=[
            pl.BlockSpec((1, n, f), lambda i: (i, 0, 0)),
            _resident_spec((inner, dim)),                # w_out resident in VMEM
            _resident_spec((1, dim)),
            pl.BlockSpec((1, n, dim), lambda i: (i, 0, 0)),
        ],
        out_specs=pl.BlockSpec((1, n, dim), lambda i: (i, 0, 0)),
        compiler_params=_mosaic_params(),
    )(qkv, w_out, b_out.reshape(1, dim), residual)


# --------------------------------------------------------------------------
# ViT forward
# --------------------------------------------------------------------------
def make_vit_forward(cfg):
    B = cfg["batch"]
    C = cfg["channels"]
    IMG = cfg["image_size"]
    P = cfg["patch_size"]
    DIM = cfg["dim"]
    HEADS = cfg["heads"]
    DH = cfg["dim_head"]
    NUM_CLASSES = cfg["num_classes"]
    INNER = HEADS * DH
    scale = DH ** (-0.5)
    n_patches = (IMG // P) * (IMG // P)
    N = n_patches + 1

    # Warm probes eagerly (outside jit).
    _chip_cfg()
    _buffered_one_supported()

    def forward(img, params):
        # --- patchify (layout-only glue): 'b c (h p1) (w p2) -> b (h w) (p1 p2 c)'
        x = img.reshape(B, C, IMG // P, P, IMG // P, P)
        x = x.transpose(0, 2, 4, 3, 5, 1)               # b h w p1 p2 c
        x = x.reshape(B * n_patches, P * P * C)

        # --- patch embedding: LN(patch_dim) -> Linear -> LN(dim), fused in one kernel
        x = ln_linear(
            x, params["patch_ln1_g"], params["patch_ln1_b"],
            params["patch_w"], params["patch_bias"],
            post_ln=(params["patch_ln2_g"], params["patch_ln2_b"]),
            out_dtype=jnp.float32,
        )
        x = x.reshape(B, n_patches, DIM)

        # --- cls token + positional embedding (tiny glue) ---
        cls = jnp.broadcast_to(params["cls_token"], (B, 1, DIM))
        x = jnp.concatenate([cls, x], axis=1)
        x = x + params["pos_embedding"][:, :N]
        # dropout p=0.0 -> identity
        x = x.astype(jnp.bfloat16)                      # bf16 residual stream

        # --- transformer layers ---
        for lyr in params["layers"]:
            # attention block: LN -> QKV (no bias, bf16 slab) -> attn + out-proj + residual (fused)
            xt = x.reshape(B * N, DIM)
            qkv = ln_linear(xt, lyr["attn_ln_g"], lyr["attn_ln_b"],
                            lyr["w_qkv"], bias=None, out_dtype=jnp.bfloat16)
            qkv = qkv.reshape(B, N, 3 * INNER)          # pure reshape, no transpose
            x = attention_block(qkv, lyr["w_out"], lyr["b_out"], x,
                                heads=HEADS, dim_head=DH, scale=scale,
                                out_dtype=jnp.bfloat16)  # (B, N, DIM)

            # FFN block: LN -> Linear -> GELU (bf16 hidden) -> Linear (+residual fused)
            xt = x.reshape(B * N, DIM)
            h1 = ln_linear(xt, lyr["ffn_ln_g"], lyr["ffn_ln_b"],
                           lyr["w1"], lyr["b1"], gelu=True, out_dtype=jnp.bfloat16)
            x = linear(h1, lyr["w2"], lyr["b2"], residual=xt,
                       out_dtype=jnp.bfloat16).reshape(B, N, DIM)

        # --- final norm + head ---
        x = layernorm(x.reshape(B * N, DIM),
                      params["final_ln_g"], params["final_ln_b"],
                      out_dtype=jnp.float32).reshape(B, N, DIM)
        cls_token = x[:, 0]
        feature_map = x[:, 1:]
        # pool == 'cls'; head weight is lane-padded, slice back to real classes
        logits = linear(cls_token, params["head_w"], params["head_b"],
                        out_dtype=jnp.float32)[:, :NUM_CLASSES]
        return {
            "cls_token": cls_token,
            "feature_map": feature_map,
            "classification_head_logits": logits,
        }

    return forward


# --------------------------------------------------------------------------
# Deterministic parameter init
#   * matmul weights stored bf16 (cast once here, not per forward)
#   * FFN hidden / classifier widths zero-padded to multiples of 256 lanes
#   * w_qkv columns are [q | k | v], heads contiguous within each chunk
#     (torch chunk(3)+rearrange convention) — keep this when importing ckpts.
# --------------------------------------------------------------------------
def init_params(key, cfg):
    C, P = cfg["channels"], cfg["patch_size"]
    IMG, DIM = cfg["image_size"], cfg["dim"]
    DEPTH, HEADS, DH = cfg["depth"], cfg["heads"], cfg["dim_head"]
    NUM_CLASSES = cfg["num_classes"]
    INNER = HEADS * DH
    HIDDEN = int(cfg["mlp_dim_ratio"] * DIM) + 1         # FFN quirk: int(hidden)+1
    HIDDEN_PAD = _round_up(HIDDEN, 256)                  # full 256x256 MXU passes
    NCLS_PAD = _round_up(NUM_CLASSES, 256)
    patch_dim = C * P * P
    n_patches = (IMG // P) * (IMG // P)

    def nrm(k, shape, s=0.02):
        return (s * jax.random.normal(k, shape)).astype(jnp.float32)

    def bf16(a):
        return a.astype(jnp.bfloat16)

    keys = iter(jax.random.split(key, 8 + DEPTH * 6))

    head_w = nrm(next(keys), (DIM, NUM_CLASSES))
    head_w = jnp.pad(head_w, ((0, 0), (0, NCLS_PAD - NUM_CLASSES)))

    params = {
        "patch_ln1_g": jnp.ones((patch_dim,), jnp.float32),
        "patch_ln1_b": jnp.zeros((patch_dim,), jnp.float32),
        "patch_w": bf16(nrm(next(keys), (patch_dim, DIM))),
        "patch_bias": jnp.zeros((DIM,), jnp.float32),
        "patch_ln2_g": jnp.ones((DIM,), jnp.float32),
        "patch_ln2_b": jnp.zeros((DIM,), jnp.float32),
        "cls_token": nrm(next(keys), (1, 1, DIM), 1.0),
        "pos_embedding": nrm(next(keys), (1, n_patches + 1, DIM), 1.0),
        "final_ln_g": jnp.ones((DIM,), jnp.float32),
        "final_ln_b": jnp.zeros((DIM,), jnp.float32),
        "head_w": bf16(head_w),
        "head_b": jnp.zeros((NCLS_PAD,), jnp.float32),
        "layers": [],
    }
    for _ in range(DEPTH):
        w1 = nrm(next(keys), (DIM, HIDDEN))
        w1 = jnp.pad(w1, ((0, 0), (0, HIDDEN_PAD - HIDDEN)))        # zero cols
        w2 = nrm(next(keys), (HIDDEN, DIM))
        w2 = jnp.pad(w2, ((0, HIDDEN_PAD - HIDDEN), (0, 0)))        # zero rows
        params["layers"].append(
            {
                "attn_ln_g": jnp.ones((DIM,), jnp.float32),
                "attn_ln_b": jnp.zeros((DIM,), jnp.float32),
                "w_qkv": bf16(nrm(next(keys), (DIM, 3 * INNER))),
                "w_out": bf16(nrm(next(keys), (INNER, DIM))),
                "b_out": jnp.zeros((DIM,), jnp.float32),
                "ffn_ln_g": jnp.ones((DIM,), jnp.float32),
                "ffn_ln_b": jnp.zeros((DIM,), jnp.float32),
                "w1": bf16(w1),
                "b1": jnp.zeros((HIDDEN_PAD,), jnp.float32),
                "w2": bf16(w2),
                "b2": jnp.zeros((DIM,), jnp.float32),
            }
        )
    return params


# --------------------------------------------------------------------------
if __name__ == "__main__":
    cfg = dict(
        batch=2,
        channels=4,
        image_size=16,
        patch_size=4,
        num_classes=10,
        dim=32,
        depth=2,
        heads=4,
        dim_head=8,
        mlp_dim_ratio=2,
    )
    key = jax.random.PRNGKey(0)
    k_img, k_par = jax.random.split(key)
    img = jax.random.normal(
        k_img, (cfg["batch"], cfg["channels"], cfg["image_size"], cfg["image_size"]),
        dtype=jnp.float32,
    )
    params = init_params(k_par, cfg)

    forward = jax.jit(make_vit_forward(cfg))
    out = forward(img, params)
    jax.block_until_ready(out)

    n_patches = (cfg["image_size"] // cfg["patch_size"]) ** 2
    assert out["cls_token"].shape == (cfg["batch"], cfg["dim"])
    assert out["feature_map"].shape == (cfg["batch"], n_patches, cfg["dim"])
    assert out["classification_head_logits"].shape == (cfg["batch"], cfg["num_classes"])
    assert bool(jnp.all(jnp.isfinite(out["classification_head_logits"])))
    print("KERNEL_OK")
</pallas_src>

<mosaic_0001>
module attributes {stable_mosaic.version = 11 : i64} {
  func.func @k(%arg0: i32, %arg1: memref<8x128xf32, #tpu.memory_space<vmem>>, %arg2: memref<8x128xf32, #tpu.memory_space<vmem>>) attributes {dimension_semantics = [#tpu.dimension_semantics<arbitrary>], iteration_bounds = array<i64: 2>, scalar_prefetch = 0 : i64, scratch_operands = 0 : i64, tpu.core_type = #tpu.core_type<tc>, window_params = [{pipeline_mode = #tpu.pipeline_mode<synchronous>, transform_indices = @transform_0, window_bounds = array<i64: 8, 128>}, {pipeline_mode = #tpu.pipeline_mode<synchronous>, transform_indices = @transform_1, window_bounds = array<i64: 8, 128>}]} {
    %c0 = arith.constant 0 : index
    %c0_0 = arith.constant 0 : index
    %0 = vector.load %arg1[%c0, %c0_0] : memref<8x128xf32, #tpu.memory_space<vmem>>, vector<8x128xf32>
    %cst = arith.constant 2.000000e+00 : f32
    %1 = vector.broadcast %cst : f32 to vector<8x128xf32>
    %2 = arith.mulf %0, %1 : vector<8x128xf32>
    %c0_1 = arith.constant 0 : index
    %c0_2 = arith.constant 0 : index
    %3 = vector.load %arg2[%c0_1, %c0_2] : memref<8x128xf32, #tpu.memory_space<vmem>>, vector<8x128xf32>
    tpu.vector_store %arg2[%c0_1, %c0_2], %2 {strides = array<i32>} : memref<8x128xf32, #tpu.memory_space<vmem>>, vector<8x128xf32>,
    return
  }
  func.func @transform_0(%arg0: i32) -> (i32, i32) {
    %c0_i32 = arith.constant 0 : i32
    %c0_i32_0 = arith.constant 0 : i32
    %c0_i32_1 = arith.constant 0 : i32
    return %c0_i32, %c0_i32_0 : i32, i32
  }
  func.func @transform_1(%arg0: i32) -> (i32, i32) {
    %c0_i32 = arith.constant 0 : i32
    %c0_i32_0 = arith.constant 0 : i32
    %c0_i32_1 = arith.constant 0 : i32
    return %c0_i32, %c0_i32_0 : i32, i32
  }
}

module attributes {stable_mosaic.version = 11 : i64} {
  func.func @kernel(%arg0: i32, %arg1: memref<32x64xf32, #tpu.memory_space<vmem>>, %arg2: memref<1x64xf32, #tpu.memory_space<vmem>>, %arg3: memref<1x64xf32, #tpu.memory_space<vmem>>, %arg4: memref<64x32xbf16, #tpu.memory_space<vmem>>, %arg5: memref<1x32xf32, #tpu.memory_space<vmem>>, %arg6: memref<1x32xf32, #tpu.memory_space<vmem>>, %arg7: memref<1x32xf32, #tpu.memory_space<vmem>>, %arg8: memref<32x32xf32, #tpu.memory_space<vmem>>) attributes {dimension_semantics = [#tpu.dimension_semantics<parallel>], iteration_bounds = array<i64: 1>, scalar_prefetch = 0 : i64, scratch_operands = 0 : i64, tpu.core_type = #tpu.core_type<tc>, window_params = [{transform_indices = @transform_0, window_bounds = array<i64: 32, 64>}, {pipeline_mode = #tpu.pipeline_mode<synchronous>, transform_indices = @transform_1, window_bounds = array<i64: 1, 64>}, {pipeline_mode = #tpu.pipeline_mode<synchronous>, transform_indices = @transform_2, window_bounds = array<i64: 1, 64>}, {pipeline_mode = #tpu.pipeline_mode<synchronous>, transform_indices = @transform_3, window_bounds = array<i64: 64, 32>}, {pipeline_mode = #tpu.pipeline_mode<synchronous>, transform_indices = @transform_4, window_bounds = array<i64: 1, 32>}, {pipeline_mode = #tpu.pipeline_mode<synchronous>, transform_indices = @transform_5, window_bounds = array<i64: 1, 32>}, {pipeline_mode = #tpu.pipeline_mode<synchronous>, transform_indices = @transform_6, window_bounds = array<i64: 1, 32>}, {transform_indices = @transform_7, window_bounds = array<i64: 32, 32>}]} {
    %c0 = arith.constant 0 : index
    %c0_0 = arith.constant 0 : index
    %0 = vector.load %arg1[%c0, %c0_0] : memref<32x64xf32, #tpu.memory_space<vmem>>, vector<32x64xf32>
    %cst = arith.constant dense<0.000000e+00> : vector<32xf32>
    %1 = vector.multi_reduction <add>, %0, %cst [1] : vector<32x64xf32> to vector<32xf32>
    %2 = vector.shape_cast %1 : vector<32xf32> to vector<32x1xf32>
    %cst_1 = arith.constant 6.400000e+01 : f32
    %3 = vector.broadcast %cst_1 : f32 to vector<32x1xf32>
    %4 = arith.divf %2, %3 : vector<32x1xf32>
    %5 = vector.broadcast %4 : vector<32x1xf32> to vector<32x64xf32>
    %6 = arith.subf %0, %5 : vector<32x64xf32>
    %7 = arith.mulf %6, %6 : vector<32x64xf32>
    %cst_2 = arith.constant dense<0.000000e+00> : vector<32xf32>
    %8 = vector.multi_reduction <add>, %7, %cst_2 [1] : vector<32x64xf32> to vector<32xf32>
    %9 = vector.shape_cast %8 : vector<32xf32> to vector<32x1xf32>
    %cst_3 = arith.constant 6.400000e+01 : f32
    %10 = vector.broadcast %cst_3 : f32 to vector<32x1xf32>
    %11 = arith.divf %9, %10 : vector<32x1xf32>
    %12 = vector.broadcast %4 : vector<32x1xf32> to vector<32x64xf32>
    %13 = arith.subf %0, %12 : vector<32x64xf32>
    %cst_4 = arith.constant 9.99999974E-6 : f32
    %14 = vector.broadcast %cst_4 : f32 to vector<32x1xf32>
    %15 = arith.addf %11, %14 : vector<32x1xf32>
    %16 = math.rsqrt %15 : vector<32x1xf32>
    %17 = vector.broadcast %16 : vector<32x1xf32> to vector<32x64xf32>
    %18 = arith.mulf %13, %17 : vector<32x64xf32>
    %c0_5 = arith.constant 0 : index
    %c0_6 = arith.constant 0 : index
    %19 = vector.load %arg2[%c0_5, %c0_6] : memref<1x64xf32, #tpu.memory_space<vmem>>, vector<1x64xf32>
    %20 = vector.broadcast %19 : vector<1x64xf32> to vector<32x64xf32>
    %21 = arith.mulf %18, %20 : vector<32x64xf32>
    %c0_7 = arith.constant 0 : index
    %c0_8 = arith.constant 0 : index
    %22 = vector.load %arg3[%c0_7, %c0_8] : memref<1x64xf32, #tpu.memory_space<vmem>>, vector<1x64xf32>
    %23 = vector.broadcast %22 : vector<1x64xf32> to vector<32x64xf32>
    %24 = arith.addf %21, %23 : vector<32x64xf32>
    %25 = arith.truncf %24 : vector<32x64xf32> to vector<32x64xbf16>
    %c0_9 = arith.constant 0 : index
    %c0_10 = arith.constant 0 : index
    %26 = vector.load %arg4[%c0_9, %c0_10] : memref<64x32xbf16, #tpu.memory_space<vmem>>, vector<64x32xbf16>
    %cst_11 = arith.constant dense<0.000000e+00> : vector<32x32xf32>
    %27 = tpu.matmul %25, %26, %cst_11 {dimension_numbers = #tpu.dot_dimension_numbers<[1], [0], [0], [1], [0, 0, 1, 1], [], []>} : vector<32x64xbf16>, vector<64x32xbf16>, vector<32x32xf32> -> vector<32x32xf32>
    %c0_12 = arith.constant 0 : index
    %c0_13 = arith.constant 0 : index
    %28 = vector.load %arg5[%c0_12, %c0_13] : memref<1x32xf32, #tpu.memory_space<vmem>>, vector<1x32xf32>
    %29 = vector.broadcast %28 : vector<1x32xf32> to vector<32x32xf32>
    %30 = arith.addf %27, %29 : vector<32x32xf32>
    %cst_14 = arith.constant dense<0.000000e+00> : vector<32xf32>
    %31 = vector.multi_reduction <add>, %30, %cst_14 [1] : vector<32x32xf32> to vector<32xf32>
    %32 = vector.shape_cast %31 : vector<32xf32> to vector<32x1xf32>
    %cst_15 = arith.constant 3.200000e+01 : f32
    %33 = vector.broadcast %cst_15 : f32 to vector<32x1xf32>
    %34 = arith.divf %32, %33 : vector<32x1xf32>
    %35 = vector.broadcast %34 : vector<32x1xf32> to vector<32x32xf32>
    %36 = arith.subf %30, %35 : vector<32x32xf32>
    %37 = arith.mulf %36, %36 : vector<32x32xf32>
    %cst_16 = arith.constant dense<0.000000e+00> : vector<32xf32>
    %38 = vector.multi_reduction <add>, %37, %cst_16 [1] : vector<32x32xf32> to vector<32xf32>
    %39 = vector.shape_cast %38 : vector<32xf32> to vector<32x1xf32>
    %cst_17 = arith.constant 3.200000e+01 : f32
    %40 = vector.broadcast %cst_17 : f32 to vector<32x1xf32>
    %41 = arith.divf %39, %40 : vector<32x1xf32>
    %42 = vector.broadcast %34 : vector<32x1xf32> to vector<32x32xf32>
    %43 = arith.subf %30, %42 : vector<32x32xf32>
    %cst_18 = arith.constant 9.99999974E-6 : f32
    %44 = vector.broadcast %cst_18 : f32 to vector<32x1xf32>
    %45 = arith.addf %41, %44 : vector<32x1xf32>
    %46 = math.rsqrt %45 : vector<32x1xf32>
    %47 = vector.broadcast %46 : vector<32x1xf32> to vector<32x32xf32>
    %48 = arith.mulf %43, %47 : vector<32x32xf32>
    %c0_19 = arith.constant 0 : index
    %c0_20 = arith.constant 0 : index
    %49 = vector.load %arg6[%c0_19, %c0_20] : memref<1x32xf32, #tpu.memory_space<vmem>>, vector<1x32xf32>
    %50 = vector.broadcast %49 : vector<1x32xf32> to vector<32x32xf32>
    %51 = arith.mulf %48, %50 : vector<32x32xf32>
    %c0_21 = arith.constant 0 : index
    %c0_22 = arith.constant 0 : index
    %52 = vector.load %arg7[%c0_21, %c0_22] : memref<1x32xf32, #tpu.memory_space<vmem>>, vector<1x32xf32>
    %53 = vector.broadcast %52 : vector<1x32xf32> to vector<32x32xf32>
    %54 = arith.addf %51, %53 : vector<32x32xf32>
    %c0_23 = arith.constant 0 : index
    %c0_24 = arith.constant 0 : index
    %55 = vector.load %arg8[%c0_23, %c0_24] : memref<32x32xf32, #tpu.memory_space<vmem>>, vector<32x32xf32>
    tpu.vector_store %arg8[%c0_23, %c0_24], %54 {strides = array<i32>} : memref<32x32xf32, #tpu.memory_space<vmem>>, vector<32x32xf32>,
    return
  }
  func.func @transform_0(%arg0: i32) -> (i32, i32) {
    %c0_i32 = arith.constant 0 : i32
    %c0_i32_0 = arith.constant 0 : i32
    return %arg0, %c0_i32 : i32, i32
  }
  func.func @transform_1(%arg0: i32) -> (i32, i32) {
    %c0_i32 = arith.constant 0 : i32
    %c0_i32_0 = arith.constant 0 : i32
    %c0_i32_1 = arith.constant 0 : i32
    return %c0_i32, %c0_i32_0 : i32, i32
  }
  func.func @transform_2(%arg0: i32) -> (i32, i32) {
    %c0_i32 = arith.constant 0 : i32
    %c0_i32_0 = arith.constant 0 : i32
    %c0_i32_1 = arith.constant 0 : i32
    return %c0_i32, %c0_i32_0 : i32, i32
  }
  func.func @transform_3(%arg0: i32) -> (i32, i32) {
    %c0_i32 = arith.constant 0 : i32
    %c0_i32_0 = arith.constant 0 : i32
    %c0_i32_1 = arith.constant 0 : i32
    return %c0_i32, %c0_i32_0 : i32, i32
  }
  func.func @transform_4(%arg0: i32) -> (i32, i32) {
    %c0_i32 = arith.constant 0 : i32
    %c0_i32_0 = arith.constant 0 : i32
    %c0_i32_1 = arith.constant 0 : i32
    return %c0_i32, %c0_i32_0 : i32, i32
  }
  func.func @transform_5(%arg0: i32) -> (i32, i32) {
    %c0_i32 = arith.constant 0 : i32
    %c0_i32_0 = arith.constant 0 : i32
    %c0_i32_1 = arith.constant 0 : i32
    return %c0_i32, %c0_i32_0 : i32, i32
  }
  func.func @transform_6(%arg0: i32) -> (i32, i32) {
    %c0_i32 = arith.constant 0 : i32
    %c0_i32_0 = arith.constant 0 : i32
    %c0_i32_1 = arith.constant 0 : i32
    return %c0_i32, %c0_i32_0 : i32, i32
  }
  func.func @transform_7(%arg0: i32) -> (i32, i32) {
    %c0_i32 = arith.constant 0 : i32
    %c0_i32_0 = arith.constant 0 : i32
    return %arg0, %c0_i32 : i32, i32
  }
}

module attributes {stable_mosaic.version = 11 : i64} {
  func.func @kernel(%arg0: i32, %arg1: memref<34x32xbf16, #tpu.memory_space<vmem>>, %arg2: memref<1x32xf32, #tpu.memory_space<vmem>>, %arg3: memref<1x32xf32, #tpu.memory_space<vmem>>, %arg4: memref<32x96xbf16, #tpu.memory_space<vmem>>, %arg5: memref<34x96xbf16, #tpu.memory_space<vmem>>) attributes {dimension_semantics = [#tpu.dimension_semantics<parallel>], iteration_bounds = array<i64: 1>, scalar_prefetch = 0 : i64, scratch_operands = 0 : i64, tpu.core_type = #tpu.core_type<tc>, window_params = [{transform_indices = @transform_0, window_bounds = array<i64: 34, 32>}, {pipeline_mode = #tpu.pipeline_mode<synchronous>, transform_indices = @transform_1, window_bounds = array<i64: 1, 32>}, {pipeline_mode = #tpu.pipeline_mode<synchronous>, transform_indices = @transform_2, window_bounds = array<i64: 1, 32>}, {pipeline_mode = #tpu.pipeline_mode<synchronous>, transform_indices = @transform_3, window_bounds = array<i64: 32, 96>}, {transform_indices = @transform_4, window_bounds = array<i64: 34, 96>}]} {
    %c0 = arith.constant 0 : index
    %c0_0 = arith.constant 0 : index
    %0 = vector.load %arg1[%c0, %c0_0] : memref<34x32xbf16, #tpu.memory_space<vmem>>, vector<34x32xbf16>
    %1 = arith.extf %0 : vector<34x32xbf16> to vector<34x32xf32>
    %cst = arith.constant dense<0.000000e+00> : vector<34xf32>
    %2 = vector.multi_reduction <add>, %1, %cst [1] : vector<34x32xf32> to vector<34xf32>
    %3 = vector.shape_cast %2 : vector<34xf32> to vector<34x1xf32>
    %cst_1 = arith.constant 3.200000e+01 : f32
    %4 = vector.broadcast %cst_1 : f32 to vector<34x1xf32>
    %5 = arith.divf %3, %4 : vector<34x1xf32>
    %6 = vector.broadcast %5 : vector<34x1xf32> to vector<34x32xf32>
    %7 = arith.subf %1, %6 : vector<34x32xf32>
    %8 = arith.mulf %7, %7 : vector<34x32xf32>
    %cst_2 = arith.constant dense<0.000000e+00> : vector<34xf32>
    %9 = vector.multi_reduction <add>, %8, %cst_2 [1] : vector<34x32xf32> to vector<34xf32>
    %10 = vector.shape_cast %9 : vector<34xf32> to vector<34x1xf32>
    %cst_3 = arith.constant 3.200000e+01 : f32
    %11 = vector.broadcast %cst_3 : f32 to vector<34x1xf32>
    %12 = arith.divf %10, %11 : vector<34x1xf32>
    %13 = vector.broadcast %5 : vector<34x1xf32> to vector<34x32xf32>
    %14 = arith.subf %1, %13 : vector<34x32xf32>
    %cst_4 = arith.constant 9.99999974E-6 : f32
    %15 = vector.broadcast %cst_4 : f32 to vector<34x1xf32>
    %16 = arith.addf %12, %15 : vector<34x1xf32>
    %17 = math.rsqrt %16 : vector<34x1xf32>
    %18 = vector.broadcast %17 : vector<34x1xf32> to vector<34x32xf32>
    %19 = arith.mulf %14, %18 : vector<34x32xf32>
    %c0_5 = arith.constant 0 : index
    %c0_6 = arith.constant 0 : index
    %20 = vector.load %arg2[%c0_5, %c0_6] : memref<1x32xf32, #tpu.memory_space<vmem>>, vector<1x32xf32>
    %21 = vector.broadcast %20 : vector<1x32xf32> to vector<34x32xf32>
    %22 = arith.mulf %19, %21 : vector<34x32xf32>
    %c0_7 = arith.constant 0 : index
    %c0_8 = arith.constant 0 : index
    %23 = vector.load %arg3[%c0_7, %c0_8] : memref<1x32xf32, #tpu.memory_space<vmem>>, vector<1x32xf32>
    %24 = vector.broadcast %23 : vector<1x32xf32> to vector<34x32xf32>
    %25 = arith.addf %22, %24 : vector<34x32xf32>
    %26 = arith.truncf %25 : vector<34x32xf32> to vector<34x32xbf16>
    %c0_9 = arith.constant 0 : index
    %c0_10 = arith.constant 0 : index
    %27 = vector.load %arg4[%c0_9, %c0_10] : memref<32x96xbf16, #tpu.memory_space<vmem>>, vector<32x96xbf16>
    %cst_11 = arith.constant dense<0.000000e+00> : vector<34x96xf32>
    %28 = tpu.matmul %26, %27, %cst_11 {dimension_numbers = #tpu.dot_dimension_numbers<[1], [0], [0], [1], [0, 0, 1, 1], [], []>} : vector<34x32xbf16>, vector<32x96xbf16>, vector<34x96xf32> -> vector<34x96xf32>
    %29 = arith.truncf %28 : vector<34x96xf32> to vector<34x96xbf16>
    %c0_12 = arith.constant 0 : index
    %c0_13 = arith.constant 0 : index
    %30 = vector.load %arg5[%c0_12, %c0_13] : memref<34x96xbf16, #tpu.memory_space<vmem>>, vector<34x96xbf16>
    tpu.vector_store %arg5[%c0_12, %c0_13], %29 {strides = array<i32>} : memref<34x96xbf16, #tpu.memory_space<vmem>>, vector<34x96xbf16>,
    return
  }
  func.func @transform_0(%arg0: i32) -> (i32, i32) {
    %c0_i32 = arith.constant 0 : i32
    %c0_i32_0 = arith.constant 0 : i32
    return %arg0, %c0_i32 : i32, i32
  }
  func.func @transform_1(%arg0: i32) -> (i32, i32) {
    %c0_i32 = arith.constant 0 : i32
    %c0_i32_0 = arith.constant 0 : i32
    %c0_i32_1 = arith.constant 0 : i32
    return %c0_i32, %c0_i32_0 : i32, i32
  }
  func.func @transform_2(%arg0: i32) -> (i32, i32) {
    %c0_i32 = arith.constant 0 : i32
    %c0_i32_0 = arith.constant 0 : i32
    %c0_i32_1 = arith.constant 0 : i32
    return %c0_i32, %c0_i32_0 : i32, i32
  }
  func.func @transform_3(%arg0: i32) -> (i32, i32) {
    %c0_i32 = arith.constant 0 : i32
    %c0_i32_0 = arith.constant 0 : i32
    %c0_i32_1 = arith.constant 0 : i32
    return %c0_i32, %c0_i32_0 : i32, i32
  }
  func.func @transform_4(%arg0: i32) -> (i32, i32) {
    %c0_i32 = arith.constant 0 : i32
    %c0_i32_0 = arith.constant 0 : i32
    return %arg0, %c0_i32 : i32, i32
  }
}

module attributes {stable_mosaic.version = 11 : i64} {
  func.func @kernel(%arg0: i32, %arg1: memref<1x17x96xbf16, #tpu.memory_space<vmem>>, %arg2: memref<32x32xbf16, #tpu.memory_space<vmem>>, %arg3: memref<1x32xf32, #tpu.memory_space<vmem>>, %arg4: memref<1x17x32xbf16, #tpu.memory_space<vmem>>, %arg5: memref<1x17x32xbf16, #tpu.memory_space<vmem>>) attributes {dimension_semantics = [#tpu.dimension_semantics<parallel>], iteration_bounds = array<i64: 2>, scalar_prefetch = 0 : i64, scratch_operands = 0 : i64, tpu.core_type = #tpu.core_type<tc>, window_params = [{transform_indices = @transform_0, window_bounds = array<i64: 1, 17, 96>}, {pipeline_mode = #tpu.pipeline_mode<synchronous>, transform_indices = @transform_1, window_bounds = array<i64: 32, 32>}, {pipeline_mode = #tpu.pipeline_mode<synchronous>, transform_indices = @transform_2, window_bounds = array<i64: 1, 32>}, {transform_indices = @transform_3, window_bounds = array<i64: 1, 17, 32>}, {transform_indices = @transform_4, window_bounds = array<i64: 1, 17, 32>}]} {
    %c0 = arith.constant 0 : index
    %c0_0 = arith.constant 0 : index
    %c0_1 = arith.constant 0 : index
    %0 = vector.load %arg4[%c0, %c0_0, %c0_1] : memref<1x17x32xbf16, #tpu.memory_space<vmem>>, vector<1x17x32xbf16>
    %1 = vector.shape_cast %0 : vector<1x17x32xbf16> to vector<17x32xbf16>
    %2 = arith.extf %1 : vector<17x32xbf16> to vector<17x32xf32>
    %c0_2 = arith.constant 0 : index
    %c0_3 = arith.constant 0 : index
    %3 = vector.load %arg3[%c0_2, %c0_3] : memref<1x32xf32, #tpu.memory_space<vmem>>, vector<1x32xf32>
    %4 = vector.broadcast %3 : vector<1x32xf32> to vector<17x32xf32>
    %5 = arith.addf %2, %4 : vector<17x32xf32>
    %c0_4 = arith.constant 0 : index
    %c0_5 = arith.constant 0 : index
    %c0_6 = arith.constant 0 : index
    %6 = vector.load %arg1[%c0_4, %c0_5, %c0_6] : memref<1x17x96xbf16, #tpu.memory_space<vmem>>, vector<1x17x8xbf16>
    %7 = vector.shape_cast %6 : vector<1x17x8xbf16> to vector<17x8xbf16>
    %cst = arith.constant 3.535160e-01 : bf16
    %8 = vector.broadcast %cst : bf16 to vector<17x8xbf16>
    %9 = arith.mulf %7, %8 : vector<17x8xbf16>
    %c0_7 = arith.constant 0 : index
    %c0_8 = arith.constant 0 : index
    %c32 = arith.constant 32 : index
    %10 = vector.load %arg1[%c0_7, %c0_8, %c32] : memref<1x17x96xbf16, #tpu.memory_space<vmem>>, vector<1x17x8xbf16>
    %11 = vector.shape_cast %10 : vector<1x17x8xbf16> to vector<17x8xbf16>
    %c0_9 = arith.constant 0 : index
    %c0_10 = arith.constant 0 : index
    %c64 = arith.constant 64 : index
    %12 = vector.load %arg1[%c0_9, %c0_10, %c64] : memref<1x17x96xbf16, #tpu.memory_space<vmem>>, vector<1x17x8xbf16>
    %13 = vector.shape_cast %12 : vector<1x17x8xbf16> to vector<17x8xbf16>
    %cst_11 = arith.constant dense<0.000000e+00> : vector<17x17xf32>
    %14 = tpu.matmul %9, %11, %cst_11 {dimension_numbers = #tpu.dot_dimension_numbers<[1], [1], [0], [0], [0, 0, 1, 0], [], []>} : vector<17x8xbf16>, vector<17x8xbf16>, vector<17x17xf32> -> vector<17x17xf32>
    %cst_12 = arith.constant dense<0xFF800000> : vector<17xf32>
    %15 = vector.multi_reduction <maximumf>, %14, %cst_12 [1] : vector<17x17xf32> to vector<17xf32>
    %16 = vector.shape_cast %15 : vector<17xf32> to vector<17x1xf32>
    %17 = vector.broadcast %16 : vector<17x1xf32> to vector<17x17xf32>
    %18 = arith.subf %14, %17 : vector<17x17xf32>
    %19 = math.exp %18 : vector<17x17xf32>
    %cst_13 = arith.constant dense<0.000000e+00> : vector<17xf32>
    %20 = vector.multi_reduction <add>, %19, %cst_13 [1] : vector<17x17xf32> to vector<17xf32>
    %21 = vector.shape_cast %20 : vector<17xf32> to vector<17x1xf32>
    %22 = tpu.reciprocal %21 {approx = true} : vector<17x1xf32> -> vector<17x1xf32>
    %23 = vector.broadcast %22 : vector<17x1xf32> to vector<17x17xf32>
    %24 = arith.mulf %19, %23 : vector<17x17xf32>
    %25 = arith.truncf %24 : vector<17x17xf32> to vector<17x17xbf16>
    %cst_14 = arith.constant dense<0.000000e+00> : vector<17x8xf32>
    %26 = tpu.matmul %25, %13, %cst_14 {dimension_numbers = #tpu.dot_dimension_numbers<[1], [0], [0], [1], [0, 0, 1, 1], [], []>} : vector<17x17xbf16>, vector<17x8xbf16>, vector<17x8xf32> -> vector<17x8xf32>
    %27 = arith.truncf %26 : vector<17x8xf32> to vector<17x8xbf16>
    %c0_15 = arith.constant 0 : index
    %c0_16 = arith.constant 0 : index
    %28 = vector.load %arg2[%c0_15, %c0_16] : memref<32x32xbf16, #tpu.memory_space<vmem>>, vector<8x32xbf16>
    %cst_17 = arith.constant dense<0.000000e+00> : vector<17x32xf32>
    %29 = tpu.matmul %27, %28, %cst_17 {dimension_numbers = #tpu.dot_dimension_numbers<[1], [0], [0], [1], [0, 0, 1, 1], [], []>} : vector<17x8xbf16>, vector<8x32xbf16>, vector<17x32xf32> -> vector<17x32xf32>
    %30 = arith.addf %5, %29 : vector<17x32xf32>
    %c0_18 = arith.constant 0 : index
    %c0_19 = arith.constant 0 : index
    %c8 = arith.constant 8 : index
    %31 = vector.load %arg1[%c0_18, %c0_19, %c8] : memref<1x17x96xbf16, #tpu.memory_space<vmem>>, vector<1x17x8xbf16>
    %32 = vector.shape_cast %31 : vector<1x17x8xbf16> to vector<17x8xbf16>
    %cst_20 = arith.constant 3.535160e-01 : bf16
    %33 = vector.broadcast %cst_20 : bf16 to vector<17x8xbf16>
    %34 = arith.mulf %32, %33 : vector<17x8xbf16>
    %c0_21 = arith.constant 0 : index
    %c0_22 = arith.constant 0 : index
    %c40 = arith.constant 40 : index
    %35 = vector.load %arg1[%c0_21, %c0_22, %c40] : memref<1x17x96xbf16, #tpu.memory_space<vmem>>, vector<1x17x8xbf16>
    %36 = vector.shape_cast %35 : vector<1x17x8xbf16> to vector<17x8xbf16>
    %c0_23 = arith.constant 0 : index
    %c0_24 = arith.constant 0 : index
    %c72 = arith.constant 72 : index
    %37 = vector.load %arg1[%c0_23, %c0_24, %c72] : memref<1x17x96xbf16, #tpu.memory_space<vmem>>, vector<1x17x8xbf16>
    %38 = vector.shape_cast %37 : vector<1x17x8xbf16> to vector<17x8xbf16>
    %cst_25 = arith.constant dense<0.000000e+00> : vector<17x17xf32>
    %39 = tpu.matmul %34, %36, %cst_25 {dimension_numbers = #tpu.dot_dimension_numbers<[1], [1], [0], [0], [0, 0, 1, 0], [], []>} : vector<17x8xbf16>, vector<17x8xbf16>, vector<17x17xf32> -> vector<17x17xf32>
    %cst_26 = arith.constant dense<0xFF800000> : vector<17xf32>
    %40 = vector.multi_reduction <maximumf>, %39, %cst_26 [1] : vector<17x17xf32> to vector<17xf32>
    %41 = vector.shape_cast %40 : vector<17xf32> to vector<17x1xf32>
    %42 = vector.broadcast %41 : vector<17x1xf32> to vector<17x17xf32>
    %43 = arith.subf %39, %42 : vector<17x17xf32>
    %44 = math.exp %43 : vector<17x17xf32>
    %cst_27 = arith.constant dense<0.000000e+00> : vector<17xf32>
    %45 = vector.multi_reduction <add>, %44, %cst_27 [1] : vector<17x17xf32> to vector<17xf32>
    %46 = vector.shape_cast %45 : vector<17xf32> to vector<17x1xf32>
    %47 = tpu.reciprocal %46 {approx = true} : vector<17x1xf32> -> vector<17x1xf32>
    %48 = vector.broadcast %47 : vector<17x1xf32> to vector<17x17xf32>
    %49 = arith.mulf %44, %48 : vector<17x17xf32>
    %50 = arith.truncf %49 : vector<17x17xf32> to vector<17x17xbf16>
    %cst_28 = arith.constant dense<0.000000e+00> : vector<17x8xf32>
    %51 = tpu.matmul %50, %38, %cst_28 {dimension_numbers = #tpu.dot_dimension_numbers<[1], [0], [0], [1], [0, 0, 1, 1], [], []>} : vector<17x17xbf16>, vector<17x8xbf16>, vector<17x8xf32> -> vector<17x8xf32>
    %52 = arith.truncf %51 : vector<17x8xf32> to vector<17x8xbf16>
    %c8_29 = arith.constant 8 : index
    %c0_30 = arith.constant 0 : index
    %53 = vector.load %arg2[%c8_29, %c0_30] : memref<32x32xbf16, #tpu.memory_space<vmem>>, vector<8x32xbf16>
    %cst_31 = arith.constant dense<0.000000e+00> : vector<17x32xf32>
    %54 = tpu.matmul %52, %53, %cst_31 {dimension_numbers = #tpu.dot_dimension_numbers<[1], [0], [0], [1], [0, 0, 1, 1], [], []>} : vector<17x8xbf16>, vector<8x32xbf16>, vector<17x32xf32> -> vector<17x32xf32>
    %55 = arith.addf %30, %54 : vector<17x32xf32>
    %c0_32 = arith.constant 0 : index
    %c0_33 = arith.constant 0 : index
    %c16 = arith.constant 16 : index
    %56 = vector.load %arg1[%c0_32, %c0_33, %c16] : memref<1x17x96xbf16, #tpu.memory_space<vmem>>, vector<1x17x8xbf16>
    %57 = vector.shape_cast %56 : vector<1x17x8xbf16> to vector<17x8xbf16>
    %cst_34 = arith.constant 3.535160e-01 : bf16
    %58 = vector.broadcast %cst_34 : bf16 to vector<17x8xbf16>
    %59 = arith.mulf %57, %58 : vector<17x8xbf16>
    %c0_35 = arith.constant 0 : index
    %c0_36 = arith.constant 0 : index
    %c48 = arith.constant 48 : index
    %60 = vector.load %arg1[%c0_35, %c0_36, %c48] : memref<1x17x96xbf16, #tpu.memory_space<vmem>>, vector<1x17x8xbf16>
    %61 = vector.shape_cast %60 : vector<1x17x8xbf16> to vector<17x8xbf16>
    %c0_37 = arith.constant 0 : index
    %c0_38 = arith.constant 0 : index
    %c80 = arith.constant 80 : index
    %62 = vector.load %arg1[%c0_37, %c0_38, %c80] : memref<1x17x96xbf16, #tpu.memory_space<vmem>>, vector<1x17x8xbf16>
    %63 = vector.shape_cast %62 : vector<1x17x8xbf16> to vector<17x8xbf16>
    %cst_39 = arith.constant dense<0.000000e+00> : vector<17x17xf32>
    %64 = tpu.matmul %59, %61, %cst_39 {dimension_numbers = #tpu.dot_dimension_numbers<[1], [1], [0], [0], [0, 0, 1, 0], [], []>} : vector<17x8xbf16>, vector<17x8xbf16>, vector<17x17xf32> -> vector<17x17xf32>
    %cst_40 = arith.constant dense<0xFF800000> : vector<17xf32>
    %65 = vector.multi_reduction <maximumf>, %64, %cst_40 [1] : vector<17x17xf32> to vector<17xf32>
    %66 = vector.shape_cast %65 : vector<17xf32> to vector<17x1xf32>
    %67 = vector.broadcast %66 : vector<17x1xf32> to vector<17x17xf32>
    %68 = arith.subf %64, %67 : vector<17x17xf32>
    %69 = math.exp %68 : vector<17x17xf32>
    %cst_41 = arith.constant dense<0.000000e+00> : vector<17xf32>
    %70 = vector.multi_reduction <add>, %69, %cst_41 [1] : vector<17x17xf32> to vector<17xf32>
    %71 = vector.shape_cast %70 : vector<17xf32> to vector<17x1xf32>
    %72 = tpu.reciprocal %71 {approx = true} : vector<17x1xf32> -> vector<17x1xf32>
    %73 = vector.broadcast %72 : vector<17x1xf32> to vector<17x17xf32>
    %74 = arith.mulf %69, %73 : vector<17x17xf32>
    %75 = arith.truncf %74 : vector<17x17xf32> to vector<17x17xbf16>
    %cst_42 = arith.constant dense<0.000000e+00> : vector<17x8xf32>
    %76 = tpu.matmul %75, %63, %cst_42 {dimension_numbers = #tpu.dot_dimension_numbers<[1], [0], [0], [1], [0, 0, 1, 1], [], []>} : vector<17x17xbf16>, vector<17x8xbf16>, vector<17x8xf32> -> vector<17x8xf32>
    %77 = arith.truncf %76 : vector<17x8xf32> to vector<17x8xbf16>
    %c16_43 = arith.constant 16 : index
    %c0_44 = arith.constant 0 : index
    %78 = vector.load %arg2[%c16_43, %c0_44] : memref<32x32xbf16, #tpu.memory_space<vmem>>, vector<8x32xbf16>
    %cst_45 = arith.constant dense<0.000000e+00> : vector<17x32xf32>
    %79 = tpu.matmul %77, %78, %cst_45 {dimension_numbers = #tpu.dot_dimension_numbers<[1], [0], [0], [1], [0, 0, 1, 1], [], []>} : vector<17x8xbf16>, vector<8x32xbf16>, vector<17x32xf32> -> vector<17x32xf32>
    %80 = arith.addf %55, %79 : vector<17x32xf32>
    %c0_46 = arith.constant 0 : index
    %c0_47 = arith.constant 0 : index
    %c24 = arith.constant 24 : index
    %81 = vector.load %arg1[%c0_46, %c0_47, %c24] : memref<1x17x96xbf16, #tpu.memory_space<vmem>>, vector<1x17x8xbf16>
    %82 = vector.shape_cast %81 : vector<1x17x8xbf16> to vector<17x8xbf16>
    %cst_48 = arith.constant 3.535160e-01 : bf16
    %83 = vector.broadcast %cst_48 : bf16 to vector<17x8xbf16>
    %84 = arith.mulf %82, %83 : vector<17x8xbf16>
    %c0_49 = arith.constant 0 : index
    %c0_50 = arith.constant 0 : index
    %c56 = arith.constant 56 : index
    %85 = vector.load %arg1[%c0_49, %c0_50, %c56] : memref<1x17x96xbf16, #tpu.memory_space<vmem>>, vector<1x17x8xbf16>
    %86 = vector.shape_cast %85 : vector<1x17x8xbf16> to vector<17x8xbf16>
    %c0_51 = arith.constant 0 : index
    %c0_52 = arith.constant 0 : index
    %c88 = arith.constant 88 : index
    %87 = vector.load %arg1[%c0_51, %c0_52, %c88] : memref<1x17x96xbf16, #tpu.memory_space<vmem>>, vector<1x17x8xbf16>
    %88 = vector.shape_cast %87 : vector<1x17x8xbf16> to vector<17x8xbf16>
    %cst_53 = arith.constant dense<0.000000e+00> : vector<17x17xf32>
    %89 = tpu.matmul %84, %86, %cst_53 {dimension_numbers = #tpu.dot_dimension_numbers<[1], [1], [0], [0], [0, 0, 1, 0], [], []>} : vector<17x8xbf16>, vector<17x8xbf16>, vector<17x17xf32> -> vector<17x17xf32>
    %cst_54 = arith.constant dense<0xFF800000> : vector<17xf32>
    %90 = vector.multi_reduction <maximumf>, %89, %cst_54 [1] : vector<17x17xf32> to vector<17xf32>
    %91 = vector.shape_cast %90 : vector<17xf32> to vector<17x1xf32>
    %92 = vector.broadcast %91 : vector<17x1xf32> to vector<17x17xf32>
    %93 = arith.subf %89, %92 : vector<17x17xf32>
    %94 = math.exp %93 : vector<17x17xf32>
    %cst_55 = arith.constant dense<0.000000e+00> : vector<17xf32>
    %95 = vector.multi_reduction <add>, %94, %cst_55 [1] : vector<17x17xf32> to vector<17xf32>
    %96 = vector.shape_cast %95 : vector<17xf32> to vector<17x1xf32>
    %97 = tpu.reciprocal %96 {approx = true} : vector<17x1xf32> -> vector<17x1xf32>
    %98 = vector.broadcast %97 : vector<17x1xf32> to vector<17x17xf32>
    %99 = arith.mulf %94, %98 : vector<17x17xf32>
    %100 = arith.truncf %99 : vector<17x17xf32> to vector<17x17xbf16>
    %cst_56 = arith.constant dense<0.000000e+00> : vector<17x8xf32>
    %101 = tpu.matmul %100, %88, %cst_56 {dimension_numbers = #tpu.dot_dimension_numbers<[1], [0], [0], [1], [0, 0, 1, 1], [], []>} : vector<17x17xbf16>, vector<17x8xbf16>, vector<17x8xf32> -> vector<17x8xf32>
    %102 = arith.truncf %101 : vector<17x8xf32> to vector<17x8xbf16>
    %c24_57 = arith.constant 24 : index
    %c0_58 = arith.constant 0 : index
    %103 = vector.load %arg2[%c24_57, %c0_58] : memref<32x32xbf16, #tpu.memory_space<vmem>>, vector<8x32xbf16>
    %cst_59 = arith.constant dense<0.000000e+00> : vector<17x32xf32>
    %104 = tpu.matmul %102, %103, %cst_59 {dimension_numbers = #tpu.dot_dimension_numbers<[1], [0], [0], [1], [0, 0, 1, 1], [], []>} : vector<17x8xbf16>, vector<8x32xbf16>, vector<17x32xf32> -> vector<17x32xf32>
    %105 = arith.addf %80, %104 : vector<17x32xf32>
    %106 = arith.truncf %105 : vector<17x32xf32> to vector<17x32xbf16>
    %c0_60 = arith.constant 0 : index
    %c0_61 = arith.constant 0 : index
    %c0_62 = arith.constant 0 : index
    %107 = vector.load %arg5[%c0_60, %c0_61, %c0_62] : memref<1x17x32xbf16, #tpu.memory_space<vmem>>, vector<1x17x32xbf16>
    %108 = vector.shape_cast %107 : vector<1x17x32xbf16> to vector<17x32xbf16>
    %109 = vector.shape_cast %106 : vector<17x32xbf16> to vector<1x17x32xbf16>
    tpu.vector_store %arg5[%c0_60, %c0_61, %c0_62], %109 {strides = array<i32>} : memref<1x17x32xbf16, #tpu.memory_space<vmem>>, vector<1x17x32xbf16>,
    return
  }
  func.func @transform_0(%arg0: i32) -> (i32, i32, i32) {
    %c0_i32 = arith.constant 0 : i32
    %c0_i32_0 = arith.constant 0 : i32
    %c0_i32_1 = arith.constant 0 : i32
    return %arg0, %c0_i32, %c0_i32_0 : i32, i32, i32
  }
  func.func @transform_1(%arg0: i32) -> (i32, i32) {
    %c0_i32 = arith.constant 0 : i32
    %c0_i32_0 = arith.constant 0 : i32
    %c0_i32_1 = arith.constant 0 : i32
    return %c0_i32, %c0_i32_0 : i32, i32
  }
  func.func @transform_2(%arg0: i32) -> (i32, i32) {
    %c0_i32 = arith.constant 0 : i32
    %c0_i32_0 = arith.constant 0 : i32
    %c0_i32_1 = arith.constant 0 : i32
    return %c0_i32, %c0_i32_0 : i32, i32
  }
  func.func @transform_3(%arg0: i32) -> (i32, i32, i32) {
    %c0_i32 = arith.constant 0 : i32
    %c0_i32_0 = arith.constant 0 : i32
    %c0_i32_1 = arith.constant 0 : i32
    return %arg0, %c0_i32, %c0_i32_0 : i32, i32, i32
  }
  func.func @transform_4(%arg0: i32) -> (i32, i32, i32) {
    %c0_i32 = arith.constant 0 : i32
    %c0_i32_0 = arith.constant 0 : i32
    %c0_i32_1 = arith.constant 0 : i32
    return %arg0, %c0_i32, %c0_i32_0 : i32, i32, i32
  }
}

module attributes {stable_mosaic.version = 11 : i64} {
  func.func @kernel(%arg0: i32, %arg1: memref<34x32xbf16, #tpu.memory_space<vmem>>, %arg2: memref<1x32xf32, #tpu.memory_space<vmem>>, %arg3: memref<1x32xf32, #tpu.memory_space<vmem>>, %arg4: memref<32x256xbf16, #tpu.memory_space<vmem>>, %arg5: memref<1x256xf32, #tpu.memory_space<vmem>>, %arg6: memref<34x256xbf16, #tpu.memory_space<vmem>>) attributes {dimension_semantics = [#tpu.dimension_semantics<parallel>], iteration_bounds = array<i64: 1>, scalar_prefetch = 0 : i64, scratch_operands = 0 : i64, tpu.core_type = #tpu.core_type<tc>, window_params = [{transform_indices = @transform_0, window_bounds = array<i64: 34, 32>}, {pipeline_mode = #tpu.pipeline_mode<synchronous>, transform_indices = @transform_1, window_bounds = array<i64: 1, 32>}, {pipeline_mode = #tpu.pipeline_mode<synchronous>, transform_indices = @transform_2, window_bounds = array<i64: 1, 32>}, {pipeline_mode = #tpu.pipeline_mode<synchronous>, transform_indices = @transform_3, window_bounds = array<i64: 32, 256>}, {pipeline_mode = #tpu.pipeline_mode<synchronous>, transform_indices = @transform_4, window_bounds = array<i64: 1, 256>}, {transform_indices = @transform_5, window_bounds = array<i64: 34, 256>}]} {
    %c0 = arith.constant 0 : index
    %c0_0 = arith.constant 0 : index
    %0 = vector.load %arg1[%c0, %c0_0] : memref<34x32xbf16, #tpu.memory_space<vmem>>, vector<34x32xbf16>
    %1 = arith.extf %0 : vector<34x32xbf16> to vector<34x32xf32>
    %cst = arith.constant dense<0.000000e+00> : vector<34xf32>
    %2 = vector.multi_reduction <add>, %1, %cst [1] : vector<34x32xf32> to vector<34xf32>
    %3 = vector.shape_cast %2 : vector<34xf32> to vector<34x1xf32>
    %cst_1 = arith.constant 3.200000e+01 : f32
    %4 = vector.broadcast %cst_1 : f32 to vector<34x1xf32>
    %5 = arith.divf %3, %4 : vector<34x1xf32>
    %6 = vector.broadcast %5 : vector<34x1xf32> to vector<34x32xf32>
    %7 = arith.subf %1, %6 : vector<34x32xf32>
    %8 = arith.mulf %7, %7 : vector<34x32xf32>
    %cst_2 = arith.constant dense<0.000000e+00> : vector<34xf32>
    %9 = vector.multi_reduction <add>, %8, %cst_2 [1] : vector<34x32xf32> to vector<34xf32>
    %10 = vector.shape_cast %9 : vector<34xf32> to vector<34x1xf32>
    %cst_3 = arith.constant 3.200000e+01 : f32
    %11 = vector.broadcast %cst_3 : f32 to vector<34x1xf32>
    %12 = arith.divf %10, %11 : vector<34x1xf32>
    %13 = vector.broadcast %5 : vector<34x1xf32> to vector<34x32xf32>
    %14 = arith.subf %1, %13 : vector<34x32xf32>
    %cst_4 = arith.constant 9.99999974E-6 : f32
    %15 = vector.broadcast %cst_4 : f32 to vector<34x1xf32>
    %16 = arith.addf %12, %15 : vector<34x1xf32>
    %17 = math.rsqrt %16 : vector<34x1xf32>
    %18 = vector.broadcast %17 : vector<34x1xf32> to vector<34x32xf32>
    %19 = arith.mulf %14, %18 : vector<34x32xf32>
    %c0_5 = arith.constant 0 : index
    %c0_6 = arith.constant 0 : index
    %20 = vector.load %arg2[%c0_5, %c0_6] : memref<1x32xf32, #tpu.memory_space<vmem>>, vector<1x32xf32>
    %21 = vector.broadcast %20 : vector<1x32xf32> to vector<34x32xf32>
    %22 = arith.mulf %19, %21 : vector<34x32xf32>
    %c0_7 = arith.constant 0 : index
    %c0_8 = arith.constant 0 : index
    %23 = vector.load %arg3[%c0_7, %c0_8] : memref<1x32xf32, #tpu.memory_space<vmem>>, vector<1x32xf32>
    %24 = vector.broadcast %23 : vector<1x32xf32> to vector<34x32xf32>
    %25 = arith.addf %22, %24 : vector<34x32xf32>
    %26 = arith.truncf %25 : vector<34x32xf32> to vector<34x32xbf16>
    %c0_9 = arith.constant 0 : index
    %c0_10 = arith.constant 0 : index
    %27 = vector.load %arg4[%c0_9, %c0_10] : memref<32x256xbf16, #tpu.memory_space<vmem>>, vector<32x256xbf16>
    %cst_11 = arith.constant dense<0.000000e+00> : vector<34x256xf32>
    %28 = tpu.matmul %26, %27, %cst_11 {dimension_numbers = #tpu.dot_dimension_numbers<[1], [0], [0], [1], [0, 0, 1, 1], [], []>} : vector<34x32xbf16>, vector<32x256xbf16>, vector<34x256xf32> -> vector<34x256xf32>
    %c0_12 = arith.constant 0 : index
    %c0_13 = arith.constant 0 : index
    %29 = vector.load %arg5[%c0_12, %c0_13] : memref<1x256xf32, #tpu.memory_space<vmem>>, vector<1x256xf32>
    %30 = vector.broadcast %29 : vector<1x256xf32> to vector<34x256xf32>
    %31 = arith.addf %28, %30 : vector<34x256xf32>
    %cst_14 = arith.constant 5.000000e-01 : f32
    %32 = vector.broadcast %cst_14 : f32 to vector<34x256xf32>
    %33 = arith.mulf %32, %31 : vector<34x256xf32>
    %cst_15 = arith.constant 0.707106769 : f32
    %34 = vector.broadcast %cst_15 : f32 to vector<34x256xf32>
    %35 = arith.mulf %31, %34 : vector<34x256xf32>
    %36 = math.erf %35 : vector<34x256xf32>
    %cst_16 = arith.constant 1.000000e+00 : f32
    %37 = vector.broadcast %cst_16 : f32 to vector<34x256xf32>
    %38 = arith.addf %37, %36 : vector<34x256xf32>
    %39 = arith.mulf %33, %38 : vector<34x256xf32>
    %40 = arith.truncf %39 : vector<34x256xf32> to vector<34x256xbf16>
    %c0_17 = arith.constant 0 : index
    %c0_18 = arith.constant 0 : index
    %41 = vector.load %arg6[%c0_17, %c0_18] : memref<34x256xbf16, #tpu.memory_space<vmem>>, vector<34x256xbf16>
    tpu.vector_store %arg6[%c0_17, %c0_18], %40 {strides = array<i32>} : memref<34x256xbf16, #tpu.memory_space<vmem>>, vector<34x256xbf16>,
    return
  }
  func.func @transform_0(%arg0: i32) -> (i32, i32) {
    %c0_i32 = arith.constant 0 : i32
    %c0_i32_0 = arith.constant 0 : i32
    return %arg0, %c0_i32 : i32, i32
  }
  func.func @transform_1(%arg0: i32) -> (i32, i32) {
    %c0_i32 = arith.constant 0 : i32
    %c0_i32_0 = arith.constant 0 : i32
    %c0_i32_1 = arith.constant 0 : i32
    return %c0_i32, %c0_i32_0 : i32, i32
  }
  func.func @transform_2(%arg0: i32) -> (i32, i32) {
    %c0_i32 = arith.constant 0 : i32
    %c0_i32_0 = arith.constant 0 : i32
    %c0_i32_1 = arith.constant 0 : i32
    return %c0_i32, %c0_i32_0 : i32, i32
  }
  func.func @transform_3(%arg0: i32) -> (i32, i32) {
    %c0_i32 = arith.constant 0 : i32
    %c0_i32_0 = arith.constant 0 : i32
    %c0_i32_1 = arith.constant 0 : i32
    return %c0_i32, %c0_i32_0 : i32, i32
  }
  func.func @transform_4(%arg0: i32) -> (i32, i32) {
    %c0_i32 = arith.constant 0 : i32
    %c0_i32_0 = arith.constant 0 : i32
    %c0_i32_1 = arith.constant 0 : i32
    return %c0_i32, %c0_i32_0 : i32, i32
  }
  func.func @transform_5(%arg0: i32) -> (i32, i32) {
    %c0_i32 = arith.constant 0 : i32
    %c0_i32_0 = arith.constant 0 : i32
    return %arg0, %c0_i32 : i32, i32
  }
}

module attributes {stable_mosaic.version = 11 : i64} {
  func.func @kernel(%arg0: i32, %arg1: memref<2x32xf32, #tpu.memory_space<vmem>>, %arg2: memref<32x256xbf16, #tpu.memory_space<vmem>>, %arg3: memref<1x256xf32, #tpu.memory_space<vmem>>, %arg4: memref<2x256xf32, #tpu.memory_space<vmem>>) attributes {dimension_semantics = [#tpu.dimension_semantics<parallel>], iteration_bounds = array<i64: 1>, scalar_prefetch = 0 : i64, scratch_operands = 0 : i64, tpu.core_type = #tpu.core_type<tc>, window_params = [{transform_indices = @transform_0, window_bounds = array<i64: 2, 32>}, {pipeline_mode = #tpu.pipeline_mode<synchronous>, transform_indices = @transform_1, window_bounds = array<i64: 32, 256>}, {pipeline_mode = #tpu.pipeline_mode<synchronous>, transform_indices = @transform_2, window_bounds = array<i64: 1, 256>}, {transform_indices = @transform_3, window_bounds = array<i64: 2, 256>}]} {
    %c0 = arith.constant 0 : index
    %c0_0 = arith.constant 0 : index
    %0 = vector.load %arg1[%c0, %c0_0] : memref<2x32xf32, #tpu.memory_space<vmem>>, vector<2x32xf32>
    %1 = arith.truncf %0 : vector<2x32xf32> to vector<2x32xbf16>
    %c0_1 = arith.constant 0 : index
    %c0_2 = arith.constant 0 : index
    %2 = vector.load %arg2[%c0_1, %c0_2] : memref<32x256xbf16, #tpu.memory_space<vmem>>, vector<32x256xbf16>
    %cst = arith.constant dense<0.000000e+00> : vector<2x256xf32>
    %3 = tpu.matmul %1, %2, %cst {dimension_numbers = #tpu.dot_dimension_numbers<[1], [0], [0], [1], [0, 0, 1, 1], [], []>} : vector<2x32xbf16>, vector<32x256xbf16>, vector<2x256xf32> -> vector<2x256xf32>
    %c0_3 = arith.constant 0 : index
    %c0_4 = arith.constant 0 : index
    %4 = vector.load %arg3[%c0_3, %c0_4] : memref<1x256xf32, #tpu.memory_space<vmem>>, vector<1x256xf32>
    %5 = vector.broadcast %4 : vector<1x256xf32> to vector<2x256xf32>
    %6 = arith.addf %3, %5 : vector<2x256xf32>
    %c0_5 = arith.constant 0 : index
    %c0_6 = arith.constant 0 : index
    %7 = vector.load %arg4[%c0_5, %c0_6] : memref<2x256xf32, #tpu.memory_space<vmem>>, vector<2x256xf32>
    tpu.vector_store %arg4[%c0_5, %c0_6], %6 {strides = array<i32>} : memref<2x256xf32, #tpu.memory_space<vmem>>, vector<2x256xf32>,
    return
  }
  func.func @transform_0(%arg0: i32) -> (i32, i32) {
    %c0_i32 = arith.constant 0 : i32
    %c0_i32_0 = arith.constant 0 : i32
    return %arg0, %c0_i32 : i32, i32
  }
  func.func @transform_1(%arg0: i32) -> (i32, i32) {
    %c0_i32 = arith.constant 0 : i32
    %c0_i32_0 = arith.constant 0 : i32
    %c0_i32_1 = arith.constant 0 : i32
    return %c0_i32, %c0_i32_0 : i32, i32
  }
  func.func @transform_2(%arg0: i32) -> (i32, i32) {
    %c0_i32 = arith.constant 0 : i32
    %c0_i32_0 = arith.constant 0 : i32
    %c0_i32_1 = arith.constant 0 : i32
    return %c0_i32, %c0_i32_0 : i32, i32
  }
  func.func @transform_3(%arg0: i32) -> (i32, i32) {
    %c0_i32 = arith.constant 0 : i32
    %c0_i32_0 = arith.constant 0 : i32
    return %arg0, %c0_i32 : i32, i32
  }
}

module attributes {stable_mosaic.version = 11 : i64} {
  func.func @kernel(%arg0: i32, %arg1: memref<34x256xbf16, #tpu.memory_space<vmem>>, %arg2: memref<256x32xbf16, #tpu.memory_space<vmem>>, %arg3: memref<1x32xf32, #tpu.memory_space<vmem>>, %arg4: memref<34x32xbf16, #tpu.memory_space<vmem>>, %arg5: memref<34x32xbf16, #tpu.memory_space<vmem>>) attributes {dimension_semantics = [#tpu.dimension_semantics<parallel>], iteration_bounds = array<i64: 1>, scalar_prefetch = 0 : i64, scratch_operands = 0 : i64, tpu.core_type = #tpu.core_type<tc>, window_params = [{transform_indices = @transform_0, window_bounds = array<i64: 34, 256>}, {pipeline_mode = #tpu.pipeline_mode<synchronous>, transform_indices = @transform_1, window_bounds = array<i64: 256, 32>}, {pipeline_mode = #tpu.pipeline_mode<synchronous>, transform_indices = @transform_2, window_bounds = array<i64: 1, 32>}, {transform_indices = @transform_3, window_bounds = array<i64: 34, 32>}, {transform_indices = @transform_4, window_bounds = array<i64: 34, 32>}]} {
    %c0 = arith.constant 0 : index
    %c0_0 = arith.constant 0 : index
    %0 = vector.load %arg1[%c0, %c0_0] : memref<34x256xbf16, #tpu.memory_space<vmem>>, vector<34x256xbf16>
    %c0_1 = arith.constant 0 : index
    %c0_2 = arith.constant 0 : index
    %1 = vector.load %arg2[%c0_1, %c0_2] : memref<256x32xbf16, #tpu.memory_space<vmem>>, vector<256x32xbf16>
    %cst = arith.constant dense<0.000000e+00> : vector<34x32xf32>
    %2 = tpu.matmul %0, %1, %cst {dimension_numbers = #tpu.dot_dimension_numbers<[1], [0], [0], [1], [0, 0, 1, 1], [], []>} : vector<34x256xbf16>, vector<256x32xbf16>, vector<34x32xf32> -> vector<34x32xf32>
    %c0_3 = arith.constant 0 : index
    %c0_4 = arith.constant 0 : index
    %3 = vector.load %arg3[%c0_3, %c0_4] : memref<1x32xf32, #tpu.memory_space<vmem>>, vector<1x32xf32>
    %4 = vector.broadcast %3 : vector<1x32xf32> to vector<34x32xf32>
    %5 = arith.addf %2, %4 : vector<34x32xf32>
    %c0_5 = arith.constant 0 : index
    %c0_6 = arith.constant 0 : index
    %6 = vector.load %arg4[%c0_5, %c0_6] : memref<34x32xbf16, #tpu.memory_space<vmem>>, vector<34x32xbf16>
    %7 = arith.extf %6 : vector<34x32xbf16> to vector<34x32xf32>
    %8 = arith.addf %5, %7 : vector<34x32xf32>
    %9 = arith.truncf %8 : vector<34x32xf32> to vector<34x32xbf16>
    %c0_7 = arith.constant 0 : index
    %c0_8 = arith.constant 0 : index
    %10 = vector.load %arg5[%c0_7, %c0_8] : memref<34x32xbf16, #tpu.memory_space<vmem>>, vector<34x32xbf16>
    tpu.vector_store %arg5[%c0_7, %c0_8], %9 {strides = array<i32>} : memref<34x32xbf16, #tpu.memory_space<vmem>>, vector<34x32xbf16>,
    return
  }
  func.func @transform_0(%arg0: i32) -> (i32, i32) {
    %c0_i32 = arith.constant 0 : i32
    %c0_i32_0 = arith.constant 0 : i32
    return %arg0, %c0_i32 : i32, i32
  }
  func.func @transform_1(%arg0: i32) -> (i32, i32) {
    %c0_i32 = arith.constant 0 : i32
    %c0_i32_0 = arith.constant 0 : i32
    %c0_i32_1 = arith.constant 0 : i32
    return %c0_i32, %c0_i32_0 : i32, i32
  }
  func.func @transform_2(%arg0: i32) -> (i32, i32) {
    %c0_i32 = arith.constant 0 : i32
    %c0_i32_0 = arith.constant 0 : i32
    %c0_i32_1 = arith.constant 0 : i32
    return %c0_i32, %c0_i32_0 : i32, i32
  }
  func.func @transform_3(%arg0: i32) -> (i32, i32) {
    %c0_i32 = arith.constant 0 : i32
    %c0_i32_0 = arith.constant 0 : i32
    return %arg0, %c0_i32 : i32, i32
  }
  func.func @transform_4(%arg0: i32) -> (i32, i32) {
    %c0_i32 = arith.constant 0 : i32
    %c0_i32_0 = arith.constant 0 : i32
    return %arg0, %c0_i32 : i32, i32
  }
}

module attributes {stable_mosaic.version = 11 : i64} {
  func.func @_ln_kernel(%arg0: i32, %arg1: memref<34x32xbf16, #tpu.memory_space<vmem>>, %arg2: memref<1x32xf32, #tpu.memory_space<vmem>>, %arg3: memref<1x32xf32, #tpu.memory_space<vmem>>, %arg4: memref<34x32xf32, #tpu.memory_space<vmem>>) attributes {dimension_semantics = [#tpu.dimension_semantics<parallel>], iteration_bounds = array<i64: 1>, scalar_prefetch = 0 : i64, scratch_operands = 0 : i64, tpu.core_type = #tpu.core_type<tc>, window_params = [{transform_indices = @transform_0, window_bounds = array<i64: 34, 32>}, {pipeline_mode = #tpu.pipeline_mode<synchronous>, transform_indices = @transform_1, window_bounds = array<i64: 1, 32>}, {pipeline_mode = #tpu.pipeline_mode<synchronous>, transform_indices = @transform_2, window_bounds = array<i64: 1, 32>}, {transform_indices = @transform_3, window_bounds = array<i64: 34, 32>}]} {
    %c0 = arith.constant 0 : index
    %c0_0 = arith.constant 0 : index
    %0 = vector.load %arg1[%c0, %c0_0] : memref<34x32xbf16, #tpu.memory_space<vmem>>, vector<34x32xbf16>
    %1 = arith.extf %0 : vector<34x32xbf16> to vector<34x32xf32>
    %cst = arith.constant dense<0.000000e+00> : vector<34xf32>
    %2 = vector.multi_reduction <add>, %1, %cst [1] : vector<34x32xf32> to vector<34xf32>
    %3 = vector.shape_cast %2 : vector<34xf32> to vector<34x1xf32>
    %cst_1 = arith.constant 3.200000e+01 : f32
    %4 = vector.broadcast %cst_1 : f32 to vector<34x1xf32>
    %5 = arith.divf %3, %4 : vector<34x1xf32>
    %6 = vector.broadcast %5 : vector<34x1xf32> to vector<34x32xf32>
    %7 = arith.subf %1, %6 : vector<34x32xf32>
    %8 = arith.mulf %7, %7 : vector<34x32xf32>
    %cst_2 = arith.constant dense<0.000000e+00> : vector<34xf32>
    %9 = vector.multi_reduction <add>, %8, %cst_2 [1] : vector<34x32xf32> to vector<34xf32>
    %10 = vector.shape_cast %9 : vector<34xf32> to vector<34x1xf32>
    %cst_3 = arith.constant 3.200000e+01 : f32
    %11 = vector.broadcast %cst_3 : f32 to vector<34x1xf32>
    %12 = arith.divf %10, %11 : vector<34x1xf32>
    %13 = vector.broadcast %5 : vector<34x1xf32> to vector<34x32xf32>
    %14 = arith.subf %1, %13 : vector<34x32xf32>
    %cst_4 = arith.constant 9.99999974E-6 : f32
    %15 = vector.broadcast %cst_4 : f32 to vector<34x1xf32>
    %16 = arith.addf %12, %15 : vector<34x1xf32>
    %17 = math.rsqrt %16 : vector<34x1xf32>
    %18 = vector.broadcast %17 : vector<34x1xf32> to vector<34x32xf32>
    %19 = arith.mulf %14, %18 : vector<34x32xf32>
    %c0_5 = arith.constant 0 : index
    %c0_6 = arith.constant 0 : index
    %20 = vector.load %arg2[%c0_5, %c0_6] : memref<1x32xf32, #tpu.memory_space<vmem>>, vector<1x32xf32>
    %21 = vector.broadcast %20 : vector<1x32xf32> to vector<34x32xf32>
    %22 = arith.mulf %19, %21 : vector<34x32xf32>
    %c0_7 = arith.constant 0 : index
    %c0_8 = arith.constant 0 : index
    %23 = vector.load %arg3[%c0_7, %c0_8] : memref<1x32xf32, #tpu.memory_space<vmem>>, vector<1x32xf32>
    %24 = vector.broadcast %23 : vector<1x32xf32> to vector<34x32xf32>
    %25 = arith.addf %22, %24 : vector<34x32xf32>
    %c0_9 = arith.constant 0 : index
    %c0_10 = arith.constant 0 : index
    %26 = vector.load %arg4[%c0_9, %c0_10] : memref<34x32xf32, #tpu.memory_space<vmem>>, vector<34x32xf32>
    tpu.vector_store %arg4[%c0_9, %c0_10], %25 {strides = array<i32>} : memref<34x32xf32, #tpu.memory_space<vmem>>, vector<34x32xf32>,
    return
  }
  func.func @transform_0(%arg0: i32) -> (i32, i32) {
    %c0_i32 = arith.constant 0 : i32
    %c0_i32_0 = arith.constant 0 : i32
    return %arg0, %c0_i32 : i32, i32
  }
  func.func @transform_1(%arg0: i32) -> (i32, i32) {
    %c0_i32 = arith.constant 0 : i32
    %c0_i32_0 = arith.constant 0 : i32
    %c0_i32_1 = arith.constant 0 : i32
    return %c0_i32, %c0_i32_0 : i32, i32
  }
  func.func @transform_2(%arg0: i32) -> (i32, i32) {
    %c0_i32 = arith.constant 0 : i32
    %c0_i32_0 = arith.constant 0 : i32
    %c0_i32_1 = arith.constant 0 : i32
    return %c0_i32, %c0_i32_0 : i32, i32
  }
  func.func @transform_3(%arg0: i32) -> (i32, i32) {
    %c0_i32 = arith.constant 0 : i32
    %c0_i32_0 = arith.constant 0 : i32
    return %arg0, %c0_i32 : i32, i32
  }
}

</mosaic_0001>

<llo_original>
// kernel: tpu_custom_call.1
$region0: #{tpu_custom_call.1}
  #allocation0 [shape = 'u32[]', space=smem, size = 0x4, offset = 0x4, fixed_abs, tag = 'smem constant byte address 0x4 - core index']
  #allocation1 [shape = 'u32[144,128]{1,0:T(1,128)}', space=vmem, size = 0x12000, scoped, tag = 'internal scratch']
  %s0 = inlined_call_operand.hbm [shape: f32[8,128], index: 0, kind: input, shape index: {}]
  %s1 = inlined_call_operand.hbm [shape: f32[8,128], index: 1, kind: output, shape index: {}]
  %s2 = sld [smem:[#allocation0]]
  $region41: #{tpu_custom_call.1} parent=0
    _
  %s4 = ssub.s32 1, %s2
  %s5 = scalar_select 0, %s4, %s2
  $region1: #{tpu_custom_call.1} parent=0
    #allocation2 [shape = 'u8[4096]{0}', space=vmem, size = 0x1000, scoped, tag = 'input window, operand 0, single buffered']
    #allocation3 [shape = 's32[2]{0}', space=sflag, size = 0x8, scoped, tag = 'scoped memory for tpu_custom_call.1']
    #allocation4 [shape = 's32[2]{0}', space=sflag, size = 0x8, scoped, tag = 'scoped memory for tpu_custom_call.1']
    #allocation5 [shape = 'u8[4096]{0}', space=vmem, size = 0x1000, scoped, tag = 'output window, operand 0, single buffered']
    %6 = vsyncpa [#allocation3], 0
    %7 = vsyncpa [#allocation4], 0
    loop: start=0, step=1, limit=4
    $region2: #{tpu_custom_call.1} parent=1 // loop_pre_header
      _
    $region3: #{tpu_custom_call.1} parent=1 // loop_header
      %s9 = sphi 0, %s13
      %p10 = scmp.ge.s32.totalorder %s9, 4
      %s17 = sphi 0, %s17
      %s19 = sphi 0, %s17
      %s20 = sphi 0, %s19
      %s34 = sphi 0, %s20
      %s38 = sphi 0, %s38
      %s40 = sphi 0, %s38
      %s41 = sphi 0, %s40
      %s55 = sphi 0, %s41
    $region4: #{tpu_custom_call.1} parent=1 // loop_header_branch
      %12 = sbr.rel (%p10) target = $region8
    $region5: #{tpu_custom_call.1} parent=1 // loop_body
      %s14 = ssub.s32 %s9, 1
      %s15 = ssub.s32 %s9, 2
      %s16 = sadd.s32 %s9, 1
      %s18 = sadd.s32 %s17, 1
      %p21 = scmp.eq.s32.totalorder %s9, 1
      %p22 = scmp.ne.s32.totalorder %s17, %s19
      %p23 = scmp.eq.s32.totalorder %s9, 0
      %p24 = por %p22, %p23
      %p25 = scmp.ne.s32.totalorder %s17, %s19
      %p26 = scmp.eq.s32.totalorder %s14, 1
      %p27 = por %p25, %p26
      %p28 = scmp.ne.s32.totalorder %s19, %s20
      %p29 = scmp.eq.s32.totalorder %s14, 0
      %p30 = por %p28, %p29
      %p31 = scmp.ne.s32.totalorder %s19, %s20
      %p32 = scmp.eq.s32.totalorder %s15, 1
      %p33 = por %p31, %p32
      %p35 = scmp.ne.s32.totalorder %s20, %s34
      %p36 = scmp.eq.s32.totalorder %s15, 0
      %p37 = por %p35, %p36
      %s39 = sadd.s32 %s38, 1
      %p42 = scmp.eq.s32.totalorder %s9, 1
      %p43 = scmp.ne.s32.totalorder %s38, %s40
      %p44 = scmp.eq.s32.totalorder %s9, 0
      %p45 = por %p43, %p44
      %p46 = scmp.ne.s32.totalorder %s38, %s40
      %p47 = scmp.eq.s32.totalorder %s14, 1
      %p48 = por %p46, %p47
      %p49 = scmp.ne.s32.totalorder %s40, %s41
      %p50 = scmp.eq.s32.totalorder %s14, 0
      %p51 = por %p49, %p50
      %p52 = scmp.ne.s32.totalorder %s40, %s41
      %p53 = scmp.eq.s32.totalorder %s15, 1
      %p54 = por %p52, %p53
      %p56 = scmp.ne.s32.totalorder %s41, %s55
      %p57 = scmp.eq.s32.totalorder %s15, 0
      %p58 = por %p56, %p57
      %p59 = scmp.le.s32.totalorder 1, %s9
      %p60 = scmp.lt.s32.totalorder %s9, 3
      %p61 = pnand %p59, %p60
      %p62 = pneg %p61
      // Predicated region
      $region9: #{tpu_custom_call.1} parent=5 // pred_check
        _
      $region10: #{tpu_custom_call.1} parent=5 // pred_check_branch
        %64 = sbr.rel (%p61) target = $region12
      $region11: #{tpu_custom_call.1} parent=5 // pred_region
        %s65 = ssub.s32 %s9, 1
        // Predicated region
        $region13: #{tpu_custom_call.1} parent=11 // pred_check
          %p66 = pneg %p30
        $region14: #{tpu_custom_call.1} parent=11 // pred_check_branch
          %68 = sbr.rel (%p66) target = $region16
        $region15: #{tpu_custom_call.1} parent=11 // pred_region
          %s70 = ssub.s32 128, 128
          %71 = vsyncadd [#allocation3], %s70
          %s73 = sshll.u32 [#allocation2], 4
          %s74 = int_to_ptr.vmem [resolvable:$true] %s73
          %76 = dma.hbm_to_vmem [thread:$0]  %s0, 128, %s74, [#allocation3]
        $region16: #{tpu_custom_call.1} parent=11 // pred_fallthru
          _
      $region12: #{tpu_custom_call.1} parent=5 // pred_fallthru
        _
      %p77 = scmp.lt.s32.totalorder %s9, 2
      // Predicated region
      $region17: #{tpu_custom_call.1} parent=5 // pred_check
        %p78 = pneg %p77
      $region18: #{tpu_custom_call.1} parent=5 // pred_check_branch
        %80 = sbr.rel (%p78) target = $region20
      $region19: #{tpu_custom_call.1} parent=5 // pred_region
        _
      $region20: #{tpu_custom_call.1} parent=5 // pred_fallthru
        _
      %p81 = scmp.le.s32.totalorder 1, %s9
      %p82 = scmp.lt.s32.totalorder %s9, 3
      %p83 = pnand %p81, %p82
      %p84 = pneg %p83
      // Predicated region
      $region21: #{tpu_custom_call.1} parent=5 // pred_check
        _
      $region22: #{tpu_custom_call.1} parent=5 // pred_check_branch
        %86 = sbr.rel (%p83) target = $region24
      $region23: #{tpu_custom_call.1} parent=5 // pred_region
        %s87 = ssub.s32 %s9, 1
        // Predicated region
        $region25: #{tpu_custom_call.1} parent=23 // pred_check
          %p88 = pneg %p30
        $region26: #{tpu_custom_call.1} parent=23 // pred_check_branch
          %90 = sbr.rel (%p88) target = $region28
        $region27: #{tpu_custom_call.1} parent=23 // pred_region
          %91 = dma.done [#allocation3], 128
        $region28: #{tpu_custom_call.1} parent=23 // pred_fallthru
          _
        %p92 = pneg %p30
        %p93 = pneg %p27
        %p94 = pneg %p51
        %p95 = pneg %p48
        %v96 = vld [vmem:[#allocation2] sm:$0xff]
        %v97 = vmul.f32 %v96, 2.0
        %98 = vst [vmem:[#allocation5] sm:$0xff] %v97
        // Predicated region
        $region29: #{tpu_custom_call.1} parent=23 // pred_check
          %p99 = pneg %p48
        $region30: #{tpu_custom_call.1} parent=23 // pred_check_branch
          %101 = sbr.rel (%p99) target = $region32
        $region31: #{tpu_custom_call.1} parent=23 // pred_region
          %s103 = ssub.s32 128, 128
          %104 = vsyncadd [#allocation4], %s103
          %s106 = sshll.u32 [#allocation5], 4
          %s107 = int_to_ptr.vmem [resolvable:$true] %s106
          %109 = dma.vmem_to_hbm [thread:$0]  %s107, 128, %s1, [#allocation4]
        $region32: #{tpu_custom_call.1} parent=23 // pred_fallthru
          _
        // Predicated region
        $region33: #{tpu_custom_call.1} parent=23 // pred_check
          %p110 = pneg %p48
        $region34: #{tpu_custom_call.1} parent=23 // pred_check_branch
          %112 = sbr.rel (%p110) target = $region36
        $region35: #{tpu_custom_call.1} parent=23 // pred_region
          %113 = dma.done [#allocation4], 128
        $region36: #{tpu_custom_call.1} parent=23 // pred_fallthru
          _
      $region24: #{tpu_custom_call.1} parent=5 // pred_fallthru
        _
      %p114 = scmp.le.s32.totalorder 2, %s9
      // Predicated region
      $region37: #{tpu_custom_call.1} parent=5 // pred_check
        %p115 = pneg %p114
      $region38: #{tpu_custom_call.1} parent=5 // pred_check_branch
        %117 = sbr.rel (%p115) target = $region40
      $region39: #{tpu_custom_call.1} parent=5 // pred_region
        %s118 = ssub.s32 %s9, 2
      $region40: #{tpu_custom_call.1} parent=5 // pred_fallthru
        _
    $region6: #{tpu_custom_call.1} parent=1 // loop_footer
      %s13 = sadd.s32 1, %s9
    $region7: #{tpu_custom_call.1} parent=1 // loop_footer_branch
      %8 = sbr.rel target = $region3
    $region8: #{tpu_custom_call.1} parent=1 // loop_exit
      _
    %119 = vsyncpa [#allocation3], 1
    %s120 = scalar_lea.sflag [#allocation3], 1
    %121 = vsyncpa %s120, 1
    %122 = vsyncpa [#allocation4], 1
    %s123 = scalar_lea.sflag [#allocation4], 1
    %124 = vsyncpa %s123, 1

// kernel: forward.11
$region0: #{forward.11}
  #allocation0 [shape = 'u32[]', space=smem, size = 0x4, offset = 0x4, fixed_abs, tag = 'smem constant byte address 0x4 - core index']
  #allocation1 [shape = 'u32[144,128]{1,0:T(1,128)}', space=vmem, size = 0x12000, scoped, tag = 'internal scratch']
  %s0 = inlined_call_operand.vmem [shape: f32[32,64], index: 0, kind: input, shape index: {}]
  %s1 = inlined_call_operand.vmem [shape: f32[1,64], index: 1, kind: input, shape index: {}]
  %s2 = inlined_call_operand.vmem [shape: f32[1,64], index: 2, kind: input, shape index: {}]
  %s3 = inlined_call_operand.vmem [shape: bf16[64,32], index: 3, kind: input, shape index: {}]
  %s4 = inlined_call_operand.vmem [shape: f32[1,32], index: 4, kind: input, shape index: {}]
  %s5 = inlined_call_operand.vmem [shape: f32[1,32], index: 5, kind: input, shape index: {}]
  %s6 = inlined_call_operand.vmem [shape: f32[1,32], index: 6, kind: input, shape index: {}]
  %s7 = inlined_call_operand.vmem [shape: f32[32,32], index: 7, kind: output, shape index: {}]
  %s8 = sld [smem:[#allocation0]]
  $region38: #{forward.11} parent=0
    _
  %s10 = ssub.s32 1, %s8
  %s11 = scalar_select 0, %s10, %s8
  // Predicated region
  $region2: #{forward.11} parent=0 // pred_check
    _
  $region3: #{forward.11} parent=0 // pred_check_branch
    %13 = sbr.rel (0) target = $region5
  $region4: #{forward.11} parent=0 // pred_region
    _
  $region5: #{forward.11} parent=0 // pred_fallthru
    _
  // Predicated region
  $region6: #{forward.11} parent=0 // pred_check
    _
  $region7: #{forward.11} parent=0 // pred_check_branch
    %15 = sbr.rel (0) target = $region9
  $region8: #{forward.11} parent=0 // pred_region
    _
  $region9: #{forward.11} parent=0 // pred_fallthru
    _
  // Predicated region
  $region10: #{forward.11} parent=0 // pred_check
    _
  $region11: #{forward.11} parent=0 // pred_check_branch
    %17 = sbr.rel (0) target = $region13
  $region12: #{forward.11} parent=0 // pred_region
    _
  $region13: #{forward.11} parent=0 // pred_fallthru
    _
  // Predicated region
  $region14: #{forward.11} parent=0 // pred_check
    _
  $region15: #{forward.11} parent=0 // pred_check_branch
    %19 = sbr.rel (0) target = $region17
  $region16: #{forward.11} parent=0 // pred_region
    _
  $region17: #{forward.11} parent=0 // pred_fallthru
    _
  // Predicated region
  $region18: #{forward.11} parent=0 // pred_check
    _
  $region19: #{forward.11} parent=0 // pred_check_branch
    %21 = sbr.rel (0) target = $region21
  $region20: #{forward.11} parent=0 // pred_region
    _
  $region21: #{forward.11} parent=0 // pred_fallthru
    _
  // Predicated region
  $region22: #{forward.11} parent=0 // pred_check
    _
  $region23: #{forward.11} parent=0 // pred_check_branch
    %23 = sbr.rel (0) target = $region25
  $region24: #{forward.11} parent=0 // pred_region
    _
  $region25: #{forward.11} parent=0 // pred_fallthru
    _
  // Predicated region
  $region26: #{forward.11} parent=0 // pred_check
    _
  $region27: #{forward.11} parent=0 // pred_check_branch
    %25 = sbr.rel (0) target = $region29
  $region28: #{forward.11} parent=0 // pred_region
    _
  $region29: #{forward.11} parent=0 // pred_fallthru
    _
  %v27 = vld [vmem:[%s0] sm:$0xff]
  %v28 = vld [vmem:[%s0 + $0x8] sm:$0xff]
  %v29 = vld [vmem:[%s0 + $0x10] sm:$0xff]
  %v30 = vld [vmem:[%s0 + $0x18] sm:$0xff]
  %vm31 = vcmask 523264
  %v32 = vsel %vm31, %v27, 0.0
  %33 = vadd.xlane.f32.xlu0 %v32
  %v34 = vpop.xlane.xlu0 %33
  %v35 = vsel %vm31, %v28, 0.0
  %36 = vadd.xlane.f32.xlu0 %v35
  %v37 = vpop.xlane.xlu0 %36
  %v38 = vsel %vm31, %v29, 0.0
  %39 = vadd.xlane.f32.xlu0 %v38
  %v40 = vpop.xlane.xlu0 %39
  %v41 = vsel %vm31, %v30, 0.0
  %42 = vadd.xlane.f32.xlu0 %v41
  %v43 = vpop.xlane.xlu0 %42
  %v44 = vrcp.pop 64.0
  %v45 = vmul.f32 %v34, %v44
  %v46 = vmul.f32 %v37, %v44
  %v47 = vmul.f32 %v40, %v44
  %v48 = vmul.f32 %v43, %v44
  %v49 = vsub.f32 %v27, %v45
  %v50 = vsub.f32 %v28, %v46
  %v51 = vsub.f32 %v29, %v47
  %v52 = vsub.f32 %v30, %v48
  %v53 = vmul.f32 %v49, %v49
  %v54 = vmul.f32 %v50, %v50
  %v55 = vmul.f32 %v51, %v51
  %v56 = vmul.f32 %v52, %v52
  %v57 = vsel %vm31, %v53, 0.0
  %58 = vadd.xlane.f32.xlu0 %v57
  %v59 = vpop.xlane.xlu0 %58
  %v60 = vsel %vm31, %v54, 0.0
  %61 = vadd.xlane.f32.xlu0 %v60
  %v62 = vpop.xlane.xlu0 %61
  %v63 = vsel %vm31, %v55, 0.0
  %64 = vadd.xlane.f32.xlu0 %v63
  %v65 = vpop.xlane.xlu0 %64
  %v66 = vsel %vm31, %v56, 0.0
  %67 = vadd.xlane.f32.xlu0 %v66
  %v68 = vpop.xlane.xlu0 %67
  %v69 = vmul.f32 %v59, %v44
  %v70 = vmul.f32 %v62, %v44
  %v71 = vmul.f32 %v65, %v44
  %v72 = vmul.f32 %v68, %v44
  %v73 = vadd.f32 %v69, 1e-05
  %v74 = vadd.f32 %v70, 1e-05
  %v75 = vadd.f32 %v71, 1e-05
  %v76 = vadd.f32 %v72, 1e-05
  %v77 = vrsqrt.pop %v73
  %v78 = vrsqrt.pop %v74
  %v79 = vrsqrt.pop %v75
  %v80 = vrsqrt.pop %v76
  %v81 = vmul.f32 %v49, %v77
  %v82 = vmul.f32 %v50, %v78
  %v83 = vmul.f32 %v51, %v79
  %v84 = vmul.f32 %v52, %v80
  %v85 = vld [vmem:[%s1] sm:$0x1]
  %v87 = vlaneseq
  %v88 = vshrl.u32 %v87, 7
  %v89 = vsub.s32 0, %v88
  %v90 = vrot.slane %v85, %v89
  %v92 = vmul.f32 %v81, %v90
  %v93 = vmul.f32 %v82, %v90
  %v94 = vmul.f32 %v83, %v90
  %v95 = vmul.f32 %v84, %v90
  %v96 = vld [vmem:[%s2] sm:$0x1]
  %v98 = vlaneseq
  %v99 = vshrl.u32 %v98, 7
  %v100 = vsub.s32 0, %v99
  %v101 = vrot.slane %v96, %v100
  %v103 = vadd.f32 %v92, %v101
  %v104 = vadd.f32 %v93, %v101
  %v105 = vadd.f32 %v94, %v101
  %v106 = vadd.f32 %v95, %v101
  %v107 = vpack.c.bf16 %v104, %v103
  %v108 = vpack.c.bf16 %v106, %v105
  %v109 = vld [vmem:[%s3] sm:$0xf]
  %v110 = vld [vmem:[%s3 + $0x4] sm:$0xf]
  %v111 = vld [vmem:[%s3 + $0x8] sm:$0xf]
  %v112 = vld [vmem:[%s3 + $0xc] sm:$0xf]
  %v113 = vld [vmem:[%s3 + $0x10] sm:$0xf]
  %v114 = vld [vmem:[%s3 + $0x14] sm:$0xf]
  %v115 = vld [vmem:[%s3 + $0x18] sm:$0xf]
  %v116 = vld [vmem:[%s3 + $0x1c] sm:$0xf]
  %v117 = vld [vmem:[%s4] sm:$0x1]
  %v119 = vlaneseq
  %v120 = vshrl.u32 %v119, 7
  %v121 = vsub.s32 0, %v120
  %v122 = vrot.slane %v117, %v121
  %v132 = vunpack.c.l.b16 %v109
  %v133 = vunpack.c.l.b16 %v110
  %v134 = vunpack.c.l.b16 %v111
  %v135 = vunpack.c.l.b16 %v112
  %v136 = vunpack.c.l.b16 %v113
  %v137 = vunpack.c.l.b16 %v114
  %v138 = vunpack.c.l.b16 %v115
  %v139 = vunpack.c.l.b16 %v116
  %v140 = vpack.c.b16 %v133, %v132
  %v141 = vpack.c.b16 %v135, %v134
  %v142 = vpack.c.b16 %v137, %v136
  %v143 = vpack.c.b16 %v139, %v138
  %v149 = vsel %vm31, %v107, 0
  %v152 = vsel %vm31, %v108, 0
  %154 = vmatprep.subr.bf16.mxu0 0
  %155 = vmatpush1.bf16.msra.mxu0 %v140
  %156 = vmatprep.subr.bf16.mxu0 0
  %157 = vmatpush1.bf16.msra.mxu0 %v141
  %158 = vmatprep.subr.bf16.mxu0 0
  %159 = vmatpush1.bf16.msra.mxu0 %v142
  %160 = vmatprep.subr.bf16.mxu0 0
  %161 = vmatpush1.bf16.msra.mxu0 %v143
  %162 = vmatprep.subr.bf16.mxu0 0
  %163 = vmatpush1.bf16.msra.mxu0 0
  %164 = vmatprep.subr.bf16.mxu0 0
  %165 = vmatpush1.bf16.msra.mxu0 0
  %166 = vmatprep.subr.bf16.mxu0 0
  %167 = vmatpush1.bf16.msra.mxu0 0
  %168 = vmatprep.subr.bf16.mxu0 0
  %169 = vmatpush1.bf16.msra.mxu0 0
  %170 = vmatprep.subr.bf16.mxu0 0
  %171 = vmatpush1.bf16.msra.mxu0 0
  %172 = vmatprep.subr.bf16.mxu0 0
  %173 = vmatpush1.bf16.msra.mxu0 0
  %174 = vmatprep.subr.bf16.mxu0 0
  %175 = vmatpush1.bf16.msra.mxu0 0
  %176 = vmatprep.subr.bf16.mxu0 0
  %177 = vmatpush1.bf16.msra.mxu0 0
  %178 = vmatprep.subr.bf16.mxu0 0
  %179 = vmatpush1.bf16.msra.mxu0 0
  %180 = vmatprep.subr.bf16.mxu0 0
  %181 = vmatpush1.bf16.msra.mxu0 0
  %182 = vmatprep.subr.bf16.mxu0 0
  %183 = vmatpush1.bf16.msra.mxu0 0
  %184 = vmatprep.subr.bf16.mxu0 0
  %185 = vmatpush1.bf16.msra.mxu0 0
  %186 = vmatprep.mubr.bf16.mxu0 0
  %187 = vmatmul.mubr.bf16.gmra.mrb[0].mxu0 %v149
  %v188 = vpop.f32.mrb[0].mxu0
  %v189 = vadd.f32 %v122, %v188
  %v190 = vpop.f32.mrb[0].mxu0
  %v191 = vpop.f32.mrb[0].mxu0
  %v192 = vadd.f32 %v122, %v191
  %v193 = vpop.f32.mrb[0].mxu0
  %194 = vmatprep.mubr.bf16.mxu0 0
  %195 = vmatmul.mubr.bf16.gmra.mrb[0].mxu0 %v152
  %v196 = vpop.f32.mrb[0].mxu0
  %v197 = vadd.f32 %v122, %v196
  %v198 = vpop.f32.mrb[0].mxu0
  %v199 = vpop.f32.mrb[0].mxu0
  %v200 = vadd.f32 %v122, %v199
  %v201 = vpop.f32.mrb[0].mxu0
  %202 = vdwg.mxu0
  %vm203 = vcmask 261120
  %v204 = vsel %vm203, %v189, 0.0
  %205 = vadd.xlane.f32.xlu0 %v204
  %v206 = vpop.xlane.xlu0 %205
  %v207 = vsel %vm203, %v192, 0.0
  %208 = vadd.xlane.f32.xlu0 %v207
  %v209 = vpop.xlane.xlu0 %208
  %v210 = vsel %vm203, %v197, 0.0
  %211 = vadd.xlane.f32.xlu0 %v210
  %v212 = vpop.xlane.xlu0 %211
  %v213 = vsel %vm203, %v200, 0.0
  %214 = vadd.xlane.f32.xlu0 %v213
  %v215 = vpop.xlane.xlu0 %214
  %v216 = vrcp.pop 32.0
  %v217 = vmul.f32 %v206, %v216
  %v218 = vmul.f32 %v209, %v216
  %v219 = vmul.f32 %v212, %v216
  %v220 = vmul.f32 %v215, %v216
  %v221 = vsub.f32 %v189, %v217
  %v222 = vsub.f32 %v192, %v218
  %v223 = vsub.f32 %v197, %v219
  %v224 = vsub.f32 %v200, %v220
  %v225 = vmul.f32 %v221, %v221
  %v226 = vmul.f32 %v222, %v222
  %v227 = vmul.f32 %v223, %v223
  %v228 = vmul.f32 %v224, %v224
  %v229 = vsel %vm203, %v225, 0.0
  %230 = vadd.xlane.f32.xlu0 %v229
  %v231 = vpop.xlane.xlu0 %230
  %v232 = vsel %vm203, %v226, 0.0
  %233 = vadd.xlane.f32.xlu0 %v232
  %v234 = vpop.xlane.xlu0 %233
  %v235 = vsel %vm203, %v227, 0.0
  %236 = vadd.xlane.f32.xlu0 %v235
  %v237 = vpop.xlane.xlu0 %236
  %v238 = vsel %vm203, %v228, 0.0
  %239 = vadd.xlane.f32.xlu0 %v238
  %v240 = vpop.xlane.xlu0 %239
  %v241 = vmul.f32 %v231, %v216
  %v242 = vmul.f32 %v234, %v216
  %v243 = vmul.f32 %v237, %v216
  %v244 = vmul.f32 %v240, %v216
  %v245 = vadd.f32 %v241, 1e-05
  %v246 = vadd.f32 %v242, 1e-05
  %v247 = vadd.f32 %v243, 1e-05
  %v248 = vadd.f32 %v244, 1e-05
  %v249 = vrsqrt.pop %v245
  %v250 = vrsqrt.pop %v246
  %v251 = vrsqrt.pop %v247
  %v252 = vrsqrt.pop %v248
  %v253 = vmul.f32 %v221, %v249
  %v254 = vmul.f32 %v222, %v250
  %v255 = vmul.f32 %v223, %v251
  %v256 = vmul.f32 %v224, %v252
  %v257 = vld [vmem:[%s5] sm:$0x1]
  %v259 = vlaneseq
  %v260 = vshrl.u32 %v259, 7
  %v261 = vsub.s32 0, %v260
  %v262 = vrot.slane %v257, %v261
  %v264 = vmul.f32 %v253, %v262
  %v265 = vmul.f32 %v254, %v262
  %v266 = vmul.f32 %v255, %v262
  %v267 = vmul.f32 %v256, %v262
  %v268 = vld [vmem:[%s6] sm:$0x1]
  %v270 = vlaneseq
  %v271 = vshrl.u32 %v270, 7
  %v272 = vsub.s32 0, %v271
  %v273 = vrot.slane %v268, %v272
  %v275 = vadd.f32 %v264, %v273
  %v276 = vadd.f32 %v265, %v273
  %v277 = vadd.f32 %v266, %v273
  %v278 = vadd.f32 %v267, %v273
  %279 = vst.msk [vmem:[%s7] sm:$0xff] %vm203, %v275
  %280 = vst.msk [vmem:[%s7 + $0x8] sm:$0xff] %vm203, %v276
  %281 = vst.msk [vmem:[%s7 + $0x10] sm:$0xff] %vm203, %v277
  %282 = vst.msk [vmem:[%s7 + $0x18] sm:$0xff] %vm203, %v278
  // Predicated region
  $region30: #{forward.11} parent=0 // pred_check
    _
  $region31: #{forward.11} parent=0 // pred_check_branch
    %284 = sbr.rel (0) target = $region33
  $region32: #{forward.11} parent=0 // pred_region
    _
  $region33: #{forward.11} parent=0 // pred_fallthru
    _
  // Predicated region
  $region34: #{forward.11} parent=0 // pred_check
    _
  $region35: #{forward.11} parent=0 // pred_check_branch
    %286 = sbr.rel (0) target = $region37
  $region36: #{forward.11} parent=0 // pred_region
    _
  $region37: #{forward.11} parent=0 // pred_fallthru
    _

// kernel: forward.12
$region0: #{forward.12}
  #allocation0 [shape = 'u32[]', space=smem, size = 0x4, offset = 0x4, fixed_abs, tag = 'smem constant byte address 0x4 - core index']
  #allocation1 [shape = 'u32[144,128]{1,0:T(1,128)}', space=vmem, size = 0x12000, scoped, tag = 'internal scratch']
  %s0 = inlined_call_operand.vmem [shape: bf16[34,32], index: 0, kind: input, shape index: {}]
  %s1 = inlined_call_operand.vmem [shape: f32[1,32], index: 1, kind: input, shape index: {}]
  %s2 = inlined_call_operand.vmem [shape: f32[1,32], index: 2, kind: input, shape index: {}]
  %s3 = inlined_call_operand.vmem [shape: bf16[32,96], index: 3, kind: input, shape index: {}]
  %s4 = inlined_call_operand.vmem [shape: bf16[34,96], index: 4, kind: output, shape index: {}]
  %s5 = sld [smem:[#allocation0]]
  $region26: #{forward.12} parent=0
    _
  %s7 = ssub.s32 1, %s5
  %s8 = scalar_select 0, %s7, %s5
  // Predicated region
  $region2: #{forward.12} parent=0 // pred_check
    _
  $region3: #{forward.12} parent=0 // pred_check_branch
    %10 = sbr.rel (0) target = $region5
  $region4: #{forward.12} parent=0 // pred_region
    _
  $region5: #{forward.12} parent=0 // pred_fallthru
    _
  // Predicated region
  $region6: #{forward.12} parent=0 // pred_check
    _
  $region7: #{forward.12} parent=0 // pred_check_branch
    %12 = sbr.rel (0) target = $region9
  $region8: #{forward.12} parent=0 // pred_region
    _
  $region9: #{forward.12} parent=0 // pred_fallthru
    _
  // Predicated region
  $region10: #{forward.12} parent=0 // pred_check
    _
  $region11: #{forward.12} parent=0 // pred_check_branch
    %14 = sbr.rel (0) target = $region13
  $region12: #{forward.12} parent=0 // pred_region
    _
  $region13: #{forward.12} parent=0 // pred_fallthru
    _
  // Predicated region
  $region14: #{forward.12} parent=0 // pred_check
    _
  $region15: #{forward.12} parent=0 // pred_check_branch
    %16 = sbr.rel (0) target = $region17
  $region16: #{forward.12} parent=0 // pred_region
    _
  $region17: #{forward.12} parent=0 // pred_fallthru
    _
  %v18 = vld [vmem:[%s0] sm:$0xf]
  %v19 = vld [vmem:[%s0 + $0x4] sm:$0xf]
  %v20 = vld [vmem:[%s0 + $0x8] sm:$0xf]
  %v21 = vld [vmem:[%s0 + $0xc] sm:$0xf]
  %v22 = vld [vmem:[%s0 + $0x10] sm:$0x1]
  %v23 = vunpack.c.l.bf16 %v18
  %v24 = vunpack.c.l.bf16 %v19
  %v25 = vunpack.c.l.bf16 %v20
  %v26 = vunpack.c.l.bf16 %v21
  %v27 = vunpack.c.l.bf16 %v22
  %vm28 = vcmask 261120
  %v29 = vsel %vm28, %v23, 0.0
  %30 = vadd.xlane.f32.xlu0 %v29
  %v31 = vpop.xlane.xlu0 %30
  %v32 = vsel %vm28, %v24, 0.0
  %33 = vadd.xlane.f32.xlu0 %v32
  %v34 = vpop.xlane.xlu0 %33
  %v35 = vsel %vm28, %v25, 0.0
  %36 = vadd.xlane.f32.xlu0 %v35
  %v37 = vpop.xlane.xlu0 %36
  %v38 = vsel %vm28, %v26, 0.0
  %39 = vadd.xlane.f32.xlu0 %v38
  %v40 = vpop.xlane.xlu0 %39
  %vm41 = vcmask 254976
  %v42 = vsel %vm41, %v27, 0.0
  %43 = vadd.xlane.f32.xlu0 %v42
  %v44 = vpop.xlane.xlu0 %43
  %v45 = vrcp.pop 32.0
  %v46 = vmul.f32 %v31, %v45
  %v47 = vmul.f32 %v34, %v45
  %v48 = vmul.f32 %v37, %v45
  %v49 = vmul.f32 %v40, %v45
  %v50 = vmul.f32 %v44, %v45
  %v51 = vsub.f32 %v23, %v46
  %v52 = vsub.f32 %v24, %v47
  %v53 = vsub.f32 %v25, %v48
  %v54 = vsub.f32 %v26, %v49
  %v55 = vsub.f32 %v27, %v50
  %v56 = vmul.f32 %v51, %v51
  %v57 = vmul.f32 %v52, %v52
  %v58 = vmul.f32 %v53, %v53
  %v59 = vmul.f32 %v54, %v54
  %v60 = vmul.f32 %v55, %v55
  %v61 = vsel %vm28, %v56, 0.0
  %62 = vadd.xlane.f32.xlu0 %v61
  %v63 = vpop.xlane.xlu0 %62
  %v64 = vsel %vm28, %v57, 0.0
  %65 = vadd.xlane.f32.xlu0 %v64
  %v66 = vpop.xlane.xlu0 %65
  %v67 = vsel %vm28, %v58, 0.0
  %68 = vadd.xlane.f32.xlu0 %v67
  %v69 = vpop.xlane.xlu0 %68
  %v70 = vsel %vm28, %v59, 0.0
  %71 = vadd.xlane.f32.xlu0 %v70
  %v72 = vpop.xlane.xlu0 %71
  %v73 = vsel %vm41, %v60, 0.0
  %74 = vadd.xlane.f32.xlu0 %v73
  %v75 = vpop.xlane.xlu0 %74
  %v76 = vmul.f32 %v63, %v45
  %v77 = vmul.f32 %v66, %v45
  %v78 = vmul.f32 %v69, %v45
  %v79 = vmul.f32 %v72, %v45
  %v80 = vmul.f32 %v75, %v45
  %v81 = vadd.f32 %v76, 1e-05
  %v82 = vadd.f32 %v77, 1e-05
  %v83 = vadd.f32 %v78, 1e-05
  %v84 = vadd.f32 %v79, 1e-05
  %v85 = vadd.f32 %v80, 1e-05
  %v86 = vrsqrt.pop %v81
  %v87 = vrsqrt.pop %v82
  %v88 = vrsqrt.pop %v83
  %v89 = vrsqrt.pop %v84
  %v90 = vrsqrt.pop %v85
  %v91 = vmul.f32 %v51, %v86
  %v92 = vmul.f32 %v52, %v87
  %v93 = vmul.f32 %v53, %v88
  %v94 = vmul.f32 %v54, %v89
  %v95 = vmul.f32 %v55, %v90
  %v96 = vld [vmem:[%s1] sm:$0x1]
  %v98 = vlaneseq
  %v99 = vshrl.u32 %v98, 7
  %v100 = vsub.s32 0, %v99
  %v101 = vrot.slane %v96, %v100
  %v103 = vmul.f32 %v91, %v101
  %v104 = vmul.f32 %v92, %v101
  %v105 = vmul.f32 %v93, %v101
  %v106 = vmul.f32 %v94, %v101
  %v107 = vmul.f32 %v95, %v101
  %v108 = vld [vmem:[%s2] sm:$0x1]
  %v110 = vlaneseq
  %v111 = vshrl.u32 %v110, 7
  %v112 = vsub.s32 0, %v111
  %v113 = vrot.slane %v108, %v112
  %v115 = vadd.f32 %v103, %v113
  %v116 = vadd.f32 %v104, %v113
  %v117 = vadd.f32 %v105, %v113
  %v118 = vadd.f32 %v106, %v113
  %v119 = vadd.f32 %v107, %v113
  %v120 = vpack.c.bf16 %v116, %v115
  %v121 = vpack.c.bf16 %v118, %v117
  %v122 = vpack.c.bf16 %v119, %v119
  %v123 = vld [vmem:[%s3] sm:$0xf]
  %v124 = vld [vmem:[%s3 + $0x4] sm:$0xf]
  %v125 = vld [vmem:[%s3 + $0x8] sm:$0xf]
  %v126 = vld [vmem:[%s3 + $0xc] sm:$0xf]
  %v131 = vunpack.c.l.b16 %v123
  %v132 = vunpack.c.l.b16 %v124
  %v133 = vunpack.c.l.b16 %v125
  %v134 = vunpack.c.l.b16 %v126
  %v135 = vpack.c.b16 %v132, %v131
  %v136 = vpack.c.b16 %v134, %v133
  %v140 = vsel %vm28, %v120, 0
  %v143 = vsel %vm28, %v121, 0
  %v146 = vsel %vm28, %v122, 0
  %148 = vmatprep.subr.bf16.mxu0 0
  %149 = vmatpush1.bf16.msra.mxu0 %v135
  %150 = vmatprep.subr.bf16.mxu0 0
  %151 = vmatpush1.bf16.msra.mxu0 %v136
  %152 = vmatprep.subr.bf16.mxu0 0
  %153 = vmatpush1.bf16.msra.mxu0 0
  %154 = vmatprep.subr.bf16.mxu0 0
  %155 = vmatpush1.bf16.msra.mxu0 0
  %156 = vmatprep.subr.bf16.mxu0 0
  %157 = vmatpush1.bf16.msra.mxu0 0
  %158 = vmatprep.subr.bf16.mxu0 0
  %159 = vmatpush1.bf16.msra.mxu0 0
  %160 = vmatprep.subr.bf16.mxu0 0
  %161 = vmatpush1.bf16.msra.mxu0 0
  %162 = vmatprep.subr.bf16.mxu0 0
  %163 = vmatpush1.bf16.msra.mxu0 0
  %164 = vmatprep.subr.bf16.mxu0 0
  %165 = vmatpush1.bf16.msra.mxu0 0
  %166 = vmatprep.subr.bf16.mxu0 0
  %167 = vmatpush1.bf16.msra.mxu0 0
  %168 = vmatprep.subr.bf16.mxu0 0
  %169 = vmatpush1.bf16.msra.mxu0 0
  %170 = vmatprep.subr.bf16.mxu0 0
  %171 = vmatpush1.bf16.msra.mxu0 0
  %172 = vmatprep.subr.bf16.mxu0 0
  %173 = vmatpush1.bf16.msra.mxu0 0
  %174 = vmatprep.subr.bf16.mxu0 0
  %175 = vmatpush1.bf16.msra.mxu0 0
  %176 = vmatprep.subr.bf16.mxu0 0
  %177 = vmatpush1.bf16.msra.mxu0 0
  %178 = vmatprep.subr.bf16.mxu0 0
  %179 = vmatpush1.bf16.msra.mxu0 0
  %180 = vmatprep.mubr.bf16.mxu0 0
  %181 = vmatmul.mubr.bf16.gmra.mrb[0].mxu0 %v140
  %v182 = vpop.f32.mrb[0].mxu0
  %v183 = vadd.f32 0.0, %v182
  %v184 = vpop.f32.mrb[0].mxu0
  %v185 = vpop.f32.mrb[0].mxu0
  %v186 = vadd.f32 0.0, %v185
  %v187 = vpop.f32.mrb[0].mxu0
  %188 = vmatprep.mubr.bf16.mxu0 0
  %189 = vmatmul.mubr.bf16.gmra.mrb[0].mxu0 %v143
  %v190 = vpop.f32.mrb[0].mxu0
  %v191 = vadd.f32 0.0, %v190
  %v192 = vpop.f32.mrb[0].mxu0
  %v193 = vpop.f32.mrb[0].mxu0
  %v194 = vadd.f32 0.0, %v193
  %v195 = vpop.f32.mrb[0].mxu0
  %196 = vmatprep.mubr.bf16.mxu0 0
  %197 = vmatmul.mubr.bf16.gmra.mrb[0].mxu0 %v146
  %v198 = vpop.f32.mrb[0].mxu0
  %v199 = vadd.f32 0.0, %v198
  %v200 = vpop.f32.mrb[0].mxu0
  %v201 = vpop.f32.mrb[0].mxu0
  %v202 = vpop.f32.mrb[0].mxu0
  %203 = vdwg.mxu0
  %v204 = vpack.c.bf16 %v186, %v183
  %v205 = vpack.c.bf16 %v194, %v191
  %v206 = vpack.c.bf16 %v199, %v199
  %v210 = vunpack.c.l.b16 %v204
  %v211 = vunpack.c.h.b16 %v204
  %v212 = vunpack.c.l.b16 %v205
  %v213 = vunpack.c.h.b16 %v205
  %v214 = vunpack.c.l.b16 %v206
  %v215 = vpack.c.b16 %v210, %v210
  %v216 = vpack.c.b16 %v211, %v211
  %v217 = vpack.c.b16 %v212, %v212
  %v218 = vpack.c.b16 %v213, %v213
  %v219 = vpack.c.b16 %v214, %v214
  %vm225 = vcmask 781312
  %226 = vst.msk [vmem:[%s4] sm:$0xf] %vm225, %v215
  %227 = vst.msk [vmem:[%s4 + $0x4] sm:$0xf] %vm225, %v216
  %228 = vst.msk [vmem:[%s4 + $0x8] sm:$0xf] %vm225, %v217
  %229 = vst.msk [vmem:[%s4 + $0xc] sm:$0xf] %vm225, %v218
  %vm230 = vcmask 778240
  %231 = vst.msk [vmem:[%s4 + $0x10] sm:$0x1] %vm230, %v219
  // Predicated region
  $region18: #{forward.12} parent=0 // pred_check
    _
  $region19: #{forward.12} parent=0 // pred_check_branch
    %233 = sbr.rel (0) target = $region21
  $region20: #{forward.12} parent=0 // pred_region
    _
  $region21: #{forward.12} parent=0 // pred_fallthru
    _
  // Predicated region
  $region22: #{forward.12} parent=0 // pred_check
    _
  $region23: #{forward.12} parent=0 // pred_check_branch
    %235 = sbr.rel (0) target = $region25
  $region24: #{forward.12} parent=0 // pred_region
    _
  $region25: #{forward.12} parent=0 // pred_fallthru
    _

// kernel: forward.14
$region0: #{forward.14}
  #allocation0 [shape = 'u32[]', space=smem, size = 0x4, offset = 0x4, fixed_abs, tag = 'smem constant byte address 0x4 - core index']
  #allocation1 [shape = 'u32[144,128]{1,0:T(1,128)}', space=vmem, size = 0x12000, scoped, tag = 'internal scratch']
  %s0 = inlined_call_operand.vmem [shape: bf16[34,32], index: 0, kind: input, shape index: {}]
  %s1 = inlined_call_operand.vmem [shape: f32[1,32], index: 1, kind: input, shape index: {}]
  %s2 = inlined_call_operand.vmem [shape: f32[1,32], index: 2, kind: input, shape index: {}]
  %s3 = inlined_call_operand.vmem [shape: bf16[32,256], index: 3, kind: input, shape index: {}]
  %s4 = inlined_call_operand.vmem [shape: f32[1,256], index: 4, kind: input, shape index: {}]
  %s5 = inlined_call_operand.vmem [shape: bf16[34,256], index: 5, kind: output, shape index: {}]
  %s6 = sld [smem:[#allocation0]]
  $region30: #{forward.14} parent=0
    _
  %s8 = ssub.s32 1, %s6
  %s9 = scalar_select 0, %s8, %s6
  // Predicated region
  $region2: #{forward.14} parent=0 // pred_check
    _
  $region3: #{forward.14} parent=0 // pred_check_branch
    %11 = sbr.rel (0) target = $region5
  $region4: #{forward.14} parent=0 // pred_region
    _
  $region5: #{forward.14} parent=0 // pred_fallthru
    _
  // Predicated region
  $region6: #{forward.14} parent=0 // pred_check
    _
  $region7: #{forward.14} parent=0 // pred_check_branch
    %13 = sbr.rel (0) target = $region9
  $region8: #{forward.14} parent=0 // pred_region
    _
  $region9: #{forward.14} parent=0 // pred_fallthru
    _
  // Predicated region
  $region10: #{forward.14} parent=0 // pred_check
    _
  $region11: #{forward.14} parent=0 // pred_check_branch
    %15 = sbr.rel (0) target = $region13
  $region12: #{forward.14} parent=0 // pred_region
    _
  $region13: #{forward.14} parent=0 // pred_fallthru
    _
  // Predicated region
  $region14: #{forward.14} parent=0 // pred_check
    _
  $region15: #{forward.14} parent=0 // pred_check_branch
    %17 = sbr.rel (0) target = $region17
  $region16: #{forward.14} parent=0 // pred_region
    _
  $region17: #{forward.14} parent=0 // pred_fallthru
    _
  // Predicated region
  $region18: #{forward.14} parent=0 // pred_check
    _
  $region19: #{forward.14} parent=0 // pred_check_branch
    %19 = sbr.rel (0) target = $region21
  $region20: #{forward.14} parent=0 // pred_region
    _
  $region21: #{forward.14} parent=0 // pred_fallthru
    _
  %v21 = vld [vmem:[%s0] sm:$0xf]
  %v22 = vld [vmem:[%s0 + $0x4] sm:$0xf]
  %v23 = vld [vmem:[%s0 + $0x8] sm:$0xf]
  %v24 = vld [vmem:[%s0 + $0xc] sm:$0xf]
  %v25 = vld [vmem:[%s0 + $0x10] sm:$0x1]
  %v26 = vunpack.c.l.bf16 %v21
  %v27 = vunpack.c.l.bf16 %v22
  %v28 = vunpack.c.l.bf16 %v23
  %v29 = vunpack.c.l.bf16 %v24
  %v30 = vunpack.c.l.bf16 %v25
  %vm31 = vcmask 261120
  %v32 = vsel %vm31, %v26, 0.0
  %33 = vadd.xlane.f32.xlu0 %v32
  %v34 = vpop.xlane.xlu0 %33
  %v35 = vsel %vm31, %v27, 0.0
  %36 = vadd.xlane.f32.xlu0 %v35
  %v37 = vpop.xlane.xlu0 %36
  %v38 = vsel %vm31, %v28, 0.0
  %39 = vadd.xlane.f32.xlu0 %v38
  %v40 = vpop.xlane.xlu0 %39
  %v41 = vsel %vm31, %v29, 0.0
  %42 = vadd.xlane.f32.xlu0 %v41
  %v43 = vpop.xlane.xlu0 %42
  %vm44 = vcmask 254976
  %v45 = vsel %vm44, %v30, 0.0
  %46 = vadd.xlane.f32.xlu0 %v45
  %v47 = vpop.xlane.xlu0 %46
  %v48 = vrcp.pop 32.0
  %v49 = vmul.f32 %v34, %v48
  %v50 = vmul.f32 %v37, %v48
  %v51 = vmul.f32 %v40, %v48
  %v52 = vmul.f32 %v43, %v48
  %v53 = vmul.f32 %v47, %v48
  %v54 = vsub.f32 %v26, %v49
  %v55 = vsub.f32 %v27, %v50
  %v56 = vsub.f32 %v28, %v51
  %v57 = vsub.f32 %v29, %v52
  %v58 = vsub.f32 %v30, %v53
  %v59 = vmul.f32 %v54, %v54
  %v60 = vmul.f32 %v55, %v55
  %v61 = vmul.f32 %v56, %v56
  %v62 = vmul.f32 %v57, %v57
  %v63 = vmul.f32 %v58, %v58
  %v64 = vsel %vm31, %v59, 0.0
  %65 = vadd.xlane.f32.xlu0 %v64
  %v66 = vpop.xlane.xlu0 %65
  %v67 = vsel %vm31, %v60, 0.0
  %68 = vadd.xlane.f32.xlu0 %v67
  %v69 = vpop.xlane.xlu0 %68
  %v70 = vsel %vm31, %v61, 0.0
  %71 = vadd.xlane.f32.xlu0 %v70
  %v72 = vpop.xlane.xlu0 %71
  %v73 = vsel %vm31, %v62, 0.0
  %74 = vadd.xlane.f32.xlu0 %v73
  %v75 = vpop.xlane.xlu0 %74
  %v76 = vsel %vm44, %v63, 0.0
  %77 = vadd.xlane.f32.xlu0 %v76
  %v78 = vpop.xlane.xlu0 %77
  %v79 = vmul.f32 %v66, %v48
  %v80 = vmul.f32 %v69, %v48
  %v81 = vmul.f32 %v72, %v48
  %v82 = vmul.f32 %v75, %v48
  %v83 = vmul.f32 %v78, %v48
  %v84 = vadd.f32 %v79, 1e-05
  %v85 = vadd.f32 %v80, 1e-05
  %v86 = vadd.f32 %v81, 1e-05
  %v87 = vadd.f32 %v82, 1e-05
  %v88 = vadd.f32 %v83, 1e-05
  %v89 = vrsqrt.pop %v84
  %v90 = vrsqrt.pop %v85
  %v91 = vrsqrt.pop %v86
  %v92 = vrsqrt.pop %v87
  %v93 = vrsqrt.pop %v88
  %v94 = vmul.f32 %v54, %v89
  %v95 = vmul.f32 %v55, %v90
  %v96 = vmul.f32 %v56, %v91
  %v97 = vmul.f32 %v57, %v92
  %v98 = vmul.f32 %v58, %v93
  %v99 = vld [vmem:[%s1] sm:$0x1]
  %v101 = vlaneseq
  %v102 = vshrl.u32 %v101, 7
  %v103 = vsub.s32 0, %v102
  %v104 = vrot.slane %v99, %v103
  %v106 = vmul.f32 %v94, %v104
  %v107 = vmul.f32 %v95, %v104
  %v108 = vmul.f32 %v96, %v104
  %v109 = vmul.f32 %v97, %v104
  %v110 = vmul.f32 %v98, %v104
  %v111 = vld [vmem:[%s2] sm:$0x1]
  %v113 = vlaneseq
  %v114 = vshrl.u32 %v113, 7
  %v115 = vsub.s32 0, %v114
  %v116 = vrot.slane %v111, %v115
  %v118 = vadd.f32 %v106, %v116
  %v119 = vadd.f32 %v107, %v116
  %v120 = vadd.f32 %v108, %v116
  %v121 = vadd.f32 %v109, %v116
  %v122 = vadd.f32 %v110, %v116
  %v123 = vpack.c.bf16 %v119, %v118
  %v124 = vpack.c.bf16 %v121, %v120
  %v125 = vpack.c.bf16 %v122, %v122
  %v126 = vld [vmem:[%s3] sm:$0xff]
  %v127 = vld [vmem:[%s3 + $0x8] sm:$0xff]
  %v128 = vld [vmem:[%s3 + $0x10] sm:$0xff]
  %v129 = vld [vmem:[%s3 + $0x18] sm:$0xff]
  %v130 = vld [vmem:[%s4] sm:$0x3]
  %v132 = vlaneseq
  %v133 = vshrl.u32 %v132, 7
  %v134 = vsub.s32 0, %v133
  %v135 = vrot.slane %v130, %v134
  %v136 = vlaneseq
  %v137 = vshrl.u32 %v136, 7
  %v138 = vsub.s32 1, %v137
  %v139 = vrot.slane %v130, %v138
  %v146 = vunpack.c.l.b16 %v126
  %v147 = vunpack.c.h.b16 %v126
  %v148 = vunpack.c.l.b16 %v127
  %v149 = vunpack.c.h.b16 %v127
  %v150 = vunpack.c.l.b16 %v128
  %v151 = vunpack.c.h.b16 %v128
  %v152 = vunpack.c.l.b16 %v129
  %v153 = vunpack.c.h.b16 %v129
  %v154 = vpack.c.b16 %v148, %v146
  %v155 = vpack.c.b16 %v149, %v147
  %v156 = vpack.c.b16 %v152, %v150
  %v157 = vpack.c.b16 %v153, %v151
  %v163 = vsel %vm31, %v123, 0
  %v166 = vsel %vm31, %v124, 0
  %v169 = vsel %vm31, %v125, 0
  %171 = vmatprep.subr.bf16.mxu0 %v155
  %172 = vmatpush1.bf16.msra.mxu0 %v154
  %173 = vmatprep.subr.bf16.mxu0 %v157
  %174 = vmatpush1.bf16.msra.mxu0 %v156
  %175 = vmatprep.subr.bf16.mxu0 0
  %176 = vmatpush1.bf16.msra.mxu0 0
  %177 = vmatprep.subr.bf16.mxu0 0
  %178 = vmatpush1.bf16.msra.mxu0 0
  %179 = vmatprep.subr.bf16.mxu0 0
  %180 = vmatpush1.bf16.msra.mxu0 0
  %181 = vmatprep.subr.bf16.mxu0 0
  %182 = vmatpush1.bf16.msra.mxu0 0
  %183 = vmatprep.subr.bf16.mxu0 0
  %184 = vmatpush1.bf16.msra.mxu0 0
  %185 = vmatprep.subr.bf16.mxu0 0
  %186 = vmatpush1.bf16.msra.mxu0 0
  %187 = vmatprep.subr.bf16.mxu0 0
  %188 = vmatpush1.bf16.msra.mxu0 0
  %189 = vmatprep.subr.bf16.mxu0 0
  %190 = vmatpush1.bf16.msra.mxu0 0
  %191 = vmatprep.subr.bf16.mxu0 0
  %192 = vmatpush1.bf16.msra.mxu0 0
  %193 = vmatprep.subr.bf16.mxu0 0
  %194 = vmatpush1.bf16.msra.mxu0 0
  %195 = vmatprep.subr.bf16.mxu0 0
  %196 = vmatpush1.bf16.msra.mxu0 0
  %197 = vmatprep.subr.bf16.mxu0 0
  %198 = vmatpush1.bf16.msra.mxu0 0
  %199 = vmatprep.subr.bf16.mxu0 0
  %200 = vmatpush1.bf16.msra.mxu0 0
  %201 = vmatprep.subr.bf16.mxu0 0
  %202 = vmatpush1.bf16.msra.mxu0 0
  %203 = vmatprep.mubr.bf16.mxu0 0
  %204 = vmatmul.mubr.bf16.gmra.mrb[0].mxu0 %v163
  %v205 = vpop.f32.mrb[0].mxu0
  %v206 = vadd.f32 %v135, %v205
  %v207 = vpop.f32.mrb[0].mxu0
  %v208 = vadd.f32 %v139, %v207
  %v209 = vpop.f32.mrb[0].mxu0
  %v210 = vadd.f32 %v135, %v209
  %v211 = vpop.f32.mrb[0].mxu0
  %v212 = vadd.f32 %v139, %v211
  %213 = vmatprep.mubr.bf16.mxu0 0
  %214 = vmatmul.mubr.bf16.gmra.mrb[0].mxu0 %v166
  %v215 = vpop.f32.mrb[0].mxu0
  %v216 = vadd.f32 %v135, %v215
  %v217 = vpop.f32.mrb[0].mxu0
  %v218 = vadd.f32 %v139, %v217
  %v219 = vpop.f32.mrb[0].mxu0
  %v220 = vadd.f32 %v135, %v219
  %v221 = vpop.f32.mrb[0].mxu0
  %v222 = vadd.f32 %v139, %v221
  %223 = vmatprep.mubr.bf16.mxu0 0
  %224 = vmatmul.mubr.bf16.gmra.mrb[0].mxu0 %v169
  %v225 = vpop.f32.mrb[0].mxu0
  %v226 = vadd.f32 %v135, %v225
  %v227 = vpop.f32.mrb[0].mxu0
  %v228 = vadd.f32 %v139, %v227
  %v229 = vpop.f32.mrb[0].mxu0
  %v230 = vpop.f32.mrb[0].mxu0
  %231 = vdwg.mxu0
  %v232 = vmul.f32 %v206, 0.5
  %v233 = vmul.f32 %v208, 0.5
  %v234 = vmul.f32 %v210, 0.5
  %v235 = vmul.f32 %v212, 0.5
  %v236 = vmul.f32 %v216, 0.5
  %v237 = vmul.f32 %v218, 0.5
  %v238 = vmul.f32 %v220, 0.5
  %v239 = vmul.f32 %v222, 0.5
  %v240 = vmul.f32 %v226, 0.5
  %v241 = vmul.f32 %v228, 0.5
  %v242 = vmul.f32 %v206, 0.70710677
  %v243 = vmul.f32 %v208, 0.70710677
  %v244 = vmul.f32 %v210, 0.70710677
  %v245 = vmul.f32 %v212, 0.70710677
  %v246 = vmul.f32 %v216, 0.70710677
  %v247 = vmul.f32 %v218, 0.70710677
  %v248 = vmul.f32 %v220, 0.70710677
  %v249 = vmul.f32 %v222, 0.70710677
  %v250 = vmul.f32 %v226, 0.70710677
  %v251 = vmul.f32 %v228, 0.70710677
  %v252 = verf.f32.pop %v242
  %v253 = verf.f32.pop %v243
  %v254 = verf.f32.pop %v244
  %v255 = verf.f32.pop %v245
  %v256 = verf.f32.pop %v246
  %v257 = verf.f32.pop %v247
  %v258 = verf.f32.pop %v248
  %v259 = verf.f32.pop %v249
  %v260 = verf.f32.pop %v250
  %v261 = verf.f32.pop %v251
  %v262 = vadd.f32 %v252, 1.0
  %v263 = vadd.f32 %v253, 1.0
  %v264 = vadd.f32 %v254, 1.0
  %v265 = vadd.f32 %v255, 1.0
  %v266 = vadd.f32 %v256, 1.0
  %v267 = vadd.f32 %v257, 1.0
  %v268 = vadd.f32 %v258, 1.0
  %v269 = vadd.f32 %v259, 1.0
  %v270 = vadd.f32 %v260, 1.0
  %v271 = vadd.f32 %v261, 1.0
  %v272 = vmul.f32 %v232, %v262
  %v273 = vmul.f32 %v233, %v263
  %v274 = vmul.f32 %v234, %v264
  %v275 = vmul.f32 %v235, %v265
  %v276 = vmul.f32 %v236, %v266
  %v277 = vmul.f32 %v237, %v267
  %v278 = vmul.f32 %v238, %v268
  %v279 = vmul.f32 %v239, %v269
  %v280 = vmul.f32 %v240, %v270
  %v281 = vmul.f32 %v241, %v271
  %v282 = vpack.c.bf16 %v274, %v272
  %v283 = vpack.c.bf16 %v275, %v273
  %v284 = vpack.c.bf16 %v278, %v276
  %v285 = vpack.c.bf16 %v279, %v277
  %v286 = vpack.c.bf16 %v280, %v280
  %v287 = vpack.c.bf16 %v281, %v281
  %v294 = vunpack.c.l.b16 %v282
  %v295 = vunpack.c.l.b16 %v283
  %v296 = vunpack.c.h.b16 %v282
  %v297 = vunpack.c.h.b16 %v283
  %v298 = vunpack.c.l.b16 %v284
  %v299 = vunpack.c.l.b16 %v285
  %v300 = vunpack.c.h.b16 %v284
  %v301 = vunpack.c.h.b16 %v285
  %v302 = vunpack.c.l.b16 %v286
  %v303 = vunpack.c.l.b16 %v287
  %v304 = vpack.c.b16 %v295, %v294
  %v305 = vpack.c.b16 %v297, %v296
  %v306 = vpack.c.b16 %v299, %v298
  %v307 = vpack.c.b16 %v301, %v300
  %v308 = vpack.c.b16 %v303, %v302
  %314 = vst [vmem:[%s5] sm:$0xff] %v304
  %315 = vst [vmem:[%s5 + $0x8] sm:$0xff] %v305
  %316 = vst [vmem:[%s5 + $0x10] sm:$0xff] %v306
  %317 = vst [vmem:[%s5 + $0x18] sm:$0xff] %v307
  %318 = vst [vmem:[%s5 + $0x20] sm:$0x11] %v308
  // Predicated region
  $region22: #{forward.14} parent=0 // pred_check
    _
  $region23: #{forward.14} parent=0 // pred_check_branch
    %320 = sbr.rel (0) target = $region25
  $region24: #{forward.14} parent=0 // pred_region
    _
  $region25: #{forward.14} parent=0 // pred_fallthru
    _
  // Predicated region
  $region26: #{forward.14} parent=0 // pred_check
    _
  $region27: #{forward.14} parent=0 // pred_check_branch
    %322 = sbr.rel (0) target = $region29
  $region28: #{forward.14} parent=0 // pred_region
    _
  $region29: #{forward.14} parent=0 // pred_fallthru
    _

// kernel: forward.13
$region0: #{forward.13}
  #allocation0 [shape = 'u32[]', space=smem, size = 0x4, offset = 0x4, fixed_abs, tag = 'smem constant byte address 0x4 - core index']
  #allocation1 [shape = 'u32[144,128]{1,0:T(1,128)}', space=vmem, size = 0x12000, scoped, tag = 'internal scratch']
  %s0 = inlined_call_operand.vmem [shape: bf16[2,17,96], index: 0, kind: input, shape index: {}]
  %s1 = inlined_call_operand.vmem [shape: bf16[32,32], index: 1, kind: input, shape index: {}]
  %s2 = inlined_call_operand.vmem [shape: f32[1,32], index: 2, kind: input, shape index: {}]
  %s3 = inlined_call_operand.vmem [shape: bf16[2,17,32], index: 3, kind: input, shape index: {}]
  %s4 = inlined_call_operand.vmem [shape: bf16[2,17,32], index: 4, kind: output, shape index: {}]
  %s5 = sld [smem:[#allocation0]]
  $region49: #{forward.13} parent=0
    _
  %s7 = ssub.s32 1, %s5
  %s8 = scalar_select 0, %s7, %s5
  loop: start=0, step=1, limit=4
  $region2: #{forward.13} parent=0 // loop_pre_header
    _
  $region3: #{forward.13} parent=0 // loop_header
    %s10 = sphi 0, %s14
    %p11 = scmp.ge.s32.totalorder %s10, 4
    %s20 = sphi 0, %s22
    %s23 = sphi 0, %s20
    %s24 = sphi 0, %s23
    %s40 = sphi 0, %s24
    %s44 = sphi 0, %s44
    %s46 = sphi 0, %s44
    %s47 = sphi 0, %s46
    %s61 = sphi 0, %s47
    %s65 = sphi 0, %s65
    %s67 = sphi 0, %s65
    %s68 = sphi 0, %s67
    %s82 = sphi 0, %s68
    %s88 = sphi 0, %s90
    %s91 = sphi 0, %s88
    %s92 = sphi 0, %s91
    %s108 = sphi 0, %s92
    %s114 = sphi 0, %s116
    %s117 = sphi 0, %s114
    %s118 = sphi 0, %s117
    %s134 = sphi 0, %s118
  $region4: #{forward.13} parent=0 // loop_header_branch
    %13 = sbr.rel (%p11) target = $region8
  $region5: #{forward.13} parent=0 // loop_body
    %s15 = ssub.s32 %s10, 1
    %s16 = ssub.s32 %s10, 2
    %s17 = sadd.s32 %s10, 1
    %s18 = ssub.s32 %s10, %s17
    %p19 = scmp.eq.s32.totalorder %s18, 0
    %s21 = sadd.s32 %s20, 1
    %s22 = scalar_select %p19, %s20, %s21
    %p25 = pneg %p19
    %p26 = scmp.eq.s32.totalorder %s10, 1
    %p27 = por %p25, %p26
    %p28 = scmp.ne.s32.totalorder %s20, %s23
    %p29 = scmp.eq.s32.totalorder %s10, 0
    %p30 = por %p28, %p29
    %p31 = scmp.ne.s32.totalorder %s20, %s23
    %p32 = scmp.eq.s32.totalorder %s15, 1
    %p33 = por %p31, %p32
    %p34 = scmp.ne.s32.totalorder %s23, %s24
    %p35 = scmp.eq.s32.totalorder %s15, 0
    %p36 = por %p34, %p35
    %p37 = scmp.ne.s32.totalorder %s23, %s24
    %p38 = scmp.eq.s32.totalorder %s16, 1
    %p39 = por %p37, %p38
    %p41 = scmp.ne.s32.totalorder %s24, %s40
    %p42 = scmp.eq.s32.totalorder %s16, 0
    %p43 = por %p41, %p42
    %s45 = sadd.s32 %s44, 1
    %p48 = scmp.eq.s32.totalorder %s10, 1
    %p49 = scmp.ne.s32.totalorder %s44, %s46
    %p50 = scmp.eq.s32.totalorder %s10, 0
    %p51 = por %p49, %p50
    %p52 = scmp.ne.s32.totalorder %s44, %s46
    %p53 = scmp.eq.s32.totalorder %s15, 1
    %p54 = por %p52, %p53
    %p55 = scmp.ne.s32.totalorder %s46, %s47
    %p56 = scmp.eq.s32.totalorder %s15, 0
    %p57 = por %p55, %p56
    %p58 = scmp.ne.s32.totalorder %s46, %s47
    %p59 = scmp.eq.s32.totalorder %s16, 1
    %p60 = por %p58, %p59
    %p62 = scmp.ne.s32.totalorder %s47, %s61
    %p63 = scmp.eq.s32.totalorder %s16, 0
    %p64 = por %p62, %p63
    %s66 = sadd.s32 %s65, 1
    %p69 = scmp.eq.s32.totalorder %s10, 1
    %p70 = scmp.ne.s32.totalorder %s65, %s67
    %p71 = scmp.eq.s32.totalorder %s10, 0
    %p72 = por %p70, %p71
    %p73 = scmp.ne.s32.totalorder %s65, %s67
    %p74 = scmp.eq.s32.totalorder %s15, 1
    %p75 = por %p73, %p74
    %p76 = scmp.ne.s32.totalorder %s67, %s68
    %p77 = scmp.eq.s32.totalorder %s15, 0
    %p78 = por %p76, %p77
    %p79 = scmp.ne.s32.totalorder %s67, %s68
    %p80 = scmp.eq.s32.totalorder %s16, 1
    %p81 = por %p79, %p80
    %p83 = scmp.ne.s32.totalorder %s68, %s82
    %p84 = scmp.eq.s32.totalorder %s16, 0
    %p85 = por %p83, %p84
    %s86 = ssub.s32 %s10, %s17
    %p87 = scmp.eq.s32.totalorder %s86, 0
    %s89 = sadd.s32 %s88, 1
    %s90 = scalar_select %p87, %s88, %s89
    %p93 = pneg %p87
    %p94 = scmp.eq.s32.totalorder %s10, 1
    %p95 = por %p93, %p94
    %p96 = scmp.ne.s32.totalorder %s88, %s91
    %p97 = scmp.eq.s32.totalorder %s10, 0
    %p98 = por %p96, %p97
    %p99 = scmp.ne.s32.totalorder %s88, %s91
    %p100 = scmp.eq.s32.totalorder %s15, 1
    %p101 = por %p99, %p100
    %p102 = scmp.ne.s32.totalorder %s91, %s92
    %p103 = scmp.eq.s32.totalorder %s15, 0
    %p104 = por %p102, %p103
    %p105 = scmp.ne.s32.totalorder %s91, %s92
    %p106 = scmp.eq.s32.totalorder %s16, 1
    %p107 = por %p105, %p106
    %p109 = scmp.ne.s32.totalorder %s92, %s108
    %p110 = scmp.eq.s32.totalorder %s16, 0
    %p111 = por %p109, %p110
    %s112 = ssub.s32 %s10, %s17
    %p113 = scmp.eq.s32.totalorder %s112, 0
    %s115 = sadd.s32 %s114, 1
    %s116 = scalar_select %p113, %s114, %s115
    %p119 = pneg %p113
    %p120 = scmp.eq.s32.totalorder %s10, 1
    %p121 = por %p119, %p120
    %p122 = scmp.ne.s32.totalorder %s114, %s117
    %p123 = scmp.eq.s32.totalorder %s10, 0
    %p124 = por %p122, %p123
    %p125 = scmp.ne.s32.totalorder %s114, %s117
    %p126 = scmp.eq.s32.totalorder %s15, 1
    %p127 = por %p125, %p126
    %p128 = scmp.ne.s32.totalorder %s117, %s118
    %p129 = scmp.eq.s32.totalorder %s15, 0
    %p130 = por %p128, %p129
    %p131 = scmp.ne.s32.totalorder %s117, %s118
    %p132 = scmp.eq.s32.totalorder %s16, 1
    %p133 = por %p131, %p132
    %p135 = scmp.ne.s32.totalorder %s118, %s134
    %p136 = scmp.eq.s32.totalorder %s16, 0
    %p137 = por %p135, %p136
    %p138 = scmp.le.s32.totalorder 1, %s10
    %p139 = scmp.lt.s32.totalorder %s10, 3
    %p140 = pnand %p138, %p139
    %p141 = pneg %p140
    // Predicated region
    $region9: #{forward.13} parent=5 // pred_check
      _
    $region10: #{forward.13} parent=5 // pred_check_branch
      %143 = sbr.rel (%p140) target = $region12
    $region11: #{forward.13} parent=5 // pred_region
      %s144 = ssub.s32 %s10, 1
      // Predicated region
      $region13: #{forward.13} parent=11 // pred_check
        %p145 = pneg %p57
      $region14: #{forward.13} parent=11 // pred_check_branch
        %147 = sbr.rel (%p145) target = $region16
      $region15: #{forward.13} parent=11 // pred_region
        _
      $region16: #{forward.13} parent=11 // pred_fallthru
        _
      // Predicated region
      $region17: #{forward.13} parent=11 // pred_check
        %p148 = pneg %p78
      $region18: #{forward.13} parent=11 // pred_check_branch
        %150 = sbr.rel (%p148) target = $region20
      $region19: #{forward.13} parent=11 // pred_region
        _
      $region20: #{forward.13} parent=11 // pred_fallthru
        _
    $region12: #{forward.13} parent=5 // pred_fallthru
      _
    %p151 = scmp.lt.s32.totalorder %s10, 2
    // Predicated region
    $region21: #{forward.13} parent=5 // pred_check
      %p152 = pneg %p151
    $region22: #{forward.13} parent=5 // pred_check_branch
      %154 = sbr.rel (%p152) target = $region24
    $region23: #{forward.13} parent=5 // pred_region
      // Predicated region
      $region25: #{forward.13} parent=23 // pred_check
        %p155 = pneg %p30
      $region26: #{forward.13} parent=23 // pred_check_branch
        %157 = sbr.rel (%p155) target = $region28
      $region27: #{forward.13} parent=23 // pred_region
        %p158 = scmp.lt.s32.totalorder %s10, 1
        %s159 = scalar_select %p158, %s10, 1
        %s160 = smul.addr %s159, 3
        %s161 = smul.addr %s160, 4
        %s162 = scalar_lea.vmem %s0, %s161
      $region28: #{forward.13} parent=23 // pred_fallthru
        _
      // Predicated region
      $region29: #{forward.13} parent=23 // pred_check
        %p163 = pneg %p98
      $region30: #{forward.13} parent=23 // pred_check_branch
        %165 = sbr.rel (%p163) target = $region32
      $region31: #{forward.13} parent=23 // pred_region
        %p166 = scmp.lt.s32.totalorder %s10, 1
        %s167 = scalar_select %p166, %s10, 1
        %s168 = smul.addr %s167, 3
        %s169 = smul.addr %s168, 4
        %s170 = scalar_lea.vmem %s3, %s169
      $region32: #{forward.13} parent=23 // pred_fallthru
        _
    $region24: #{forward.13} parent=5 // pred_fallthru
      _
    %p171 = scmp.le.s32.totalorder 1, %s10
    %p172 = scmp.lt.s32.totalorder %s10, 3
    %p173 = pnand %p171, %p172
    %p174 = pneg %p173
    // Predicated region
    $region33: #{forward.13} parent=5 // pred_check
      _
    $region34: #{forward.13} parent=5 // pred_check_branch
      %176 = sbr.rel (%p173) target = $region36
    $region35: #{forward.13} parent=5 // pred_region
      %s177 = ssub.s32 %s10, 1
      %p178 = scmp.lt.s32.totalorder %s15, 1
      %s179 = scalar_select %p178, %s15, 1
      %s180 = smul.addr %s179, 3
      %s181 = smul.addr %s180, 4
      %s182 = scalar_lea.vmem %s0, %s181
      %p183 = pneg %p36
      %p184 = pneg %p33
      %p185 = pneg %p57
      %p186 = pneg %p54
      %p187 = pneg %p78
      %p188 = pneg %p75
      %p189 = scmp.lt.s32.totalorder %s15, 1
      %s190 = scalar_select %p189, %s15, 1
      %s191 = smul.addr %s190, 3
      %s192 = smul.addr %s191, 4
      %s193 = scalar_lea.vmem %s3, %s192
      %p194 = pneg %p104
      %p195 = pneg %p101
      %p196 = pneg %p130
      %p197 = pneg %p127
      %p198 = scmp.lt.s32.totalorder %s15, 1
      %s199 = scalar_select %p198, %s15, 1
      %s200 = smul.addr %s199, 3
      %s201 = smul.addr %s200, 4
      %s202 = scalar_lea.vmem %s4, %s201
      %p203 = scmp.lt.s32.totalorder %s15, 1
      %s204 = scalar_select %p203, %s15, 1
      %s205 = smul.addr %s204, 3
      %s206 = smul.addr %s205, 4
      %s207 = scalar_lea.vmem %s0, %s206
      %p208 = scmp.lt.s32.totalorder %s15, 1
      %s209 = scalar_select %p208, %s15, 1
      %s210 = smul.addr %s209, 3
      %s211 = smul.addr %s210, 4
      %s212 = scalar_lea.vmem %s3, %s211
      %p213 = scmp.lt.s32.totalorder %s15, 1
      %s214 = scalar_select %p213, %s15, 1
      %s215 = smul.addr %s214, 3
      %s216 = smul.addr %s215, 4
      %s217 = scalar_lea.vmem %s4, %s216
      %v220 = vld [vmem:[%s212] sm:$0xf]
      %v221 = vld [vmem:[%s212 + $0x4] sm:$0xf]
      %v222 = vld [vmem:[%s212 + $0x8] sm:$0x1]
      %v223 = vunpack.c.l.bf16 %v220
      %v224 = vunpack.c.l.bf16 %v221
      %v225 = vunpack.c.l.bf16 %v222
      %v226 = vld [vmem:[%s2] sm:$0x1]
      %v228 = vlaneseq
      %v229 = vshrl.u32 %v228, 7
      %v230 = vsub.s32 0, %v229
      %v231 = vrot.slane %v226, %v230
      %v233 = vadd.f32 %v223, %v231
      %v234 = vadd.f32 %v224, %v231
      %v235 = vadd.f32 %v225, %v231
      %v236 = vld [vmem:[%s207] sm:$0xf]
      %v237 = vld [vmem:[%s207 + $0x4] sm:$0xf]
      %v238 = vld [vmem:[%s207 + $0x8] sm:$0x1]
      %v239 = vmul.bf16 %v236, 1052065461
      %v240 = vmul.bf16 %v237, 1052065461
      %v241 = vmul.bf16 %v238, 1052065461
      %v245 = vunpack.c.l.b16 %v239
      %v246 = vunpack.c.l.b16 %v240
      %v247 = vunpack.c.l.b16 %v241
      %v248 = vpack.c.b16 %v246, %v245
      %v249 = vpack.c.b16 %v247, %v247
      %v253 = vunpack.c.l.b16 %v236
      %v254 = vunpack.c.l.b16 %v237
      %v255 = vunpack.c.l.b16 %v238
      %v256 = vpack.c.b16 %v254, %v253
      %v257 = vpack.c.b16 %v255, %v255
      %258 = vrot.lane.b32.xlu0 %v256, 96
      %v259 = vpop.permute.xlu0 %258
      %260 = vrot.lane.b32.xlu0 %v257, 96
      %v261 = vpop.permute.xlu0 %260
      %vm262 = vcmask 64512
      %v264 = vsel %vm262, %v248, 0
      %v267 = vsel %vm262, %v249, 0
      %v270 = vsel %vm262, %v259, 0
      %v273 = vsel %vm262, %v261, 0
      %275 = vmatprep.subr.bf16.mxu0 0
      %276 = vmatpush1.bf16.xpose.msra.mxu0 %v270
      %277 = vmatprep.subr.bf16.mxu0 0
      %278 = vmatpush1.bf16.xpose.msra.mxu0 %v273
      %279 = vmatprep.subr.bf16.mxu0 0
      %280 = vmatpush1.bf16.xpose.msra.mxu0 0
      %281 = vmatprep.subr.bf16.mxu0 0
      %282 = vmatpush1.bf16.xpose.msra.mxu0 0
      %283 = vmatprep.subr.bf16.mxu0 0
      %284 = vmatpush1.bf16.xpose.msra.mxu0 0
      %285 = vmatprep.subr.bf16.mxu0 0
      %286 = vmatpush1.bf16.xpose.msra.mxu0 0
      %287 = vmatprep.subr.bf16.mxu0 0
      %288 = vmatpush1.bf16.xpose.msra.mxu0 0
      %289 = vmatprep.subr.bf16.mxu0 0
      %290 = vmatpush1.bf16.xpose.msra.mxu0 0
      %291 = vmatprep.subr.bf16.mxu0 0
      %292 = vmatpush1.bf16.xpose.msra.mxu0 0
      %293 = vmatprep.subr.bf16.mxu0 0
      %294 = vmatpush1.bf16.xpose.msra.mxu0 0
      %295 = vmatprep.subr.bf16.mxu0 0
      %296 = vmatpush1.bf16.xpose.msra.mxu0 0
      %297 = vmatprep.subr.bf16.mxu0 0
      %298 = vmatpush1.bf16.xpose.msra.mxu0 0
      %299 = vmatprep.subr.bf16.mxu0 0
      %300 = vmatpush1.bf16.xpose.msra.mxu0 0
      %301 = vmatprep.subr.bf16.mxu0 0
      %302 = vmatpush1.bf16.xpose.msra.mxu0 0
      %303 = vmatprep.subr.bf16.mxu0 0
      %304 = vmatpush1.bf16.xpose.msra.mxu0 0
      %305 = vmatprep.subr.bf16.mxu0 0
      %306 = vmatpush1.bf16.xpose.msra.mxu0 0
      %307 = vmatprep.mubr.bf16.mxu0 0
      %308 = vmatmul.mubr.bf16.gmra.mrb[0].mxu0 %v264
      %v309 = vpop.f32.mrb[0].mxu0
      %v310 = vadd.f32 0.0, %v309
      %v311 = vpop.f32.mrb[0].mxu0
      %v312 = vpop.f32.mrb[0].mxu0
      %v313 = vadd.f32 0.0, %v312
      %v314 = vpop.f32.mrb[0].mxu0
      %315 = vmatprep.mubr.bf16.mxu0 0
      %316 = vmatmul.mubr.bf16.gmra.mrb[0].mxu0 %v267
      %v317 = vpop.f32.mrb[0].mxu0
      %v318 = vadd.f32 0.0, %v317
      %v319 = vpop.f32.mrb[0].mxu0
      %v320 = vpop.f32.mrb[0].mxu0
      %v321 = vpop.f32.mrb[0].mxu0
      %322 = vdwg.mxu0
      %vm323 = vcmask 138240
      %v324 = vsel %vm323, %v310, -inf
      %325 = vmax.xlane.f32.xlu0 %v324
      %v326 = vpop.xlane.xlu0 %325
      %v327 = vsel %vm323, %v313, -inf
      %328 = vmax.xlane.f32.xlu0 %v327
      %v329 = vpop.xlane.xlu0 %328
      %vm330 = vcmask 131072
      %v331 = vsel %vm330, %v318, -inf
      %332 = vmax.xlane.f32.xlu0 %v331
      %v333 = vpop.xlane.xlu0 %332
      %v334 = vsub.f32 %v310, %v326
      %v335 = vsub.f32 %v313, %v329
      %v336 = vsub.f32 %v318, %v333
      %v337 = vmul.f32 %v334, 1.442695
      %v338 = vpow.pop %v337
      %v339 = vmul.f32 %v335, 1.442695
      %v340 = vpow.pop %v339
      %v341 = vmul.f32 %v336, 1.442695
      %v342 = vpow.pop %v341
      %v343 = vsel %vm323, %v338, 0.0
      %344 = vadd.xlane.f32.xlu0 %v343
      %v345 = vpop.xlane.xlu0 %344
      %v346 = vsel %vm323, %v340, 0.0
      %347 = vadd.xlane.f32.xlu0 %v346
      %v348 = vpop.xlane.xlu0 %347
      %v349 = vsel %vm330, %v342, 0.0
      %350 = vadd.xlane.f32.xlu0 %v349
      %v351 = vpop.xlane.xlu0 %350
      %v352 = vrcp.pop %v345
      %v353 = vrcp.pop %v348
      %v354 = vrcp.pop %v351
      %v355 = vmul.f32 %v338, %v352
      %v356 = vmul.f32 %v340, %v353
      %v357 = vmul.f32 %v342, %v354
      %v358 = vpack.c.bf16 %v356, %v355
      %v359 = vpack.c.bf16 %v357, %v357
      %360 = vrot.lane.b32.xlu0 %v256, 64
      %v361 = vpop.permute.xlu0 %360
      %362 = vrot.lane.b32.xlu0 %v257, 64
      %v363 = vpop.permute.xlu0 %362
      %v366 = vsel %vm323, %v358, 0
      %v369 = vsel %vm323, %v359, 0
      %vm371 = vcmask 1040384
      %v372 = vsel 0, 4294967295, 65535
      %v373 = vsel %vm371, %v372, 0
      %v375 = vand.u32 %v363, %v373
      %377 = vmatprep.subr.bf16.mxu0 0
      %378 = vmatpush1.bf16.msra.mxu0 %v361
      %379 = vmatprep.subr.bf16.mxu0 0
      %380 = vmatpush1.bf16.msra.mxu0 %v375
      %381 = vmatprep.subr.bf16.mxu0 0
      %382 = vmatpush1.bf16.msra.mxu0 0
      %383 = vmatprep.subr.bf16.mxu0 0
      %384 = vmatpush1.bf16.msra.mxu0 0
      %385 = vmatprep.subr.bf16.mxu0 0
      %386 = vmatpush1.bf16.msra.mxu0 0
      %387 = vmatprep.subr.bf16.mxu0 0
      %388 = vmatpush1.bf16.msra.mxu0 0
      %389 = vmatprep.subr.bf16.mxu0 0
      %390 = vmatpush1.bf16.msra.mxu0 0
      %391 = vmatprep.subr.bf16.mxu0 0
      %392 = vmatpush1.bf16.msra.mxu0 0
      %393 = vmatprep.subr.bf16.mxu0 0
      %394 = vmatpush1.bf16.msra.mxu0 0
      %395 = vmatprep.subr.bf16.mxu0 0
      %396 = vmatpush1.bf16.msra.mxu0 0
      %397 = vmatprep.subr.bf16.mxu0 0
      %398 = vmatpush1.bf16.msra.mxu0 0
      %399 = vmatprep.subr.bf16.mxu0 0
      %400 = vmatpush1.bf16.msra.mxu0 0
      %401 = vmatprep.subr.bf16.mxu0 0
      %402 = vmatpush1.bf16.msra.mxu0 0
      %403 = vmatprep.subr.bf16.mxu0 0
      %404 = vmatpush1.bf16.msra.mxu0 0
      %405 = vmatprep.subr.bf16.mxu0 0
      %406 = vmatpush1.bf16.msra.mxu0 0
      %407 = vmatprep.subr.bf16.mxu0 0
      %408 = vmatpush1.bf16.msra.mxu0 0
      %409 = vmatprep.mubr.bf16.mxu0 0
      %410 = vmatmul.mubr.bf16.gmra.mrb[0].mxu0 %v366
      %v411 = vpop.f32.mrb[0].mxu0
      %v412 = vadd.f32 0.0, %v411
      %v413 = vpop.f32.mrb[0].mxu0
      %v414 = vpop.f32.mrb[0].mxu0
      %v415 = vadd.f32 0.0, %v414
      %v416 = vpop.f32.mrb[0].mxu0
      %417 = vmatprep.mubr.bf16.mxu0 0
      %418 = vmatmul.mubr.bf16.gmra.mrb[0].mxu0 %v369
      %v419 = vpop.f32.mrb[0].mxu0
      %v420 = vadd.f32 0.0, %v419
      %v421 = vpop.f32.mrb[0].mxu0
      %v422 = vpop.f32.mrb[0].mxu0
      %v423 = vpop.f32.mrb[0].mxu0
      %424 = vdwg.mxu0
      %v425 = vpack.c.bf16 %v415, %v412
      %v426 = vpack.c.bf16 %v420, %v420
      %v427 = vld [vmem:[%s1] sm:$0xf]
      %v429 = vsel %vm262, %v425, 0
      %v432 = vsel %vm262, %v426, 0
      %vm434 = vcmask 1043456
      %v436 = vsel %vm434, %v427, 0
      %438 = vmatprep.subr.bf16.mxu0 0
      %439 = vmatpush1.bf16.msra.mxu0 %v436
      %440 = vmatprep.subr.bf16.mxu0 0
      %441 = vmatpush1.bf16.msra.mxu0 0
      %442 = vmatprep.subr.bf16.mxu0 0
      %443 = vmatpush1.bf16.msra.mxu0 0
      %444 = vmatprep.subr.bf16.mxu0 0
      %445 = vmatpush1.bf16.msra.mxu0 0
      %446 = vmatprep.subr.bf16.mxu0 0
      %447 = vmatpush1.bf16.msra.mxu0 0
      %448 = vmatprep.subr.bf16.mxu0 0
      %449 = vmatpush1.bf16.msra.mxu0 0
      %450 = vmatprep.subr.bf16.mxu0 0
      %451 = vmatpush1.bf16.msra.mxu0 0
      %452 = vmatprep.subr.bf16.mxu0 0
      %453 = vmatpush1.bf16.msra.mxu0 0
      %454 = vmatprep.subr.bf16.mxu0 0
      %455 = vmatpush1.bf16.msra.mxu0 0
      %456 = vmatprep.subr.bf16.mxu0 0
      %457 = vmatpush1.bf16.msra.mxu0 0
      %458 = vmatprep.subr.bf16.mxu0 0
      %459 = vmatpush1.bf16.msra.mxu0 0
      %460 = vmatprep.subr.bf16.mxu0 0
      %461 = vmatpush1.bf16.msra.mxu0 0
      %462 = vmatprep.subr.bf16.mxu0 0
      %463 = vmatpush1.bf16.msra.mxu0 0
      %464 = vmatprep.subr.bf16.mxu0 0
      %465 = vmatpush1.bf16.msra.mxu0 0
      %466 = vmatprep.subr.bf16.mxu0 0
      %467 = vmatpush1.bf16.msra.mxu0 0
      %468 = vmatprep.subr.bf16.mxu0 0
      %469 = vmatpush1.bf16.msra.mxu0 0
      %470 = vmatprep.mubr.bf16.mxu0 0
      %471 = vmatmul.mubr.bf16.gmra.mrb[0].mxu0 %v429
      %v472 = vpop.f32.mrb[0].mxu0
      %v473 = vadd.f32 0.0, %v472
      %v474 = vpop.f32.mrb[0].mxu0
      %v475 = vpop.f32.mrb[0].mxu0
      %v476 = vadd.f32 0.0, %v475
      %v477 = vpop.f32.mrb[0].mxu0
      %478 = vmatprep.mubr.bf16.mxu0 0
      %479 = vmatmul.mubr.bf16.gmra.mrb[0].mxu0 %v432
      %v480 = vpop.f32.mrb[0].mxu0
      %v481 = vadd.f32 0.0, %v480
      %v482 = vpop.f32.mrb[0].mxu0
      %v483 = vpop.f32.mrb[0].mxu0
      %v484 = vpop.f32.mrb[0].mxu0
      %485 = vdwg.mxu0
      %v486 = vadd.f32 %v233, %v473
      %v487 = vadd.f32 %v234, %v476
      %v488 = vadd.f32 %v235, %v481
      %489 = vrot.lane.b32.xlu0 %v248, 120
      %v490 = vpop.permute.xlu0 %489
      %491 = vrot.lane.b32.xlu0 %v249, 120
      %v492 = vpop.permute.xlu0 %491
      %493 = vrot.lane.b32.xlu0 %v256, 88
      %v494 = vpop.permute.xlu0 %493
      %495 = vrot.lane.b32.xlu0 %v257, 88
      %v496 = vpop.permute.xlu0 %495
      %v498 = vsel %vm262, %v490, 0
      %v501 = vsel %vm262, %v492, 0
      %v504 = vsel %vm262, %v494, 0
      %v507 = vsel %vm262, %v496, 0
      %509 = vmatprep.subr.bf16.mxu0 0
      %510 = vmatpush1.bf16.xpose.msra.mxu0 %v504
      %511 = vmatprep.subr.bf16.mxu0 0
      %512 = vmatpush1.bf16.xpose.msra.mxu0 %v507
      %513 = vmatprep.subr.bf16.mxu0 0
      %514 = vmatpush1.bf16.xpose.msra.mxu0 0
      %515 = vmatprep.subr.bf16.mxu0 0
      %516 = vmatpush1.bf16.xpose.msra.mxu0 0
      %517 = vmatprep.subr.bf16.mxu0 0
      %518 = vmatpush1.bf16.xpose.msra.mxu0 0
      %519 = vmatprep.subr.bf16.mxu0 0
      %520 = vmatpush1.bf16.xpose.msra.mxu0 0
      %521 = vmatprep.subr.bf16.mxu0 0
      %522 = vmatpush1.bf16.xpose.msra.mxu0 0
      %523 = vmatprep.subr.bf16.mxu0 0
      %524 = vmatpush1.bf16.xpose.msra.mxu0 0
      %525 = vmatprep.subr.bf16.mxu0 0
      %526 = vmatpush1.bf16.xpose.msra.mxu0 0
      %527 = vmatprep.subr.bf16.mxu0 0
      %528 = vmatpush1.bf16.xpose.msra.mxu0 0
      %529 = vmatprep.subr.bf16.mxu0 0
      %530 = vmatpush1.bf16.xpose.msra.mxu0 0
      %531 = vmatprep.subr.bf16.mxu0 0
      %532 = vmatpush1.bf16.xpose.msra.mxu0 0
      %533 = vmatprep.subr.bf16.mxu0 0
      %534 = vmatpush1.bf16.xpose.msra.mxu0 0
      %535 = vmatprep.subr.bf16.mxu0 0
      %536 = vmatpush1.bf16.xpose.msra.mxu0 0
      %537 = vmatprep.subr.bf16.mxu0 0
      %538 = vmatpush1.bf16.xpose.msra.mxu0 0
      %539 = vmatprep.subr.bf16.mxu0 0
      %540 = vmatpush1.bf16.xpose.msra.mxu0 0
      %541 = vmatprep.mubr.bf16.mxu0 0
      %542 = vmatmul.mubr.bf16.gmra.mrb[0].mxu0 %v498
      %v543 = vpop.f32.mrb[0].mxu0
      %v544 = vadd.f32 0.0, %v543
      %v545 = vpop.f32.mrb[0].mxu0
      %v546 = vpop.f32.mrb[0].mxu0
      %v547 = vadd.f32 0.0, %v546
      %v548 = vpop.f32.mrb[0].mxu0
      %549 = vmatprep.mubr.bf16.mxu0 0
      %550 = vmatmul.mubr.bf16.gmra.mrb[0].mxu0 %v501
      %v551 = vpop.f32.mrb[0].mxu0
      %v552 = vadd.f32 0.0, %v551
      %v553 = vpop.f32.mrb[0].mxu0
      %v554 = vpop.f32.mrb[0].mxu0
      %v555 = vpop.f32.mrb[0].mxu0
      %556 = vdwg.mxu0
      %v557 = vsel %vm323, %v544, -inf
      %558 = vmax.xlane.f32.xlu0 %v557
      %v559 = vpop.xlane.xlu0 %558
      %v560 = vsel %vm323, %v547, -inf
      %561 = vmax.xlane.f32.xlu0 %v560
      %v562 = vpop.xlane.xlu0 %561
      %v563 = vsel %vm330, %v552, -inf
      %564 = vmax.xlane.f32.xlu0 %v563
      %v565 = vpop.xlane.xlu0 %564
      %v566 = vsub.f32 %v544, %v559
      %v567 = vsub.f32 %v547, %v562
      %v568 = vsub.f32 %v552, %v565
      %v569 = vmul.f32 %v566, 1.442695
      %v570 = vpow.pop %v569
      %v571 = vmul.f32 %v567, 1.442695
      %v572 = vpow.pop %v571
      %v573 = vmul.f32 %v568, 1.442695
      %v574 = vpow.pop %v573
      %v575 = vsel %vm323, %v570, 0.0
      %576 = vadd.xlane.f32.xlu0 %v575
      %v577 = vpop.xlane.xlu0 %576
      %v578 = vsel %vm323, %v572, 0.0
      %579 = vadd.xlane.f32.xlu0 %v578
      %v580 = vpop.xlane.xlu0 %579
      %v581 = vsel %vm330, %v574, 0.0
      %582 = vadd.xlane.f32.xlu0 %v581
      %v583 = vpop.xlane.xlu0 %582
      %v584 = vrcp.pop %v577
      %v585 = vrcp.pop %v580
      %v586 = vrcp.pop %v583
      %v587 = vmul.f32 %v570, %v584
      %v588 = vmul.f32 %v572, %v585
      %v589 = vmul.f32 %v574, %v586
      %v590 = vpack.c.bf16 %v588, %v587
      %v591 = vpack.c.bf16 %v589, %v589
      %592 = vrot.lane.b32.xlu0 %v256, 56
      %v593 = vpop.permute.xlu0 %592
      %594 = vrot.lane.b32.xlu0 %v257, 56
      %v595 = vpop.permute.xlu0 %594
      %v598 = vsel %vm323, %v590, 0
      %v601 = vsel %vm323, %v591, 0
      %v604 = vand.u32 %v595, %v373
      %606 = vmatprep.subr.bf16.mxu0 0
      %607 = vmatpush1.bf16.msra.mxu0 %v593
      %608 = vmatprep.subr.bf16.mxu0 0
      %609 = vmatpush1.bf16.msra.mxu0 %v604
      %610 = vmatprep.subr.bf16.mxu0 0
      %611 = vmatpush1.bf16.msra.mxu0 0
      %612 = vmatprep.subr.bf16.mxu0 0
      %613 = vmatpush1.bf16.msra.mxu0 0
      %614 = vmatprep.subr.bf16.mxu0 0
      %615 = vmatpush1.bf16.msra.mxu0 0
      %616 = vmatprep.subr.bf16.mxu0 0
      %617 = vmatpush1.bf16.msra.mxu0 0
      %618 = vmatprep.subr.bf16.mxu0 0
      %619 = vmatpush1.bf16.msra.mxu0 0
      %620 = vmatprep.subr.bf16.mxu0 0
      %621 = vmatpush1.bf16.msra.mxu0 0
      %622 = vmatprep.subr.bf16.mxu0 0
      %623 = vmatpush1.bf16.msra.mxu0 0
      %624 = vmatprep.subr.bf16.mxu0 0
      %625 = vmatpush1.bf16.msra.mxu0 0
      %626 = vmatprep.subr.bf16.mxu0 0
      %627 = vmatpush1.bf16.msra.mxu0 0
      %628 = vmatprep.subr.bf16.mxu0 0
      %629 = vmatpush1.bf16.msra.mxu0 0
      %630 = vmatprep.subr.bf16.mxu0 0
      %631 = vmatpush1.bf16.msra.mxu0 0
      %632 = vmatprep.subr.bf16.mxu0 0
      %633 = vmatpush1.bf16.msra.mxu0 0
      %634 = vmatprep.subr.bf16.mxu0 0
      %635 = vmatpush1.bf16.msra.mxu0 0
      %636 = vmatprep.subr.bf16.mxu0 0
      %637 = vmatpush1.bf16.msra.mxu0 0
      %638 = vmatprep.mubr.bf16.mxu0 0
      %639 = vmatmul.mubr.bf16.gmra.mrb[0].mxu0 %v598
      %v640 = vpop.f32.mrb[0].mxu0
      %v641 = vadd.f32 0.0, %v640
      %v642 = vpop.f32.mrb[0].mxu0
      %v643 = vpop.f32.mrb[0].mxu0
      %v644 = vadd.f32 0.0, %v643
      %v645 = vpop.f32.mrb[0].mxu0
      %646 = vmatprep.mubr.bf16.mxu0 0
      %647 = vmatmul.mubr.bf16.gmra.mrb[0].mxu0 %v601
      %v648 = vpop.f32.mrb[0].mxu0
      %v649 = vadd.f32 0.0, %v648
      %v650 = vpop.f32.mrb[0].mxu0
      %v651 = vpop.f32.mrb[0].mxu0
      %v652 = vpop.f32.mrb[0].mxu0
      %653 = vdwg.mxu0
      %v654 = vpack.c.bf16 %v644, %v641
      %v655 = vpack.c.bf16 %v649, %v649
      %v656 = vld [vmem:[%s1 + $0x4] sm:$0xf]
      %v658 = vsel %vm262, %v654, 0
      %v661 = vsel %vm262, %v655, 0
      %v664 = vsel %vm434, %v656, 0
      %666 = vmatprep.subr.bf16.mxu0 0
      %667 = vmatpush1.bf16.msra.mxu0 %v664
      %668 = vmatprep.subr.bf16.mxu0 0
      %669 = vmatpush1.bf16.msra.mxu0 0
      %670 = vmatprep.subr.bf16.mxu0 0
      %671 = vmatpush1.bf16.msra.mxu0 0
      %672 = vmatprep.subr.bf16.mxu0 0
      %673 = vmatpush1.bf16.msra.mxu0 0
      %674 = vmatprep.subr.bf16.mxu0 0
      %675 = vmatpush1.bf16.msra.mxu0 0
      %676 = vmatprep.subr.bf16.mxu0 0
      %677 = vmatpush1.bf16.msra.mxu0 0
      %678 = vmatprep.subr.bf16.mxu0 0
      %679 = vmatpush1.bf16.msra.mxu0 0
      %680 = vmatprep.subr.bf16.mxu0 0
      %681 = vmatpush1.bf16.msra.mxu0 0
      %682 = vmatprep.subr.bf16.mxu0 0
      %683 = vmatpush1.bf16.msra.mxu0 0
      %684 = vmatprep.subr.bf16.mxu0 0
      %685 = vmatpush1.bf16.msra.mxu0 0
      %686 = vmatprep.subr.bf16.mxu0 0
      %687 = vmatpush1.bf16.msra.mxu0 0
      %688 = vmatprep.subr.bf16.mxu0 0
      %689 = vmatpush1.bf16.msra.mxu0 0
      %690 = vmatprep.subr.bf16.mxu0 0
      %691 = vmatpush1.bf16.msra.mxu0 0
      %692 = vmatprep.subr.bf16.mxu0 0
      %693 = vmatpush1.bf16.msra.mxu0 0
      %694 = vmatprep.subr.bf16.mxu0 0
      %695 = vmatpush1.bf16.msra.mxu0 0
      %696 = vmatprep.subr.bf16.mxu0 0
      %697 = vmatpush1.bf16.msra.mxu0 0
      %698 = vmatprep.mubr.bf16.mxu0 0
      %699 = vmatmul.mubr.bf16.gmra.mrb[0].mxu0 %v658
      %v700 = vpop.f32.mrb[0].mxu0
      %v701 = vadd.f32 0.0, %v700
      %v702 = vpop.f32.mrb[0].mxu0
      %v703 = vpop.f32.mrb[0].mxu0
      %v704 = vadd.f32 0.0, %v703
      %v705 = vpop.f32.mrb[0].mxu0
      %706 = vmatprep.mubr.bf16.mxu0 0
      %707 = vmatmul.mubr.bf16.gmra.mrb[0].mxu0 %v661
      %v708 = vpop.f32.mrb[0].mxu0
      %v709 = vadd.f32 0.0, %v708
      %v710 = vpop.f32.mrb[0].mxu0
      %v711 = vpop.f32.mrb[0].mxu0
      %v712 = vpop.f32.mrb[0].mxu0
      %713 = vdwg.mxu0
      %v714 = vadd.f32 %v486, %v701
      %v715 = vadd.f32 %v487, %v704
      %v716 = vadd.f32 %v488, %v709
      %717 = vrot.lane.b32.xlu0 %v248, 112
      %v718 = vpop.permute.xlu0 %717
      %719 = vrot.lane.b32.xlu0 %v249, 112
      %v720 = vpop.permute.xlu0 %719
      %721 = vrot.lane.b32.xlu0 %v256, 80
      %v722 = vpop.permute.xlu0 %721
      %723 = vrot.lane.b32.xlu0 %v257, 80
      %v724 = vpop.permute.xlu0 %723
      %v726 = vsel %vm262, %v718, 0
      %v729 = vsel %vm262, %v720, 0
      %v732 = vsel %vm262, %v722, 0
      %v735 = vsel %vm262, %v724, 0
      %737 = vmatprep.subr.bf16.mxu0 0
      %738 = vmatpush1.bf16.xpose.msra.mxu0 %v732
      %739 = vmatprep.subr.bf16.mxu0 0
      %740 = vmatpush1.bf16.xpose.msra.mxu0 %v735
      %741 = vmatprep.subr.bf16.mxu0 0
      %742 = vmatpush1.bf16.xpose.msra.mxu0 0
      %743 = vmatprep.subr.bf16.mxu0 0
      %744 = vmatpush1.bf16.xpose.msra.mxu0 0
      %745 = vmatprep.subr.bf16.mxu0 0
      %746 = vmatpush1.bf16.xpose.msra.mxu0 0
      %747 = vmatprep.subr.bf16.mxu0 0
      %748 = vmatpush1.bf16.xpose.msra.mxu0 0
      %749 = vmatprep.subr.bf16.mxu0 0
      %750 = vmatpush1.bf16.xpose.msra.mxu0 0
      %751 = vmatprep.subr.bf16.mxu0 0
      %752 = vmatpush1.bf16.xpose.msra.mxu0 0
      %753 = vmatprep.subr.bf16.mxu0 0
      %754 = vmatpush1.bf16.xpose.msra.mxu0 0
      %755 = vmatprep.subr.bf16.mxu0 0
      %756 = vmatpush1.bf16.xpose.msra.mxu0 0
      %757 = vmatprep.subr.bf16.mxu0 0
      %758 = vmatpush1.bf16.xpose.msra.mxu0 0
      %759 = vmatprep.subr.bf16.mxu0 0
      %760 = vmatpush1.bf16.xpose.msra.mxu0 0
      %761 = vmatprep.subr.bf16.mxu0 0
      %762 = vmatpush1.bf16.xpose.msra.mxu0 0
      %763 = vmatprep.subr.bf16.mxu0 0
      %764 = vmatpush1.bf16.xpose.msra.mxu0 0
      %765 = vmatprep.subr.bf16.mxu0 0
      %766 = vmatpush1.bf16.xpose.msra.mxu0 0
      %767 = vmatprep.subr.bf16.mxu0 0
      %768 = vmatpush1.bf16.xpose.msra.mxu0 0
      %769 = vmatprep.mubr.bf16.mxu0 0
      %770 = vmatmul.mubr.bf16.gmra.mrb[0].mxu0 %v726
      %v771 = vpop.f32.mrb[0].mxu0
      %v772 = vadd.f32 0.0, %v771
      %v773 = vpop.f32.mrb[0].mxu0
      %v774 = vpop.f32.mrb[0].mxu0
      %v775 = vadd.f32 0.0, %v774
      %v776 = vpop.f32.mrb[0].mxu0
      %777 = vmatprep.mubr.bf16.mxu0 0
      %778 = vmatmul.mubr.bf16.gmra.mrb[0].mxu0 %v729
      %v779 = vpop.f32.mrb[0].mxu0
      %v780 = vadd.f32 0.0, %v779
      %v781 = vpop.f32.mrb[0].mxu0
      %v782 = vpop.f32.mrb[0].mxu0
      %v783 = vpop.f32.mrb[0].mxu0
      %784 = vdwg.mxu0
      %v785 = vsel %vm323, %v772, -inf
      %786 = vmax.xlane.f32.xlu0 %v785
      %v787 = vpop.xlane.xlu0 %786
      %v788 = vsel %vm323, %v775, -inf
      %789 = vmax.xlane.f32.xlu0 %v788
      %v790 = vpop.xlane.xlu0 %789
      %v791 = vsel %vm330, %v780, -inf
      %792 = vmax.xlane.f32.xlu0 %v791
      %v793 = vpop.xlane.xlu0 %792
      %v794 = vsub.f32 %v772, %v787
      %v795 = vsub.f32 %v775, %v790
      %v796 = vsub.f32 %v780, %v793
      %v797 = vmul.f32 %v794, 1.442695
      %v798 = vpow.pop %v797
      %v799 = vmul.f32 %v795, 1.442695
      %v800 = vpow.pop %v799
      %v801 = vmul.f32 %v796, 1.442695
      %v802 = vpow.pop %v801
      %v803 = vsel %vm323, %v798, 0.0
      %804 = vadd.xlane.f32.xlu0 %v803
      %v805 = vpop.xlane.xlu0 %804
      %v806 = vsel %vm323, %v800, 0.0
      %807 = vadd.xlane.f32.xlu0 %v806
      %v808 = vpop.xlane.xlu0 %807
      %v809 = vsel %vm330, %v802, 0.0
      %810 = vadd.xlane.f32.xlu0 %v809
      %v811 = vpop.xlane.xlu0 %810
      %v812 = vrcp.pop %v805
      %v813 = vrcp.pop %v808
      %v814 = vrcp.pop %v811
      %v815 = vmul.f32 %v798, %v812
      %v816 = vmul.f32 %v800, %v813
      %v817 = vmul.f32 %v802, %v814
      %v818 = vpack.c.bf16 %v816, %v815
      %v819 = vpack.c.bf16 %v817, %v817
      %820 = vrot.lane.b32.xlu0 %v256, 48
      %v821 = vpop.permute.xlu0 %820
      %822 = vrot.lane.b32.xlu0 %v257, 48
      %v823 = vpop.permute.xlu0 %822
      %v826 = vsel %vm323, %v818, 0
      %v829 = vsel %vm323, %v819, 0
      %v832 = vand.u32 %v823, %v373
      %834 = vmatprep.subr.bf16.mxu0 0
      %835 = vmatpush1.bf16.msra.mxu0 %v821
      %836 = vmatprep.subr.bf16.mxu0 0
      %837 = vmatpush1.bf16.msra.mxu0 %v832
      %838 = vmatprep.subr.bf16.mxu0 0
      %839 = vmatpush1.bf16.msra.mxu0 0
      %840 = vmatprep.subr.bf16.mxu0 0
      %841 = vmatpush1.bf16.msra.mxu0 0
      %842 = vmatprep.subr.bf16.mxu0 0
      %843 = vmatpush1.bf16.msra.mxu0 0
      %844 = vmatprep.subr.bf16.mxu0 0
      %845 = vmatpush1.bf16.msra.mxu0 0
      %846 = vmatprep.subr.bf16.mxu0 0
      %847 = vmatpush1.bf16.msra.mxu0 0
      %848 = vmatprep.subr.bf16.mxu0 0
      %849 = vmatpush1.bf16.msra.mxu0 0
      %850 = vmatprep.subr.bf16.mxu0 0
      %851 = vmatpush1.bf16.msra.mxu0 0
      %852 = vmatprep.subr.bf16.mxu0 0
      %853 = vmatpush1.bf16.msra.mxu0 0
      %854 = vmatprep.subr.bf16.mxu0 0
      %855 = vmatpush1.bf16.msra.mxu0 0
      %856 = vmatprep.subr.bf16.mxu0 0
      %857 = vmatpush1.bf16.msra.mxu0 0
      %858 = vmatprep.subr.bf16.mxu0 0
      %859 = vmatpush1.bf16.msra.mxu0 0
      %860 = vmatprep.subr.bf16.mxu0 0
      %861 = vmatpush1.bf16.msra.mxu0 0
      %862 = vmatprep.subr.bf16.mxu0 0
      %863 = vmatpush1.bf16.msra.mxu0 0
      %864 = vmatprep.subr.bf16.mxu0 0
      %865 = vmatpush1.bf16.msra.mxu0 0
      %866 = vmatprep.mubr.bf16.mxu0 0
      %867 = vmatmul.mubr.bf16.gmra.mrb[0].mxu0 %v826
      %v868 = vpop.f32.mrb[0].mxu0
      %v869 = vadd.f32 0.0, %v868
      %v870 = vpop.f32.mrb[0].mxu0
      %v871 = vpop.f32.mrb[0].mxu0
      %v872 = vadd.f32 0.0, %v871
      %v873 = vpop.f32.mrb[0].mxu0
      %874 = vmatprep.mubr.bf16.mxu0 0
      %875 = vmatmul.mubr.bf16.gmra.mrb[0].mxu0 %v829
      %v876 = vpop.f32.mrb[0].mxu0
      %v877 = vadd.f32 0.0, %v876
      %v878 = vpop.f32.mrb[0].mxu0
      %v879 = vpop.f32.mrb[0].mxu0
      %v880 = vpop.f32.mrb[0].mxu0
      %881 = vdwg.mxu0
      %v882 = vpack.c.bf16 %v872, %v869
      %v883 = vpack.c.bf16 %v877, %v877
      %v884 = vld [vmem:[%s1 + $0x8] sm:$0xf]
      %v886 = vsel %vm262, %v882, 0
      %v889 = vsel %vm262, %v883, 0
      %v892 = vsel %vm434, %v884, 0
      %894 = vmatprep.subr.bf16.mxu0 0
      %895 = vmatpush1.bf16.msra.mxu0 %v892
      %896 = vmatprep.subr.bf16.mxu0 0
      %897 = vmatpush1.bf16.msra.mxu0 0
      %898 = vmatprep.subr.bf16.mxu0 0
      %899 = vmatpush1.bf16.msra.mxu0 0
      %900 = vmatprep.subr.bf16.mxu0 0
      %901 = vmatpush1.bf16.msra.mxu0 0
      %902 = vmatprep.subr.bf16.mxu0 0
      %903 = vmatpush1.bf16.msra.mxu0 0
      %904 = vmatprep.subr.bf16.mxu0 0
      %905 = vmatpush1.bf16.msra.mxu0 0
      %906 = vmatprep.subr.bf16.mxu0 0
      %907 = vmatpush1.bf16.msra.mxu0 0
      %908 = vmatprep.subr.bf16.mxu0 0
      %909 = vmatpush1.bf16.msra.mxu0 0
      %910 = vmatprep.subr.bf16.mxu0 0
      %911 = vmatpush1.bf16.msra.mxu0 0
      %912 = vmatprep.subr.bf16.mxu0 0
      %913 = vmatpush1.bf16.msra.mxu0 0
      %914 = vmatprep.subr.bf16.mxu0 0
      %915 = vmatpush1.bf16.msra.mxu0 0
      %916 = vmatprep.subr.bf16.mxu0 0
      %917 = vmatpush1.bf16.msra.mxu0 0
      %918 = vmatprep.subr.bf16.mxu0 0
      %919 = vmatpush1.bf16.msra.mxu0 0
      %920 = vmatprep.subr.bf16.mxu0 0
      %921 = vmatpush1.bf16.msra.mxu0 0
      %922 = vmatprep.subr.bf16.mxu0 0
      %923 = vmatpush1.bf16.msra.mxu0 0
      %924 = vmatprep.subr.bf16.mxu0 0
      %925 = vmatpush1.bf16.msra.mxu0 0
      %926 = vmatprep.mubr.bf16.mxu0 0
      %927 = vmatmul.mubr.bf16.gmra.mrb[0].mxu0 %v886
      %v928 = vpop.f32.mrb[0].mxu0
      %v929 = vadd.f32 0.0, %v928
      %v930 = vpop.f32.mrb[0].mxu0
      %v931 = vpop.f32.mrb[0].mxu0
      %v932 = vadd.f32 0.0, %v931
      %v933 = vpop.f32.mrb[0].mxu0
      %934 = vmatprep.mubr.bf16.mxu0 0
      %935 = vmatmul.mubr.bf16.gmra.mrb[0].mxu0 %v889
      %v936 = vpop.f32.mrb[0].mxu0
      %v937 = vadd.f32 0.0, %v936
      %v938 = vpop.f32.mrb[0].mxu0
      %v939 = vpop.f32.mrb[0].mxu0
      %v940 = vpop.f32.mrb[0].mxu0
      %941 = vdwg.mxu0
      %v942 = vadd.f32 %v714, %v929
      %v943 = vadd.f32 %v715, %v932
      %v944 = vadd.f32 %v716, %v937
      %945 = vrot.lane.b32.xlu0 %v248, 104
      %v946 = vpop.permute.xlu0 %945
      %947 = vrot.lane.b32.xlu0 %v249, 104
      %v948 = vpop.permute.xlu0 %947
      %949 = vrot.lane.b32.xlu0 %v256, 72
      %v950 = vpop.permute.xlu0 %949
      %951 = vrot.lane.b32.xlu0 %v257, 72
      %v952 = vpop.permute.xlu0 %951
      %v954 = vsel %vm262, %v946, 0
      %v957 = vsel %vm262, %v948, 0
      %v960 = vsel %vm262, %v950, 0
      %v963 = vsel %vm262, %v952, 0
      %965 = vmatprep.subr.bf16.mxu0 0
      %966 = vmatpush1.bf16.xpose.msra.mxu0 %v960
      %967 = vmatprep.subr.bf16.mxu0 0
      %968 = vmatpush1.bf16.xpose.msra.mxu0 %v963
      %969 = vmatprep.subr.bf16.mxu0 0
      %970 = vmatpush1.bf16.xpose.msra.mxu0 0
      %971 = vmatprep.subr.bf16.mxu0 0
      %972 = vmatpush1.bf16.xpose.msra.mxu0 0
      %973 = vmatprep.subr.bf16.mxu0 0
      %974 = vmatpush1.bf16.xpose.msra.mxu0 0
      %975 = vmatprep.subr.bf16.mxu0 0
      %976 = vmatpush1.bf16.xpose.msra.mxu0 0
      %977 = vmatprep.subr.bf16.mxu0 0
      %978 = vmatpush1.bf16.xpose.msra.mxu0 0
      %979 = vmatprep.subr.bf16.mxu0 0
      %980 = vmatpush1.bf16.xpose.msra.mxu0 0
      %981 = vmatprep.subr.bf16.mxu0 0
      %982 = vmatpush1.bf16.xpose.msra.mxu0 0
      %983 = vmatprep.subr.bf16.mxu0 0
      %984 = vmatpush1.bf16.xpose.msra.mxu0 0
      %985 = vmatprep.subr.bf16.mxu0 0
      %986 = vmatpush1.bf16.xpose.msra.mxu0 0
      %987 = vmatprep.subr.bf16.mxu0 0
      %988 = vmatpush1.bf16.xpose.msra.mxu0 0
      %989 = vmatprep.subr.bf16.mxu0 0
      %990 = vmatpush1.bf16.xpose.msra.mxu0 0
      %991 = vmatprep.subr.bf16.mxu0 0
      %992 = vmatpush1.bf16.xpose.msra.mxu0 0
      %993 = vmatprep.subr.bf16.mxu0 0
      %994 = vmatpush1.bf16.xpose.msra.mxu0 0
      %995 = vmatprep.subr.bf16.mxu0 0
      %996 = vmatpush1.bf16.xpose.msra.mxu0 0
      %997 = vmatprep.mubr.bf16.mxu0 0
      %998 = vmatmul.mubr.bf16.gmra.mrb[0].mxu0 %v954
      %v999 = vpop.f32.mrb[0].mxu0
      %v1000 = vadd.f32 0.0, %v999
      %v1001 = vpop.f32.mrb[0].mxu0
      %v1002 = vpop.f32.mrb[0].mxu0
      %v1003 = vadd.f32 0.0, %v1002
      %v1004 = vpop.f32.mrb[0].mxu0
      %1005 = vmatprep.mubr.bf16.mxu0 0
      %1006 = vmatmul.mubr.bf16.gmra.mrb[0].mxu0 %v957
      %v1007 = vpop.f32.mrb[0].mxu0
      %v1008 = vadd.f32 0.0, %v1007
      %v1009 = vpop.f32.mrb[0].mxu0
      %v1010 = vpop.f32.mrb[0].mxu0
      %v1011 = vpop.f32.mrb[0].mxu0
      %1012 = vdwg.mxu0
      %v1013 = vsel %vm323, %v1000, -inf
      %1014 = vmax.xlane.f32.xlu0 %v1013
      %v1015 = vpop.xlane.xlu0 %1014
      %v1016 = vsel %vm323, %v1003, -inf
      %1017 = vmax.xlane.f32.xlu0 %v1016
      %v1018 = vpop.xlane.xlu0 %1017
      %v1019 = vsel %vm330, %v1008, -inf
      %1020 = vmax.xlane.f32.xlu0 %v1019
      %v1021 = vpop.xlane.xlu0 %1020
      %v1022 = vsub.f32 %v1000, %v1015
      %v1023 = vsub.f32 %v1003, %v1018
      %v1024 = vsub.f32 %v1008, %v1021
      %v1025 = vmul.f32 %v1022, 1.442695
      %v1026 = vpow.pop %v1025
      %v1027 = vmul.f32 %v1023, 1.442695
      %v1028 = vpow.pop %v1027
      %v1029 = vmul.f32 %v1024, 1.442695
      %v1030 = vpow.pop %v1029
      %v1031 = vsel %vm323, %v1026, 0.0
      %1032 = vadd.xlane.f32.xlu0 %v1031
      %v1033 = vpop.xlane.xlu0 %1032
      %v1034 = vsel %vm323, %v1028, 0.0
      %1035 = vadd.xlane.f32.xlu0 %v1034
      %v1036 = vpop.xlane.xlu0 %1035
      %v1037 = vsel %vm330, %v1030, 0.0
      %1038 = vadd.xlane.f32.xlu0 %v1037
      %v1039 = vpop.xlane.xlu0 %1038
      %v1040 = vrcp.pop %v1033
      %v1041 = vrcp.pop %v1036
      %v1042 = vrcp.pop %v1039
      %v1043 = vmul.f32 %v1026, %v1040
      %v1044 = vmul.f32 %v1028, %v1041
      %v1045 = vmul.f32 %v1030, %v1042
      %v1046 = vpack.c.bf16 %v1044, %v1043
      %v1047 = vpack.c.bf16 %v1045, %v1045
      %1048 = vrot.lane.b32.xlu0 %v256, 40
      %v1049 = vpop.permute.xlu0 %1048
      %1050 = vrot.lane.b32.xlu0 %v257, 40
      %v1051 = vpop.permute.xlu0 %1050
      %v1054 = vsel %vm323, %v1046, 0
      %v1057 = vsel %vm323, %v1047, 0
      %v1060 = vand.u32 %v1051, %v373
      %1062 = vmatprep.subr.bf16.mxu0 0
      %1063 = vmatpush1.bf16.msra.mxu0 %v1049
      %1064 = vmatprep.subr.bf16.mxu0 0
      %1065 = vmatpush1.bf16.msra.mxu0 %v1060
      %1066 = vmatprep.subr.bf16.mxu0 0
      %1067 = vmatpush1.bf16.msra.mxu0 0
      %1068 = vmatprep.subr.bf16.mxu0 0
      %1069 = vmatpush1.bf16.msra.mxu0 0
      %1070 = vmatprep.subr.bf16.mxu0 0
      %1071 = vmatpush1.bf16.msra.mxu0 0
      %1072 = vmatprep.subr.bf16.mxu0 0
      %1073 = vmatpush1.bf16.msra.mxu0 0
      %1074 = vmatprep.subr.bf16.mxu0 0
      %1075 = vmatpush1.bf16.msra.mxu0 0
      %1076 = vmatprep.subr.bf16.mxu0 0
      %1077 = vmatpush1.bf16.msra.mxu0 0
      %1078 = vmatprep.subr.bf16.mxu0 0
      %1079 = vmatpush1.bf16.msra.mxu0 0
      %1080 = vmatprep.subr.bf16.mxu0 0
      %1081 = vmatpush1.bf16.msra.mxu0 0
      %1082 = vmatprep.subr.bf16.mxu0 0
      %1083 = vmatpush1.bf16.msra.mxu0 0
      %1084 = vmatprep.subr.bf16.mxu0 0
      %1085 = vmatpush1.bf16.msra.mxu0 0
      %1086 = vmatprep.subr.bf16.mxu0 0
      %1087 = vmatpush1.bf16.msra.mxu0 0
      %1088 = vmatprep.subr.bf16.mxu0 0
      %1089 = vmatpush1.bf16.msra.mxu0 0
      %1090 = vmatprep.subr.bf16.mxu0 0
      %1091 = vmatpush1.bf16.msra.mxu0 0
      %1092 = vmatprep.subr.bf16.mxu0 0
      %1093 = vmatpush1.bf16.msra.mxu0 0
      %1094 = vmatprep.mubr.bf16.mxu0 0
      %1095 = vmatmul.mubr.bf16.gmra.mrb[0].mxu0 %v1054
      %v1096 = vpop.f32.mrb[0].mxu0
      %v1097 = vadd.f32 0.0, %v1096
      %v1098 = vpop.f32.mrb[0].mxu0
      %v1099 = vpop.f32.mrb[0].mxu0
      %v1100 = vadd.f32 0.0, %v1099
      %v1101 = vpop.f32.mrb[0].mxu0
      %1102 = vmatprep.mubr.bf16.mxu0 0
      %1103 = vmatmul.mubr.bf16.gmra.mrb[0].mxu0 %v1057
      %v1104 = vpop.f32.mrb[0].mxu0
      %v1105 = vadd.f32 0.0, %v1104
      %v1106 = vpop.f32.mrb[0].mxu0
      %v1107 = vpop.f32.mrb[0].mxu0
      %v1108 = vpop.f32.mrb[0].mxu0
      %1109 = vdwg.mxu0
      %v1110 = vpack.c.bf16 %v1100, %v1097
      %v1111 = vpack.c.bf16 %v1105, %v1105
      %v1112 = vld [vmem:[%s1 + $0xc] sm:$0xf]
      %v1114 = vsel %vm262, %v1110, 0
      %v1117 = vsel %vm262, %v1111, 0
      %v1120 = vsel %vm434, %v1112, 0
      %1122 = vmatprep.subr.bf16.mxu0 0
      %1123 = vmatpush1.bf16.msra.mxu0 %v1120
      %1124 = vmatprep.subr.bf16.mxu0 0
      %1125 = vmatpush1.bf16.msra.mxu0 0
      %1126 = vmatprep.subr.bf16.mxu0 0
      %1127 = vmatpush1.bf16.msra.mxu0 0
      %1128 = vmatprep.subr.bf16.mxu0 0
      %1129 = vmatpush1.bf16.msra.mxu0 0
      %1130 = vmatprep.subr.bf16.mxu0 0
      %1131 = vmatpush1.bf16.msra.mxu0 0
      %1132 = vmatprep.subr.bf16.mxu0 0
      %1133 = vmatpush1.bf16.msra.mxu0 0
      %1134 = vmatprep.subr.bf16.mxu0 0
      %1135 = vmatpush1.bf16.msra.mxu0 0
      %1136 = vmatprep.subr.bf16.mxu0 0
      %1137 = vmatpush1.bf16.msra.mxu0 0
      %1138 = vmatprep.subr.bf16.mxu0 0
      %1139 = vmatpush1.bf16.msra.mxu0 0
      %1140 = vmatprep.subr.bf16.mxu0 0
      %1141 = vmatpush1.bf16.msra.mxu0 0
      %1142 = vmatprep.subr.bf16.mxu0 0
      %1143 = vmatpush1.bf16.msra.mxu0 0
      %1144 = vmatprep.subr.bf16.mxu0 0
      %1145 = vmatpush1.bf16.msra.mxu0 0
      %1146 = vmatprep.subr.bf16.mxu0 0
      %1147 = vmatpush1.bf16.msra.mxu0 0
      %1148 = vmatprep.subr.bf16.mxu0 0
      %1149 = vmatpush1.bf16.msra.mxu0 0
      %1150 = vmatprep.subr.bf16.mxu0 0
      %1151 = vmatpush1.bf16.msra.mxu0 0
      %1152 = vmatprep.subr.bf16.mxu0 0
      %1153 = vmatpush1.bf16.msra.mxu0 0
      %1154 = vmatprep.mubr.bf16.mxu0 0
      %1155 = vmatmul.mubr.bf16.gmra.mrb[0].mxu0 %v1114
      %v1156 = vpop.f32.mrb[0].mxu0
      %v1157 = vadd.f32 0.0, %v1156
      %v1158 = vpop.f32.mrb[0].mxu0
      %v1159 = vpop.f32.mrb[0].mxu0
      %v1160 = vadd.f32 0.0, %v1159
      %v1161 = vpop.f32.mrb[0].mxu0
      %1162 = vmatprep.mubr.bf16.mxu0 0
      %1163 = vmatmul.mubr.bf16.gmra.mrb[0].mxu0 %v1117
      %v1164 = vpop.f32.mrb[0].mxu0
      %v1165 = vadd.f32 0.0, %v1164
      %v1166 = vpop.f32.mrb[0].mxu0
      %v1167 = vpop.f32.mrb[0].mxu0
      %v1168 = vpop.f32.mrb[0].mxu0
      %1169 = vdwg.mxu0
      %v1170 = vadd.f32 %v942, %v1157
      %v1171 = vadd.f32 %v943, %v1160
      %v1172 = vadd.f32 %v944, %v1165
      %v1173 = vpack.c.bf16 %v1171, %v1170
      %v1174 = vpack.c.bf16 %v1172, %v1172
      %v1177 = vunpack.c.l.b16 %v1173
      %v1178 = vunpack.c.h.b16 %v1173
      %v1179 = vunpack.c.l.b16 %v1174
      %v1180 = vpack.c.b16 %v1177, %v1177
      %v1181 = vpack.c.b16 %v1178, %v1178
      %v1182 = vpack.c.b16 %v1179, %v1179
      %vm1186 = vcmask 257024
      %1187 = vst.msk [vmem:[%s217] sm:$0xf] %vm1186, %v1180
      %1188 = vst.msk [vmem:[%s217 + $0x4] sm:$0xf] %vm1186, %v1181
      %vm1189 = vcmask 253952
      %vm1190 = vsmask.f32 256
      %vm1191 = vmand %vm1189, %vm1190
      %v1192 = vld [vmem:[%s217 + $0x8] sm:$0x1]
      %v1193 = vsel %vm1191, %v1182, %v1192
      %1194 = vst [vmem:[%s217 + $0x8] sm:$0x1] %v1193
      %p1195 = scmp.lt.s32.totalorder %s15, 1
      %s1196 = scalar_select %p1195, %s15, 1
      %s1197 = smul.addr %s1196, 3
      %s1198 = smul.addr %s1197, 4
      %s1199 = scalar_lea.vmem %s4, %s1198
      // Predicated region
      $region37: #{forward.13} parent=35 // pred_check
        %p1200 = pneg %p127
      $region38: #{forward.13} parent=35 // pred_check_branch
        %1202 = sbr.rel (%p1200) target = $region40
      $region39: #{forward.13} parent=35 // pred_region
        _
      $region40: #{forward.13} parent=35 // pred_fallthru
        _
    $region36: #{forward.13} parent=5 // pred_fallthru
      _
    %p1203 = scmp.le.s32.totalorder 2, %s10
    // Predicated region
    $region41: #{forward.13} parent=5 // pred_check
      %p1204 = pneg %p1203
    $region42: #{forward.13} parent=5 // pred_check_branch
      %1206 = sbr.rel (%p1204) target = $region44
    $region43: #{forward.13} parent=5 // pred_region
      %s1207 = ssub.s32 %s10, 2
      // Predicated region
      $region45: #{forward.13} parent=43 // pred_check
        %p1208 = pneg %p133
      $region46: #{forward.13} parent=43 // pred_check_branch
        %1210 = sbr.rel (%p1208) target = $region48
      $region47: #{forward.13} parent=43 // pred_region
        %p1211 = scmp.lt.s32.totalorder %s16, 1
        %s1212 = scalar_select %p1211, %s16, 1
        %s1213 = smul.addr %s1212, 3
        %s1214 = smul.addr %s1213, 4
        %s1215 = scalar_lea.vmem %s4, %s1214
      $region48: #{forward.13} parent=43 // pred_fallthru
        _
    $region44: #{forward.13} parent=5 // pred_fallthru
      _
  $region6: #{forward.13} parent=0 // loop_footer
    %s14 = sadd.s32 1, %s10
  $region7: #{forward.13} parent=0 // loop_footer_branch
    %9 = sbr.rel target = $region3
  $region8: #{forward.13} parent=0 // loop_exit
    _

// kernel: forward.21
$region0: #{forward.21}
  #allocation0 [shape = 'u32[]', space=smem, size = 0x4, offset = 0x4, fixed_abs, tag = 'smem constant byte address 0x4 - core index']
  #allocation1 [shape = 'u32[144,128]{1,0:T(1,128)}', space=vmem, size = 0x12000, scoped, tag = 'internal scratch']
  %s0 = inlined_call_operand.vmem [shape: f32[2,32], index: 0, kind: input, shape index: {}]
  %s1 = inlined_call_operand.vmem [shape: bf16[32,256], index: 1, kind: input, shape index: {}]
  %s2 = inlined_call_operand.vmem [shape: f32[1,256], index: 2, kind: input, shape index: {}]
  %s3 = inlined_call_operand.vmem [shape: f32[2,256], index: 3, kind: output, shape index: {}]
  %s4 = sld [smem:[#allocation0]]
  $region22: #{forward.21} parent=0
    _
  %s6 = ssub.s32 1, %s4
  %s7 = scalar_select 0, %s6, %s4
  // Predicated region
  $region2: #{forward.21} parent=0 // pred_check
    _
  $region3: #{forward.21} parent=0 // pred_check_branch
    %9 = sbr.rel (0) target = $region5
  $region4: #{forward.21} parent=0 // pred_region
    _
  $region5: #{forward.21} parent=0 // pred_fallthru
    _
  // Predicated region
  $region6: #{forward.21} parent=0 // pred_check
    _
  $region7: #{forward.21} parent=0 // pred_check_branch
    %11 = sbr.rel (0) target = $region9
  $region8: #{forward.21} parent=0 // pred_region
    _
  $region9: #{forward.21} parent=0 // pred_fallthru
    _
  // Predicated region
  $region10: #{forward.21} parent=0 // pred_check
    _
  $region11: #{forward.21} parent=0 // pred_check_branch
    %13 = sbr.rel (0) target = $region13
  $region12: #{forward.21} parent=0 // pred_region
    _
  $region13: #{forward.21} parent=0 // pred_fallthru
    _
  %v15 = vld [vmem:[%s0] sm:$0x3]
  %v16 = vpack.c.bf16 %v15, %v15
  %v17 = vld [vmem:[%s1] sm:$0xff]
  %v18 = vld [vmem:[%s1 + $0x8] sm:$0xff]
  %v19 = vld [vmem:[%s1 + $0x10] sm:$0xff]
  %v20 = vld [vmem:[%s1 + $0x18] sm:$0xff]
  %v21 = vld [vmem:[%s2] sm:$0x3]
  %v23 = vlaneseq
  %v24 = vshrl.u32 %v23, 7
  %v25 = vsub.s32 0, %v24
  %v26 = vrot.slane %v21, %v25
  %v27 = vlaneseq
  %v28 = vshrl.u32 %v27, 7
  %v29 = vsub.s32 1, %v28
  %v30 = vrot.slane %v21, %v29
  %v37 = vunpack.c.l.b16 %v17
  %v38 = vunpack.c.h.b16 %v17
  %v39 = vunpack.c.l.b16 %v18
  %v40 = vunpack.c.h.b16 %v18
  %v41 = vunpack.c.l.b16 %v19
  %v42 = vunpack.c.h.b16 %v19
  %v43 = vunpack.c.l.b16 %v20
  %v44 = vunpack.c.h.b16 %v20
  %v45 = vpack.c.b16 %v39, %v37
  %v46 = vpack.c.b16 %v40, %v38
  %v47 = vpack.c.b16 %v43, %v41
  %v48 = vpack.c.b16 %v44, %v42
  %vm53 = vcmask 261120
  %v55 = vsel %vm53, %v16, 0
  %57 = vmatprep.subr.bf16.mxu0 %v46
  %58 = vmatpush1.bf16.msra.mxu0 %v45
  %59 = vmatprep.subr.bf16.mxu0 %v48
  %60 = vmatpush1.bf16.msra.mxu0 %v47
  %61 = vmatprep.subr.bf16.mxu0 0
  %62 = vmatpush1.bf16.msra.mxu0 0
  %63 = vmatprep.subr.bf16.mxu0 0
  %64 = vmatpush1.bf16.msra.mxu0 0
  %65 = vmatprep.subr.bf16.mxu0 0
  %66 = vmatpush1.bf16.msra.mxu0 0
  %67 = vmatprep.subr.bf16.mxu0 0
  %68 = vmatpush1.bf16.msra.mxu0 0
  %69 = vmatprep.subr.bf16.mxu0 0
  %70 = vmatpush1.bf16.msra.mxu0 0
  %71 = vmatprep.subr.bf16.mxu0 0
  %72 = vmatpush1.bf16.msra.mxu0 0
  %73 = vmatprep.subr.bf16.mxu0 0
  %74 = vmatpush1.bf16.msra.mxu0 0
  %75 = vmatprep.subr.bf16.mxu0 0
  %76 = vmatpush1.bf16.msra.mxu0 0
  %77 = vmatprep.subr.bf16.mxu0 0
  %78 = vmatpush1.bf16.msra.mxu0 0
  %79 = vmatprep.subr.bf16.mxu0 0
  %80 = vmatpush1.bf16.msra.mxu0 0
  %81 = vmatprep.subr.bf16.mxu0 0
  %82 = vmatpush1.bf16.msra.mxu0 0
  %83 = vmatprep.subr.bf16.mxu0 0
  %84 = vmatpush1.bf16.msra.mxu0 0
  %85 = vmatprep.subr.bf16.mxu0 0
  %86 = vmatpush1.bf16.msra.mxu0 0
  %87 = vmatprep.subr.bf16.mxu0 0
  %88 = vmatpush1.bf16.msra.mxu0 0
  %89 = vmatprep.mubr.bf16.mxu0 0
  %90 = vmatmul.mubr.bf16.gmra.mrb[0].mxu0 %v55
  %v91 = vpop.f32.mrb[0].mxu0
  %v92 = vadd.f32 %v26, %v91
  %v93 = vpop.f32.mrb[0].mxu0
  %v94 = vadd.f32 %v30, %v93
  %v95 = vpop.f32.mrb[0].mxu0
  %v96 = vpop.f32.mrb[0].mxu0
  %97 = vdwg.mxu0
  %v100 = vcombine.low %v92, %v94
  %v102 = vunpack.c.l.s4 1983009808
  %v103 = vunpack.c.0.s8 %v102
  %v104 = vlaneseq
  %v105 = vshrl.u32 %v104, 7
  %v106 = vsub.s32 %v103, %v105
  %v107 = vrot.slane %v100, %v106
  %109 = vst [vmem:[%s3] sm:$0xf] %v107
  // Predicated region
  $region14: #{forward.21} parent=0 // pred_check
    _
  $region15: #{forward.21} parent=0 // pred_check_branch
    %111 = sbr.rel (0) target = $region17
  $region16: #{forward.21} parent=0 // pred_region
    _
  $region17: #{forward.21} parent=0 // pred_fallthru
    _
  // Predicated region
  $region18: #{forward.21} parent=0 // pred_check
    _
  $region19: #{forward.21} parent=0 // pred_check_branch
    %113 = sbr.rel (0) target = $region21
  $region20: #{forward.21} parent=0 // pred_region
    _
  $region21: #{forward.21} parent=0 // pred_fallthru
    _

// kernel: forward.15
$region0: #{forward.15}
  #allocation0 [shape = 'u32[]', space=smem, size = 0x4, offset = 0x4, fixed_abs, tag = 'smem constant byte address 0x4 - core index']
  #allocation1 [shape = 'u32[144,128]{1,0:T(1,128)}', space=vmem, size = 0x12000, scoped, tag = 'internal scratch']
  %s0 = inlined_call_operand.vmem [shape: bf16[34,256], index: 0, kind: input, shape index: {}]
  %s1 = inlined_call_operand.vmem [shape: bf16[256,32], index: 1, kind: input, shape index: {}]
  %s2 = inlined_call_operand.vmem [shape: f32[1,32], index: 2, kind: input, shape index: {}]
  %s3 = inlined_call_operand.vmem [shape: bf16[34,32], index: 3, kind: input, shape index: {}]
  %s4 = inlined_call_operand.vmem [shape: bf16[34,32], index: 4, kind: output, shape index: {}]
  %s5 = sld [smem:[#allocation0]]
  $region26: #{forward.15} parent=0
    _
  %s7 = ssub.s32 1, %s5
  %s8 = scalar_select 0, %s7, %s5
  // Predicated region
  $region2: #{forward.15} parent=0 // pred_check
    _
  $region3: #{forward.15} parent=0 // pred_check_branch
    %10 = sbr.rel (0) target = $region5
  $region4: #{forward.15} parent=0 // pred_region
    _
  $region5: #{forward.15} parent=0 // pred_fallthru
    _
  // Predicated region
  $region6: #{forward.15} parent=0 // pred_check
    _
  $region7: #{forward.15} parent=0 // pred_check_branch
    %12 = sbr.rel (0) target = $region9
  $region8: #{forward.15} parent=0 // pred_region
    _
  $region9: #{forward.15} parent=0 // pred_fallthru
    _
  // Predicated region
  $region10: #{forward.15} parent=0 // pred_check
    _
  $region11: #{forward.15} parent=0 // pred_check_branch
    %14 = sbr.rel (0) target = $region13
  $region12: #{forward.15} parent=0 // pred_region
    _
  $region13: #{forward.15} parent=0 // pred_fallthru
    _
  // Predicated region
  $region14: #{forward.15} parent=0 // pred_check
    _
  $region15: #{forward.15} parent=0 // pred_check_branch
    %16 = sbr.rel (0) target = $region17
  $region16: #{forward.15} parent=0 // pred_region
    _
  $region17: #{forward.15} parent=0 // pred_fallthru
    _
  %v18 = vld [vmem:[%s0] sm:$0xff]
  %v19 = vld [vmem:[%s0 + $0x8] sm:$0xff]
  %v20 = vld [vmem:[%s0 + $0x10] sm:$0xff]
  %v21 = vld [vmem:[%s0 + $0x18] sm:$0xff]
  %v22 = vld [vmem:[%s0 + $0x20] sm:$0x11]
  %v23 = vld [vmem:[%s1] sm:$0xf]
  %v24 = vld [vmem:[%s1 + $0x4] sm:$0xf]
  %v25 = vld [vmem:[%s1 + $0x8] sm:$0xf]
  %v26 = vld [vmem:[%s1 + $0xc] sm:$0xf]
  %v27 = vld [vmem:[%s1 + $0x10] sm:$0xf]
  %v28 = vld [vmem:[%s1 + $0x14] sm:$0xf]
  %v29 = vld [vmem:[%s1 + $0x18] sm:$0xf]
  %v30 = vld [vmem:[%s1 + $0x1c] sm:$0xf]
  %v31 = vld [vmem:[%s1 + $0x20] sm:$0xf]
  %v32 = vld [vmem:[%s1 + $0x24] sm:$0xf]
  %v33 = vld [vmem:[%s1 + $0x28] sm:$0xf]
  %v34 = vld [vmem:[%s1 + $0x2c] sm:$0xf]
  %v35 = vld [vmem:[%s1 + $0x30] sm:$0xf]
  %v36 = vld [vmem:[%s1 + $0x34] sm:$0xf]
  %v37 = vld [vmem:[%s1 + $0x38] sm:$0xf]
  %v38 = vld [vmem:[%s1 + $0x3c] sm:$0xf]
  %v39 = vld [vmem:[%s1 + $0x40] sm:$0xf]
  %v40 = vld [vmem:[%s1 + $0x44] sm:$0xf]
  %v41 = vld [vmem:[%s1 + $0x48] sm:$0xf]
  %v42 = vld [vmem:[%s1 + $0x4c] sm:$0xf]
  %v43 = vld [vmem:[%s1 + $0x50] sm:$0xf]
  %v44 = vld [vmem:[%s1 + $0x54] sm:$0xf]
  %v45 = vld [vmem:[%s1 + $0x58] sm:$0xf]
  %v46 = vld [vmem:[%s1 + $0x5c] sm:$0xf]
  %v47 = vld [vmem:[%s1 + $0x60] sm:$0xf]
  %v48 = vld [vmem:[%s1 + $0x64] sm:$0xf]
  %v49 = vld [vmem:[%s1 + $0x68] sm:$0xf]
  %v50 = vld [vmem:[%s1 + $0x6c] sm:$0xf]
  %v51 = vld [vmem:[%s1 + $0x70] sm:$0xf]
  %v52 = vld [vmem:[%s1 + $0x74] sm:$0xf]
  %v53 = vld [vmem:[%s1 + $0x78] sm:$0xf]
  %v54 = vld [vmem:[%s1 + $0x7c] sm:$0xf]
  %v55 = vld [vmem:[%s2] sm:$0x1]
  %v57 = vlaneseq
  %v58 = vshrl.u32 %v57, 7
  %v59 = vsub.s32 0, %v58
  %v60 = vrot.slane %v55, %v59
  %v67 = vunpack.c.l.b16 %v18
  %v68 = vunpack.c.h.b16 %v18
  %v69 = vunpack.c.l.b16 %v19
  %v70 = vunpack.c.h.b16 %v19
  %v71 = vunpack.c.l.b16 %v20
  %v72 = vunpack.c.h.b16 %v20
  %v73 = vunpack.c.l.b16 %v21
  %v74 = vunpack.c.h.b16 %v21
  %v75 = vunpack.c.l.b16 %v22
  %v76 = vunpack.c.h.b16 %v22
  %v77 = vpack.c.b16 %v69, %v67
  %v78 = vpack.c.b16 %v70, %v68
  %v79 = vpack.c.b16 %v73, %v71
  %v80 = vpack.c.b16 %v74, %v72
  %v81 = vpack.c.b16 %v75, %v75
  %v82 = vpack.c.b16 %v76, %v76
  %v121 = vunpack.c.l.b16 %v23
  %v122 = vunpack.c.l.b16 %v24
  %v123 = vunpack.c.l.b16 %v25
  %v124 = vunpack.c.l.b16 %v26
  %v125 = vunpack.c.l.b16 %v27
  %v126 = vunpack.c.l.b16 %v28
  %v127 = vunpack.c.l.b16 %v29
  %v128 = vunpack.c.l.b16 %v30
  %v129 = vunpack.c.l.b16 %v31
  %v130 = vunpack.c.l.b16 %v32
  %v131 = vunpack.c.l.b16 %v33
  %v132 = vunpack.c.l.b16 %v34
  %v133 = vunpack.c.l.b16 %v35
  %v134 = vunpack.c.l.b16 %v36
  %v135 = vunpack.c.l.b16 %v37
  %v136 = vunpack.c.l.b16 %v38
  %v137 = vunpack.c.l.b16 %v39
  %v138 = vunpack.c.l.b16 %v40
  %v139 = vunpack.c.l.b16 %v41
  %v140 = vunpack.c.l.b16 %v42
  %v141 = vunpack.c.l.b16 %v43
  %v142 = vunpack.c.l.b16 %v44
  %v143 = vunpack.c.l.b16 %v45
  %v144 = vunpack.c.l.b16 %v46
  %v145 = vunpack.c.l.b16 %v47
  %v146 = vunpack.c.l.b16 %v48
  %v147 = vunpack.c.l.b16 %v49
  %v148 = vunpack.c.l.b16 %v50
  %v149 = vunpack.c.l.b16 %v51
  %v150 = vunpack.c.l.b16 %v52
  %v151 = vunpack.c.l.b16 %v53
  %v152 = vunpack.c.l.b16 %v54
  %v153 = vpack.c.b16 %v122, %v121
  %v154 = vpack.c.b16 %v124, %v123
  %v155 = vpack.c.b16 %v126, %v125
  %v156 = vpack.c.b16 %v128, %v127
  %v157 = vpack.c.b16 %v130, %v129
  %v158 = vpack.c.b16 %v132, %v131
  %v159 = vpack.c.b16 %v134, %v133
  %v160 = vpack.c.b16 %v136, %v135
  %v161 = vpack.c.b16 %v138, %v137
  %v162 = vpack.c.b16 %v140, %v139
  %v163 = vpack.c.b16 %v142, %v141
  %v164 = vpack.c.b16 %v144, %v143
  %v165 = vpack.c.b16 %v146, %v145
  %v166 = vpack.c.b16 %v148, %v147
  %v167 = vpack.c.b16 %v150, %v149
  %v168 = vpack.c.b16 %v152, %v151
  %185 = vmatprep.subr.bf16.mxu0 0
  %186 = vmatpush1.bf16.msra.mxu0 %v153
  %187 = vmatprep.subr.bf16.mxu0 0
  %188 = vmatpush1.bf16.msra.mxu0 %v154
  %189 = vmatprep.subr.bf16.mxu0 0
  %190 = vmatpush1.bf16.msra.mxu0 %v155
  %191 = vmatprep.subr.bf16.mxu0 0
  %192 = vmatpush1.bf16.msra.mxu0 %v156
  %193 = vmatprep.subr.bf16.mxu0 0
  %194 = vmatpush1.bf16.msra.mxu0 %v157
  %195 = vmatprep.subr.bf16.mxu0 0
  %196 = vmatpush1.bf16.msra.mxu0 %v158
  %197 = vmatprep.subr.bf16.mxu0 0
  %198 = vmatpush1.bf16.msra.mxu0 %v159
  %199 = vmatprep.subr.bf16.mxu0 0
  %200 = vmatpush1.bf16.msra.mxu0 %v160
  %201 = vmatprep.subr.bf16.mxu0 0
  %202 = vmatpush1.bf16.msra.mxu0 %v161
  %203 = vmatprep.subr.bf16.mxu0 0
  %204 = vmatpush1.bf16.msra.mxu0 %v162
  %205 = vmatprep.subr.bf16.mxu0 0
  %206 = vmatpush1.bf16.msra.mxu0 %v163
  %207 = vmatprep.subr.bf16.mxu0 0
  %208 = vmatpush1.bf16.msra.mxu0 %v164
  %209 = vmatprep.subr.bf16.mxu0 0
  %210 = vmatpush1.bf16.msra.mxu0 %v165
  %211 = vmatprep.subr.bf16.mxu0 0
  %212 = vmatpush1.bf16.msra.mxu0 %v166
  %213 = vmatprep.subr.bf16.mxu0 0
  %214 = vmatpush1.bf16.msra.mxu0 %v167
  %215 = vmatprep.subr.bf16.mxu0 0
  %216 = vmatpush1.bf16.msra.mxu0 %v168
  %217 = vmatprep.mubr.bf16.mxu0 %v78
  %218 = vmatmul.mubr.bf16.gmra.mrb[0].mxu0 %v77
  %v219 = vpop.f32.mrb[0].mxu0
  %v220 = vadd.f32 %v60, %v219
  %v221 = vpop.f32.mrb[0].mxu0
  %v222 = vpop.f32.mrb[0].mxu0
  %v223 = vadd.f32 %v60, %v222
  %v224 = vpop.f32.mrb[0].mxu0
  %225 = vmatprep.mubr.bf16.mxu0 %v80
  %226 = vmatmul.mubr.bf16.gmra.mrb[0].mxu0 %v79
  %v227 = vpop.f32.mrb[0].mxu0
  %v228 = vadd.f32 %v60, %v227
  %v229 = vpop.f32.mrb[0].mxu0
  %v230 = vpop.f32.mrb[0].mxu0
  %v231 = vadd.f32 %v60, %v230
  %v232 = vpop.f32.mrb[0].mxu0
  %233 = vmatprep.mubr.bf16.mxu0 %v82
  %234 = vmatmul.mubr.bf16.gmra.mrb[0].mxu0 %v81
  %v235 = vpop.f32.mrb[0].mxu0
  %v236 = vadd.f32 %v60, %v235
  %v237 = vpop.f32.mrb[0].mxu0
  %v238 = vpop.f32.mrb[0].mxu0
  %v239 = vpop.f32.mrb[0].mxu0
  %240 = vdwg.mxu0
  %v241 = vld [vmem:[%s3] sm:$0xf]
  %v242 = vld [vmem:[%s3 + $0x4] sm:$0xf]
  %v243 = vld [vmem:[%s3 + $0x8] sm:$0xf]
  %v244 = vld [vmem:[%s3 + $0xc] sm:$0xf]
  %v245 = vld [vmem:[%s3 + $0x10] sm:$0x1]
  %v246 = vunpack.c.l.bf16 %v241
  %v247 = vunpack.c.l.bf16 %v242
  %v248 = vunpack.c.l.bf16 %v243
  %v249 = vunpack.c.l.bf16 %v244
  %v250 = vunpack.c.l.bf16 %v245
  %v251 = vadd.f32 %v220, %v246
  %v252 = vadd.f32 %v223, %v247
  %v253 = vadd.f32 %v228, %v248
  %v254 = vadd.f32 %v231, %v249
  %v255 = vadd.f32 %v236, %v250
  %v256 = vpack.c.bf16 %v252, %v251
  %v257 = vpack.c.bf16 %v254, %v253
  %v258 = vpack.c.bf16 %v255, %v255
  %v262 = vunpack.c.l.b16 %v256
  %v263 = vunpack.c.h.b16 %v256
  %v264 = vunpack.c.l.b16 %v257
  %v265 = vunpack.c.h.b16 %v257
  %v266 = vunpack.c.l.b16 %v258
  %v267 = vpack.c.b16 %v262, %v262
  %v268 = vpack.c.b16 %v263, %v263
  %v269 = vpack.c.b16 %v264, %v264
  %v270 = vpack.c.b16 %v265, %v265
  %v271 = vpack.c.b16 %v266, %v266
  %vm277 = vcmask 257024
  %278 = vst.msk [vmem:[%s4] sm:$0xf] %vm277, %v267
  %279 = vst.msk [vmem:[%s4 + $0x4] sm:$0xf] %vm277, %v268
  %280 = vst.msk [vmem:[%s4 + $0x8] sm:$0xf] %vm277, %v269
  %281 = vst.msk [vmem:[%s4 + $0xc] sm:$0xf] %vm277, %v270
  %vm282 = vcmask 253952
  %283 = vst.msk [vmem:[%s4 + $0x10] sm:$0x1] %vm282, %v271
  // Predicated region
  $region18: #{forward.15} parent=0 // pred_check
    _
  $region19: #{forward.15} parent=0 // pred_check_branch
    %285 = sbr.rel (0) target = $region21
  $region20: #{forward.15} parent=0 // pred_region
    _
  $region21: #{forward.15} parent=0 // pred_fallthru
    _
  // Predicated region
  $region22: #{forward.15} parent=0 // pred_check
    _
  $region23: #{forward.15} parent=0 // pred_check_branch
    %287 = sbr.rel (0) target = $region25
  $region24: #{forward.15} parent=0 // pred_region
    _
  $region25: #{forward.15} parent=0 // pred_fallthru
    _

// kernel: forward.20
$region0: #{forward.20}
  #allocation0 [shape = 'u32[]', space=smem, size = 0x4, offset = 0x4, fixed_abs, tag = 'smem constant byte address 0x4 - core index']
  #allocation1 [shape = 'u32[144,128]{1,0:T(1,128)}', space=vmem, size = 0x12000, scoped, tag = 'internal scratch']
  %s0 = inlined_call_operand.vmem [shape: bf16[34,32], index: 0, kind: input, shape index: {}]
  %s1 = inlined_call_operand.vmem [shape: f32[1,32], index: 1, kind: input, shape index: {}]
  %s2 = inlined_call_operand.vmem [shape: f32[1,32], index: 2, kind: input, shape index: {}]
  %s3 = inlined_call_operand.vmem [shape: f32[34,32], index: 3, kind: output, shape index: {}]
  %s4 = sld [smem:[#allocation0]]
  $region22: #{forward.20} parent=0
    _
  %s6 = ssub.s32 1, %s4
  %s7 = scalar_select 0, %s6, %s4
  // Predicated region
  $region2: #{forward.20} parent=0 // pred_check
    _
  $region3: #{forward.20} parent=0 // pred_check_branch
    %9 = sbr.rel (0) target = $region5
  $region4: #{forward.20} parent=0 // pred_region
    _
  $region5: #{forward.20} parent=0 // pred_fallthru
    _
  // Predicated region
  $region6: #{forward.20} parent=0 // pred_check
    _
  $region7: #{forward.20} parent=0 // pred_check_branch
    %11 = sbr.rel (0) target = $region9
  $region8: #{forward.20} parent=0 // pred_region
    _
  $region9: #{forward.20} parent=0 // pred_fallthru
    _
  // Predicated region
  $region10: #{forward.20} parent=0 // pred_check
    _
  $region11: #{forward.20} parent=0 // pred_check_branch
    %13 = sbr.rel (0) target = $region13
  $region12: #{forward.20} parent=0 // pred_region
    _
  $region13: #{forward.20} parent=0 // pred_fallthru
    _
  %v14 = vld [vmem:[%s0] sm:$0xf]
  %v15 = vld [vmem:[%s0 + $0x4] sm:$0xf]
  %v16 = vld [vmem:[%s0 + $0x8] sm:$0xf]
  %v17 = vld [vmem:[%s0 + $0xc] sm:$0xf]
  %v18 = vld [vmem:[%s0 + $0x10] sm:$0x1]
  %v19 = vunpack.c.l.bf16 %v14
  %v20 = vunpack.c.l.bf16 %v15
  %v21 = vunpack.c.l.bf16 %v16
  %v22 = vunpack.c.l.bf16 %v17
  %v23 = vunpack.c.l.bf16 %v18
  %vm24 = vcmask 261120
  %v25 = vsel %vm24, %v19, 0.0
  %26 = vadd.xlane.f32.xlu0 %v25
  %v27 = vpop.xlane.xlu0 %26
  %v28 = vsel %vm24, %v20, 0.0
  %29 = vadd.xlane.f32.xlu0 %v28
  %v30 = vpop.xlane.xlu0 %29
  %v31 = vsel %vm24, %v21, 0.0
  %32 = vadd.xlane.f32.xlu0 %v31
  %v33 = vpop.xlane.xlu0 %32
  %v34 = vsel %vm24, %v22, 0.0
  %35 = vadd.xlane.f32.xlu0 %v34
  %v36 = vpop.xlane.xlu0 %35
  %vm37 = vcmask 254976
  %v38 = vsel %vm37, %v23, 0.0
  %39 = vadd.xlane.f32.xlu0 %v38
  %v40 = vpop.xlane.xlu0 %39
  %v41 = vrcp.pop 32.0
  %v42 = vmul.f32 %v27, %v41
  %v43 = vmul.f32 %v30, %v41
  %v44 = vmul.f32 %v33, %v41
  %v45 = vmul.f32 %v36, %v41
  %v46 = vmul.f32 %v40, %v41
  %v47 = vsub.f32 %v19, %v42
  %v48 = vsub.f32 %v20, %v43
  %v49 = vsub.f32 %v21, %v44
  %v50 = vsub.f32 %v22, %v45
  %v51 = vsub.f32 %v23, %v46
  %v52 = vmul.f32 %v47, %v47
  %v53 = vmul.f32 %v48, %v48
  %v54 = vmul.f32 %v49, %v49
  %v55 = vmul.f32 %v50, %v50
  %v56 = vmul.f32 %v51, %v51
  %v57 = vsel %vm24, %v52, 0.0
  %58 = vadd.xlane.f32.xlu0 %v57
  %v59 = vpop.xlane.xlu0 %58
  %v60 = vsel %vm24, %v53, 0.0
  %61 = vadd.xlane.f32.xlu0 %v60
  %v62 = vpop.xlane.xlu0 %61
  %v63 = vsel %vm24, %v54, 0.0
  %64 = vadd.xlane.f32.xlu0 %v63
  %v65 = vpop.xlane.xlu0 %64
  %v66 = vsel %vm24, %v55, 0.0
  %67 = vadd.xlane.f32.xlu0 %v66
  %v68 = vpop.xlane.xlu0 %67
  %v69 = vsel %vm37, %v56, 0.0
  %70 = vadd.xlane.f32.xlu0 %v69
  %v71 = vpop.xlane.xlu0 %70
  %v72 = vmul.f32 %v59, %v41
  %v73 = vmul.f32 %v62, %v41
  %v74 = vmul.f32 %v65, %v41
  %v75 = vmul.f32 %v68, %v41
  %v76 = vmul.f32 %v71, %v41
  %v77 = vadd.f32 %v72, 1e-05
  %v78 = vadd.f32 %v73, 1e-05
  %v79 = vadd.f32 %v74, 1e-05
  %v80 = vadd.f32 %v75, 1e-05
  %v81 = vadd.f32 %v76, 1e-05
  %v82 = vrsqrt.pop %v77
  %v83 = vrsqrt.pop %v78
  %v84 = vrsqrt.pop %v79
  %v85 = vrsqrt.pop %v80
  %v86 = vrsqrt.pop %v81
  %v87 = vmul.f32 %v47, %v82
  %v88 = vmul.f32 %v48, %v83
  %v89 = vmul.f32 %v49, %v84
  %v90 = vmul.f32 %v50, %v85
  %v91 = vmul.f32 %v51, %v86
  %v92 = vld [vmem:[%s1] sm:$0x1]
  %v94 = vlaneseq
  %v95 = vshrl.u32 %v94, 7
  %v96 = vsub.s32 0, %v95
  %v97 = vrot.slane %v92, %v96
  %v99 = vmul.f32 %v87, %v97
  %v100 = vmul.f32 %v88, %v97
  %v101 = vmul.f32 %v89, %v97
  %v102 = vmul.f32 %v90, %v97
  %v103 = vmul.f32 %v91, %v97
  %v104 = vld [vmem:[%s2] sm:$0x1]
  %v106 = vlaneseq
  %v107 = vshrl.u32 %v106, 7
  %v108 = vsub.s32 0, %v107
  %v109 = vrot.slane %v104, %v108
  %v111 = vadd.f32 %v99, %v109
  %v112 = vadd.f32 %v100, %v109
  %v113 = vadd.f32 %v101, %v109
  %v114 = vadd.f32 %v102, %v109
  %v115 = vadd.f32 %v103, %v109
  %116 = vst.msk [vmem:[%s3] sm:$0xff] %vm24, %v111
  %117 = vst.msk [vmem:[%s3 + $0x8] sm:$0xff] %vm24, %v112
  %118 = vst.msk [vmem:[%s3 + $0x10] sm:$0xff] %vm24, %v113
  %119 = vst.msk [vmem:[%s3 + $0x18] sm:$0xff] %vm24, %v114
  %120 = vst.msk [vmem:[%s3 + $0x20] sm:$0x3] %vm37, %v115
  // Predicated region
  $region14: #{forward.20} parent=0 // pred_check
    _
  $region15: #{forward.20} parent=0 // pred_check_branch
    %122 = sbr.rel (0) target = $region17
  $region16: #{forward.20} parent=0 // pred_region
    _
  $region17: #{forward.20} parent=0 // pred_fallthru
    _
  // Predicated region
  $region18: #{forward.20} parent=0 // pred_check
    _
  $region19: #{forward.20} parent=0 // pred_check_branch
    %124 = sbr.rel (0) target = $region21
  $region20: #{forward.20} parent=0 // pred_region
    _
  $region21: #{forward.20} parent=0 // pred_fallthru
    _

</llo_original>
